<compile_context>
chip_gen: v6e
topology: v6e:2x2x1
jax: 0.10.0
libtpu: 0.0.40
codegen_flags: <defaults>
</compile_context>

<pallas_src>
import jax
import jax.numpy as jnp
from jax.experimental import pallas as pl
from jax.experimental.pallas import tpu as pltpu

EPS = 1e-5

IMG_IN = 478 * 3                      # 1434
H1, H2, H3, H4 = 400, 100, 50, 10     # image branch widths
N_IN, N1, N2 = 10, 5, 5               # numeric branch widths
COMB_IN = H4 + N2                     # 15


def _rup(x, m):
    return ((x + m - 1) // m) * m


# Padded (lane-friendly) widths.  IMG_IN stays un-padded (full-dim block).
P_H1 = H1                  # 400 (multiple of 8; MXU rounds lanes internally)
P_H2 = _rup(H2, 128)       # 128
P_H3 = _rup(H3, 128)       # 128
P_H4 = _rup(H4, 128)       # 128
P_NIN = _rup(N_IN, 128)    # 128
P_N1 = _rup(N1, 128)       # 128
P_N2 = _rup(N2, 128)       # 128
P_OUT = 8                  # narrow output slab; only lane 0 is used

TM_MAX = 512               # batch tile cap (well within scoped VMEM on v5e)


# ----------------------------------------------------------------------------
# Pallas kernel: fully fused MLP (image branch + numeric branch + combiner).
# Grid = (batch tiles,).  All weights have constant index maps -> VMEM-resident.
# ----------------------------------------------------------------------------
def _lier_kernel(
    x1_ref, x2_ref,
    w1_ref, b1_ref, w2_ref, b2_ref, w3_ref, b3_ref, w4_ref, b4_ref,
    nw1_ref, nb1_ref, nw2_ref, nb2_ref,
    wc1_ref, wc2_ref, bc_ref,
    out_ref,
):
    f32, bf16 = jnp.float32, jnp.bfloat16

    # image branch (BN folded into the Linears): Lin->ReLU->Lin->ReLU->Lin->ReLU->Lin
    h = jnp.dot(x1_ref[...], w1_ref[...], preferred_element_type=f32) + b1_ref[...]
    h = jnp.maximum(h, 0.0)
    h = jnp.maximum(
        jnp.dot(h.astype(bf16), w2_ref[...], preferred_element_type=f32)
        + b2_ref[...], 0.0)
    h = jnp.maximum(
        jnp.dot(h.astype(bf16), w3_ref[...], preferred_element_type=f32)
        + b3_ref[...], 0.0)
    h = jnp.dot(h.astype(bf16), w4_ref[...], preferred_element_type=f32) \
        + b4_ref[...]

    # numeric branch (BN folded): Lin -> ReLU -> Lin
    g = jnp.maximum(
        jnp.dot(x2_ref[...], nw1_ref[...], preferred_element_type=f32)
        + nb1_ref[...], 0.0)
    g = jnp.dot(g.astype(bf16), nw2_ref[...], preferred_element_type=f32) \
        + nb2_ref[...]

    # combined head: concat(h, g) @ Wc + bc == h @ Wc[:10] + g @ Wc[10:] + bc
    logits = (jnp.dot(h.astype(bf16), wc1_ref[...], preferred_element_type=f32)
              + jnp.dot(g.astype(bf16), wc2_ref[...], preferred_element_type=f32)
              + bc_ref[...])
    out_ref[...] = jax.nn.sigmoid(logits)


# ----------------------------------------------------------------------------
# Parameter init (PyTorch-like uniform fan-in init for Linear, fixed BN stats).
# ----------------------------------------------------------------------------
def init_params(key):
    def lin(k, fin, fout):
        kw, kb = jax.random.split(k)
        s = 1.0 / jnp.sqrt(float(fin))
        W = jax.random.uniform(kw, (fin, fout), jnp.float32, -s, s)
        b = jax.random.uniform(kb, (fout,), jnp.float32, -s, s)
        return W, b

    def bn(k, f):
        k1, k2, k3, k4 = jax.random.split(k, 4)
        gamma = 1.0 + 0.1 * jax.random.normal(k1, (f,), jnp.float32)
        beta = 0.1 * jax.random.normal(k2, (f,), jnp.float32)
        mean = 0.1 * jax.random.normal(k3, (f,), jnp.float32)
        var = 1.0 + 0.1 * jax.random.uniform(k4, (f,), jnp.float32)
        scale = gamma / jnp.sqrt(var + EPS)
        shift = beta - mean * scale
        return scale, shift

    ks = jax.random.split(key, 12)
    p = {}
    p['bn0_s'], p['bn0_b'] = bn(ks[0], IMG_IN)
    p['w1'], p['b1'] = lin(ks[1], IMG_IN, H1)
    p['w2'], p['b2'] = lin(ks[2], H1, H2)
    p['bn2_s'], p['bn2_b'] = bn(ks[3], H2)
    p['w3'], p['b3'] = lin(ks[4], H2, H3)
    p['bn3_s'], p['bn3_b'] = bn(ks[5], H3)
    p['w4'], p['b4'] = lin(ks[6], H3, H4)

    p['nbn0_s'], p['nbn0_b'] = bn(ks[7], N_IN)
    p['nw1'], p['nb1'] = lin(ks[8], N_IN, N1)
    p['nbn1_s'], p['nbn1_b'] = bn(ks[9], N1)
    p['nw2'], p['nb2'] = lin(ks[10], N1, N2)

    p['wc'], p['bc'] = lin(ks[11], COMB_IN, 1)
    return p


# ----------------------------------------------------------------------------
# Fold eval-mode BN into the following Linear (f32 folded params).
# ----------------------------------------------------------------------------
def prepare_params(p):
    def fold(scale, shift, W, b):
        Wf = scale[:, None] * W           # (fin, fout), f32
        bf = shift @ W + b                # (fout,),     f32
        return Wf, bf

    w1, b1 = fold(p['bn0_s'], p['bn0_b'], p['w1'], p['b1'])
    w3, b3 = fold(p['bn2_s'], p['bn2_b'], p['w3'], p['b3'])
    w4, b4 = fold(p['bn3_s'], p['bn3_b'], p['w4'], p['b4'])
    nw1, nb1 = fold(p['nbn0_s'], p['nbn0_b'], p['nw1'], p['nb1'])
    nw2, nb2 = fold(p['nbn1_s'], p['nbn1_b'], p['nw2'], p['nb2'])

    return {
        'w1': w1, 'b1': b1,
        'w2': p['w2'], 'b2': p['b2'],
        'w3': w3, 'b3': b3,
        'w4': w4, 'b4': b4,
        'nw1': nw1, 'nb1': nb1,
        'nw2': nw2, 'nb2': nb2,
        'wc1': p['wc'][:H4, :], 'wc2': p['wc'][H4:, :], 'bc': p['bc'],
    }


# ----------------------------------------------------------------------------
# Padding helpers.
# ----------------------------------------------------------------------------
def _pad_mat(x, r, c):
    return jnp.pad(x, ((0, r - x.shape[0]), (0, c - x.shape[1])))


def _pad_vec(x, c):
    return jnp.pad(x.reshape(1, -1), ((0, 0), (0, c - x.shape[0])))


# ----------------------------------------------------------------------------
# One-time model prep: fold BN, pad to lane-friendly shapes, cast to bf16.
# (Done at load time; NOT in the per-call path.)
# ----------------------------------------------------------------------------
def prepare_model(p):
    fp = prepare_params(p)
    bf16 = jnp.bfloat16
    return (
        fp['w1'].astype(bf16),                              # (1434, 400)
        _pad_vec(fp['b1'], P_H1),                           # (1, 400) f32
        _pad_mat(fp['w2'], P_H1, P_H2).astype(bf16),        # (400, 128)
        _pad_vec(fp['b2'], P_H2),
        _pad_mat(fp['w3'], P_H2, P_H3).astype(bf16),        # (128, 128)
        _pad_vec(fp['b3'], P_H3),
        _pad_mat(fp['w4'], P_H3, P_H4).astype(bf16),        # (128, 128)
        _pad_vec(fp['b4'], P_H4),
        _pad_mat(fp['nw1'], P_NIN, P_N1).astype(bf16),      # (128, 128)
        _pad_vec(fp['nb1'], P_N1),
        _pad_mat(fp['nw2'], P_N1, P_N2).astype(bf16),       # (128, 128)
        _pad_vec(fp['nb2'], P_N2),
        _pad_mat(fp['wc1'], P_H4, P_OUT).astype(bf16),      # (128, 8)
        _pad_mat(fp['wc2'], P_N2, P_OUT).astype(bf16),      # (128, 8)
        _pad_vec(fp['bc'], P_OUT),                          # (1, 8)
    )


# ----------------------------------------------------------------------------
# References.
# ----------------------------------------------------------------------------
def ref_forward(x1, x2, p):
    """Original (unfolded, full f32) semantics."""
    h = x1.reshape(x1.shape[0], -1)
    h = h * p['bn0_s'] + p['bn0_b']
    h = jnp.maximum(h @ p['w1'] + p['b1'], 0.0)
    h = jnp.maximum(h @ p['w2'] + p['b2'], 0.0)
    h = h * p['bn2_s'] + p['bn2_b']
    h = jnp.maximum(h @ p['w3'] + p['b3'], 0.0)
    h = h * p['bn3_s'] + p['bn3_b']
    h = h @ p['w4'] + p['b4']

    g = x2 * p['nbn0_s'] + p['nbn0_b']
    g = jnp.maximum(g @ p['nw1'] + p['nb1'], 0.0)
    g = g * p['nbn1_s'] + p['nbn1_b']
    g = g @ p['nw2'] + p['nb2']

    c = jnp.concatenate([h, g], axis=1)
    return jax.nn.sigmoid(c @ p['wc'] + p['bc'])


def ref_forward_folded(x1, x2, fp):
    """Mirror of the kernel math: folded BN, bf16 inputs/weights, f32 accum."""
    f32, bf16 = jnp.float32, jnp.bfloat16

    def mm(a, w):
        return jnp.dot(a.astype(bf16), w.astype(bf16), preferred_element_type=f32)

    h = x1.reshape(x1.shape[0], -1)
    h = jnp.maximum(mm(h, fp['w1']) + fp['b1'], 0.0)
    h = jnp.maximum(mm(h, fp['w2']) + fp['b2'], 0.0)
    h = jnp.maximum(mm(h, fp['w3']) + fp['b3'], 0.0)
    h = mm(h, fp['w4']) + fp['b4']

    g = jnp.maximum(mm(x2, fp['nw1']) + fp['nb1'], 0.0)
    g = mm(g, fp['nw2']) + fp['nb2']

    logits = mm(h, fp['wc1']) + mm(g, fp['wc2']) + fp['bc']
    return jax.nn.sigmoid(logits)


# ----------------------------------------------------------------------------
# Batch-tile selection: TM divisible by 8, nb >= 2 for mid/large batches so
# the "parallel" axis can shard across both TensorCores on v7x.
# ----------------------------------------------------------------------------
def _choose_tiles(B):
    Bp = _rup(B, 8)
    if Bp <= 16:
        TM = Bp
    elif Bp <= 2 * TM_MAX:
        TM = min(TM_MAX, _rup((Bp + 1) // 2, 8))
    else:
        TM = TM_MAX
    Bp = _rup(Bp, TM)
    return Bp, TM


# ----------------------------------------------------------------------------
# Wrapper: pad/cast inputs, build grid/BlockSpecs, call the Pallas kernel.
# ----------------------------------------------------------------------------
def forward_pallas(x1, x2, padded_params):
    B = x1.shape[0]
    Bp, TM = _choose_tiles(B)
    nb = Bp // TM

    # Cast to bf16 folded into the pad copy (half the dominant HBM stream).
    x1p = _pad_mat(x1.reshape(B, -1).astype(jnp.bfloat16), Bp, IMG_IN)
    x2p = _pad_mat(x2.astype(jnp.bfloat16), Bp, P_NIN)

    def xspec(cols):
        return pl.BlockSpec((TM, cols), lambda i: (i, 0))

    def wspec(shape):
        # constant index map -> loaded once, VMEM-resident across all tiles
        return pl.BlockSpec(shape, lambda i: (0, 0))

    in_specs = [
        xspec(IMG_IN),                                       # x1 (TM, 1434)
        xspec(P_NIN),                                        # x2 (TM, 128)
        wspec((IMG_IN, P_H1)), wspec((1, P_H1)),             # w1, b1
        wspec((P_H1, P_H2)),   wspec((1, P_H2)),             # w2, b2
        wspec((P_H2, P_H3)),   wspec((1, P_H3)),             # w3, b3
        wspec((P_H3, P_H4)),   wspec((1, P_H4)),             # w4, b4
        wspec((P_NIN, P_N1)),  wspec((1, P_N1)),             # nw1, nb1
        wspec((P_N1, P_N2)),   wspec((1, P_N2)),             # nw2, nb2
        wspec((P_H4, P_OUT)),  wspec((P_N2, P_OUT)),         # wc1, wc2
        wspec((1, P_OUT)),                                   # bc
    ]
    out_spec = pl.BlockSpec((TM, P_OUT), lambda i: (i, 0))

    out = pl.pallas_call(
        _lier_kernel,
        out_shape=jax.ShapeDtypeStruct((Bp, P_OUT), jnp.float32),
        grid_spec=pltpu.PrefetchScalarGridSpec(
            num_scalar_prefetch=0,
            grid=(nb,),
            in_specs=in_specs,
            out_specs=out_spec,
        ),
        compiler_params=pltpu.CompilerParams(
            dimension_semantics=("parallel",)),
    )(x1p, x2p, *padded_params)

    return out[:B, :1]


if __name__ == "__main__":
    key = jax.random.PRNGKey(0)
    kp, kx1, kx2 = jax.random.split(key, 3)

    params = init_params(kp)
    padded = prepare_model(params)          # one-time prep (hoisted)

    B = 4
    x1 = jax.random.normal(kx1, (B, 478, 3), jnp.float32)   # face landmarks
    x2 = jax.random.normal(kx2, (B, 10), jnp.float32)       # numeric features

    fwd = jax.jit(forward_pallas)
    out = jax.block_until_ready(fwd(x1, x2, padded))

    # Tight check vs an exact mirror of the kernel math (folded BN, bf16 in/w).
    fp = prepare_params(params)
    ref_b = jax.block_until_ready(ref_forward_folded(x1, x2, fp))
    # Loose check vs the original full-f32 semantics (bf16 quantization).
    ref_f = jax.block_until_ready(ref_forward(x1, x2, params))

    assert out.shape == (B, 1), out.shape
    assert jnp.allclose(out, ref_b, rtol=5e-3, atol=5e-3), (out, ref_b)
    assert jnp.allclose(out, ref_f, rtol=0.0, atol=2e-2), (out, ref_f)
    print("KERNEL_OK")
</pallas_src>

<mosaic_0001>
module attributes {stable_mosaic.version = 11 : i64} {
  func.func @_lier_kernel(%arg0: i32, %arg1: memref<8x1434xbf16, #tpu.memory_space<vmem>>, %arg2: memref<8x128xbf16, #tpu.memory_space<vmem>>, %arg3: memref<1434x400xbf16, #tpu.memory_space<vmem>>, %arg4: memref<1x400xf32, #tpu.memory_space<vmem>>, %arg5: memref<400x128xbf16, #tpu.memory_space<vmem>>, %arg6: memref<1x128xf32, #tpu.memory_space<vmem>>, %arg7: memref<128x128xbf16, #tpu.memory_space<vmem>>, %arg8: memref<1x128xf32, #tpu.memory_space<vmem>>, %arg9: memref<128x128xbf16, #tpu.memory_space<vmem>>, %arg10: memref<1x128xf32, #tpu.memory_space<vmem>>, %arg11: memref<128x128xbf16, #tpu.memory_space<vmem>>, %arg12: memref<1x128xf32, #tpu.memory_space<vmem>>, %arg13: memref<128x128xbf16, #tpu.memory_space<vmem>>, %arg14: memref<1x128xf32, #tpu.memory_space<vmem>>, %arg15: memref<128x8xbf16, #tpu.memory_space<vmem>>, %arg16: memref<128x8xbf16, #tpu.memory_space<vmem>>, %arg17: memref<1x8xf32, #tpu.memory_space<vmem>>, %arg18: memref<8x8xf32, #tpu.memory_space<vmem>>) attributes {dimension_semantics = [#tpu.dimension_semantics<parallel>], iteration_bounds = array<i64: 1>, scalar_prefetch = 0 : i64, scratch_operands = 0 : i64, tpu.core_type = #tpu.core_type<tc>, window_params = [{transform_indices = @transform_0, window_bounds = array<i64: 8, 1434>}, {transform_indices = @transform_1, window_bounds = array<i64: 8, 128>}, {pipeline_mode = #tpu.pipeline_mode<synchronous>, transform_indices = @transform_2, window_bounds = array<i64: 1434, 400>}, {pipeline_mode = #tpu.pipeline_mode<synchronous>, transform_indices = @transform_3, window_bounds = array<i64: 1, 400>}, {pipeline_mode = #tpu.pipeline_mode<synchronous>, transform_indices = @transform_4, window_bounds = array<i64: 400, 128>}, {pipeline_mode = #tpu.pipeline_mode<synchronous>, transform_indices = @transform_5, window_bounds = array<i64: 1, 128>}, {pipeline_mode = #tpu.pipeline_mode<synchronous>, transform_indices = @transform_6, window_bounds = array<i64: 128, 128>}, {pipeline_mode = #tpu.pipeline_mode<synchronous>, transform_indices = @transform_7, window_bounds = array<i64: 1, 128>}, {pipeline_mode = #tpu.pipeline_mode<synchronous>, transform_indices = @transform_8, window_bounds = array<i64: 128, 128>}, {pipeline_mode = #tpu.pipeline_mode<synchronous>, transform_indices = @transform_9, window_bounds = array<i64: 1, 128>}, {pipeline_mode = #tpu.pipeline_mode<synchronous>, transform_indices = @transform_10, window_bounds = array<i64: 128, 128>}, {pipeline_mode = #tpu.pipeline_mode<synchronous>, transform_indices = @transform_11, window_bounds = array<i64: 1, 128>}, {pipeline_mode = #tpu.pipeline_mode<synchronous>, transform_indices = @transform_12, window_bounds = array<i64: 128, 128>}, {pipeline_mode = #tpu.pipeline_mode<synchronous>, transform_indices = @transform_13, window_bounds = array<i64: 1, 128>}, {pipeline_mode = #tpu.pipeline_mode<synchronous>, transform_indices = @transform_14, window_bounds = array<i64: 128, 8>}, {pipeline_mode = #tpu.pipeline_mode<synchronous>, transform_indices = @transform_15, window_bounds = array<i64: 128, 8>}, {pipeline_mode = #tpu.pipeline_mode<synchronous>, transform_indices = @transform_16, window_bounds = array<i64: 1, 8>}, {transform_indices = @transform_17, window_bounds = array<i64: 8, 8>}]} {
    %c0 = arith.constant 0 : index
    %c0_0 = arith.constant 0 : index
    %0 = vector.load %arg1[%c0, %c0_0] : memref<8x1434xbf16, #tpu.memory_space<vmem>>, vector<8x1434xbf16>
    %c0_1 = arith.constant 0 : index
    %c0_2 = arith.constant 0 : index
    %1 = vector.load %arg3[%c0_1, %c0_2] : memref<1434x400xbf16, #tpu.memory_space<vmem>>, vector<1434x400xbf16>
    %cst = arith.constant dense<0.000000e+00> : vector<8x400xf32>
    %2 = tpu.matmul %0, %1, %cst {dimension_numbers = #tpu.dot_dimension_numbers<[1], [0], [0], [1], [0, 0, 1, 1], [], []>} : vector<8x1434xbf16>, vector<1434x400xbf16>, vector<8x400xf32> -> vector<8x400xf32>
    %c0_3 = arith.constant 0 : index
    %c0_4 = arith.constant 0 : index
    %3 = vector.load %arg4[%c0_3, %c0_4] : memref<1x400xf32, #tpu.memory_space<vmem>>, vector<1x400xf32>
    %4 = vector.broadcast %3 : vector<1x400xf32> to vector<8x400xf32>
    %5 = arith.addf %2, %4 : vector<8x400xf32>
    %cst_5 = arith.constant 0.000000e+00 : f32
    %6 = vector.broadcast %cst_5 : f32 to vector<8x400xf32>
    %7 = arith.maximumf %5, %6 : vector<8x400xf32>
    %8 = arith.truncf %7 : vector<8x400xf32> to vector<8x400xbf16>
    %c0_6 = arith.constant 0 : index
    %c0_7 = arith.constant 0 : index
    %9 = vector.load %arg5[%c0_6, %c0_7] : memref<400x128xbf16, #tpu.memory_space<vmem>>, vector<400x128xbf16>
    %cst_8 = arith.constant dense<0.000000e+00> : vector<8x128xf32>
    %10 = tpu.matmul %8, %9, %cst_8 {dimension_numbers = #tpu.dot_dimension_numbers<[1], [0], [0], [1], [0, 0, 1, 1], [], []>} : vector<8x400xbf16>, vector<400x128xbf16>, vector<8x128xf32> -> vector<8x128xf32>
    %c0_9 = arith.constant 0 : index
    %c0_10 = arith.constant 0 : index
    %11 = vector.load %arg6[%c0_9, %c0_10] : memref<1x128xf32, #tpu.memory_space<vmem>>, vector<1x128xf32>
    %12 = vector.broadcast %11 : vector<1x128xf32> to vector<8x128xf32>
    %13 = arith.addf %10, %12 : vector<8x128xf32>
    %cst_11 = arith.constant 0.000000e+00 : f32
    %14 = vector.broadcast %cst_11 : f32 to vector<8x128xf32>
    %15 = arith.maximumf %13, %14 : vector<8x128xf32>
    %16 = arith.truncf %15 : vector<8x128xf32> to vector<8x128xbf16>
    %c0_12 = arith.constant 0 : index
    %c0_13 = arith.constant 0 : index
    %17 = vector.load %arg7[%c0_12, %c0_13] : memref<128x128xbf16, #tpu.memory_space<vmem>>, vector<128x128xbf16>
    %cst_14 = arith.constant dense<0.000000e+00> : vector<8x128xf32>
    %18 = tpu.matmul %16, %17, %cst_14 {dimension_numbers = #tpu.dot_dimension_numbers<[1], [0], [0], [1], [0, 0, 1, 1], [], []>} : vector<8x128xbf16>, vector<128x128xbf16>, vector<8x128xf32> -> vector<8x128xf32>
    %c0_15 = arith.constant 0 : index
    %c0_16 = arith.constant 0 : index
    %19 = vector.load %arg8[%c0_15, %c0_16] : memref<1x128xf32, #tpu.memory_space<vmem>>, vector<1x128xf32>
    %20 = vector.broadcast %19 : vector<1x128xf32> to vector<8x128xf32>
    %21 = arith.addf %18, %20 : vector<8x128xf32>
    %cst_17 = arith.constant 0.000000e+00 : f32
    %22 = vector.broadcast %cst_17 : f32 to vector<8x128xf32>
    %23 = arith.maximumf %21, %22 : vector<8x128xf32>
    %24 = arith.truncf %23 : vector<8x128xf32> to vector<8x128xbf16>
    %c0_18 = arith.constant 0 : index
    %c0_19 = arith.constant 0 : index
    %25 = vector.load %arg9[%c0_18, %c0_19] : memref<128x128xbf16, #tpu.memory_space<vmem>>, vector<128x128xbf16>
    %cst_20 = arith.constant dense<0.000000e+00> : vector<8x128xf32>
    %26 = tpu.matmul %24, %25, %cst_20 {dimension_numbers = #tpu.dot_dimension_numbers<[1], [0], [0], [1], [0, 0, 1, 1], [], []>} : vector<8x128xbf16>, vector<128x128xbf16>, vector<8x128xf32> -> vector<8x128xf32>
    %c0_21 = arith.constant 0 : index
    %c0_22 = arith.constant 0 : index
    %27 = vector.load %arg10[%c0_21, %c0_22] : memref<1x128xf32, #tpu.memory_space<vmem>>, vector<1x128xf32>
    %28 = vector.broadcast %27 : vector<1x128xf32> to vector<8x128xf32>
    %29 = arith.addf %26, %28 : vector<8x128xf32>
    %c0_23 = arith.constant 0 : index
    %c0_24 = arith.constant 0 : index
    %30 = vector.load %arg2[%c0_23, %c0_24] : memref<8x128xbf16, #tpu.memory_space<vmem>>, vector<8x128xbf16>
    %c0_25 = arith.constant 0 : index
    %c0_26 = arith.constant 0 : index
    %31 = vector.load %arg11[%c0_25, %c0_26] : memref<128x128xbf16, #tpu.memory_space<vmem>>, vector<128x128xbf16>
    %cst_27 = arith.constant dense<0.000000e+00> : vector<8x128xf32>
    %32 = tpu.matmul %30, %31, %cst_27 {dimension_numbers = #tpu.dot_dimension_numbers<[1], [0], [0], [1], [0, 0, 1, 1], [], []>} : vector<8x128xbf16>, vector<128x128xbf16>, vector<8x128xf32> -> vector<8x128xf32>
    %c0_28 = arith.constant 0 : index
    %c0_29 = arith.constant 0 : index
    %33 = vector.load %arg12[%c0_28, %c0_29] : memref<1x128xf32, #tpu.memory_space<vmem>>, vector<1x128xf32>
    %34 = vector.broadcast %33 : vector<1x128xf32> to vector<8x128xf32>
    %35 = arith.addf %32, %34 : vector<8x128xf32>
    %cst_30 = arith.constant 0.000000e+00 : f32
    %36 = vector.broadcast %cst_30 : f32 to vector<8x128xf32>
    %37 = arith.maximumf %35, %36 : vector<8x128xf32>
    %38 = arith.truncf %37 : vector<8x128xf32> to vector<8x128xbf16>
    %c0_31 = arith.constant 0 : index
    %c0_32 = arith.constant 0 : index
    %39 = vector.load %arg13[%c0_31, %c0_32] : memref<128x128xbf16, #tpu.memory_space<vmem>>, vector<128x128xbf16>
    %cst_33 = arith.constant dense<0.000000e+00> : vector<8x128xf32>
    %40 = tpu.matmul %38, %39, %cst_33 {dimension_numbers = #tpu.dot_dimension_numbers<[1], [0], [0], [1], [0, 0, 1, 1], [], []>} : vector<8x128xbf16>, vector<128x128xbf16>, vector<8x128xf32> -> vector<8x128xf32>
    %c0_34 = arith.constant 0 : index
    %c0_35 = arith.constant 0 : index
    %41 = vector.load %arg14[%c0_34, %c0_35] : memref<1x128xf32, #tpu.memory_space<vmem>>, vector<1x128xf32>
    %42 = vector.broadcast %41 : vector<1x128xf32> to vector<8x128xf32>
    %43 = arith.addf %40, %42 : vector<8x128xf32>
    %44 = arith.truncf %29 : vector<8x128xf32> to vector<8x128xbf16>
    %c0_36 = arith.constant 0 : index
    %c0_37 = arith.constant 0 : index
    %45 = vector.load %arg15[%c0_36, %c0_37] : memref<128x8xbf16, #tpu.memory_space<vmem>>, vector<128x8xbf16>
    %cst_38 = arith.constant dense<0.000000e+00> : vector<8x8xf32>
    %46 = tpu.matmul %44, %45, %cst_38 {dimension_numbers = #tpu.dot_dimension_numbers<[1], [0], [0], [1], [0, 0, 1, 1], [], []>} : vector<8x128xbf16>, vector<128x8xbf16>, vector<8x8xf32> -> vector<8x8xf32>
    %47 = arith.truncf %43 : vector<8x128xf32> to vector<8x128xbf16>
    %c0_39 = arith.constant 0 : index
    %c0_40 = arith.constant 0 : index
    %48 = vector.load %arg16[%c0_39, %c0_40] : memref<128x8xbf16, #tpu.memory_space<vmem>>, vector<128x8xbf16>
    %cst_41 = arith.constant dense<0.000000e+00> : vector<8x8xf32>
    %49 = tpu.matmul %47, %48, %cst_41 {dimension_numbers = #tpu.dot_dimension_numbers<[1], [0], [0], [1], [0, 0, 1, 1], [], []>} : vector<8x128xbf16>, vector<128x8xbf16>, vector<8x8xf32> -> vector<8x8xf32>
    %50 = arith.addf %46, %49 : vector<8x8xf32>
    %c0_42 = arith.constant 0 : index
    %c0_43 = arith.constant 0 : index
    %51 = vector.load %arg17[%c0_42, %c0_43] : memref<1x8xf32, #tpu.memory_space<vmem>>, vector<1x8xf32>
    %52 = vector.broadcast %51 : vector<1x8xf32> to vector<8x8xf32>
    %53 = arith.addf %50, %52 : vector<8x8xf32>
    %54 = arith.negf %53 : vector<8x8xf32>
    %55 = math.exp %54 : vector<8x8xf32>
    %cst_44 = arith.constant 1.000000e+00 : f32
    %56 = vector.broadcast %cst_44 : f32 to vector<8x8xf32>
    %57 = arith.addf %56, %55 : vector<8x8xf32>
    %58 = arith.divf %56, %57 : vector<8x8xf32>
    %c0_45 = arith.constant 0 : index
    %c0_46 = arith.constant 0 : index
    %59 = vector.load %arg18[%c0_45, %c0_46] : memref<8x8xf32, #tpu.memory_space<vmem>>, vector<8x8xf32>
    tpu.vector_store %arg18[%c0_45, %c0_46], %58 {strides = array<i32>} : memref<8x8xf32, #tpu.memory_space<vmem>>, vector<8x8xf32>,
    return
  }
  func.func @transform_0(%arg0: i32) -> (i32, i32) {
    %c0_i32 = arith.constant 0 : i32
    %c0_i32_0 = arith.constant 0 : i32
    return %arg0, %c0_i32 : i32, i32
  }
  func.func @transform_1(%arg0: i32) -> (i32, i32) {
    %c0_i32 = arith.constant 0 : i32
    %c0_i32_0 = arith.constant 0 : i32
    return %arg0, %c0_i32 : i32, i32
  }
  func.func @transform_2(%arg0: i32) -> (i32, i32) {
    %c0_i32 = arith.constant 0 : i32
    %c0_i32_0 = arith.constant 0 : i32
    %c0_i32_1 = arith.constant 0 : i32
    return %c0_i32, %c0_i32_0 : i32, i32
  }
  func.func @transform_3(%arg0: i32) -> (i32, i32) {
    %c0_i32 = arith.constant 0 : i32
    %c0_i32_0 = arith.constant 0 : i32
    %c0_i32_1 = arith.constant 0 : i32
    return %c0_i32, %c0_i32_0 : i32, i32
  }
  func.func @transform_4(%arg0: i32) -> (i32, i32) {
    %c0_i32 = arith.constant 0 : i32
    %c0_i32_0 = arith.constant 0 : i32
    %c0_i32_1 = arith.constant 0 : i32
    return %c0_i32, %c0_i32_0 : i32, i32
  }
  func.func @transform_5(%arg0: i32) -> (i32, i32) {
    %c0_i32 = arith.constant 0 : i32
    %c0_i32_0 = arith.constant 0 : i32
    %c0_i32_1 = arith.constant 0 : i32
    return %c0_i32, %c0_i32_0 : i32, i32
  }
  func.func @transform_6(%arg0: i32) -> (i32, i32) {
    %c0_i32 = arith.constant 0 : i32
    %c0_i32_0 = arith.constant 0 : i32
    %c0_i32_1 = arith.constant 0 : i32
    return %c0_i32, %c0_i32_0 : i32, i32
  }
  func.func @transform_7(%arg0: i32) -> (i32, i32) {
    %c0_i32 = arith.constant 0 : i32
    %c0_i32_0 = arith.constant 0 : i32
    %c0_i32_1 = arith.constant 0 : i32
    return %c0_i32, %c0_i32_0 : i32, i32
  }
  func.func @transform_8(%arg0: i32) -> (i32, i32) {
    %c0_i32 = arith.constant 0 : i32
    %c0_i32_0 = arith.constant 0 : i32
    %c0_i32_1 = arith.constant 0 : i32
    return %c0_i32, %c0_i32_0 : i32, i32
  }
  func.func @transform_9(%arg0: i32) -> (i32, i32) {
    %c0_i32 = arith.constant 0 : i32
    %c0_i32_0 = arith.constant 0 : i32
    %c0_i32_1 = arith.constant 0 : i32
    return %c0_i32, %c0_i32_0 : i32, i32
  }
  func.func @transform_10(%arg0: i32) -> (i32, i32) {
    %c0_i32 = arith.constant 0 : i32
    %c0_i32_0 = arith.constant 0 : i32
    %c0_i32_1 = arith.constant 0 : i32
    return %c0_i32, %c0_i32_0 : i32, i32
  }
  func.func @transform_11(%arg0: i32) -> (i32, i32) {
    %c0_i32 = arith.constant 0 : i32
    %c0_i32_0 = arith.constant 0 : i32
    %c0_i32_1 = arith.constant 0 : i32
    return %c0_i32, %c0_i32_0 : i32, i32
  }
  func.func @transform_12(%arg0: i32) -> (i32, i32) {
    %c0_i32 = arith.constant 0 : i32
    %c0_i32_0 = arith.constant 0 : i32
    %c0_i32_1 = arith.constant 0 : i32
    return %c0_i32, %c0_i32_0 : i32, i32
  }
  func.func @transform_13(%arg0: i32) -> (i32, i32) {
    %c0_i32 = arith.constant 0 : i32
    %c0_i32_0 = arith.constant 0 : i32
    %c0_i32_1 = arith.constant 0 : i32
    return %c0_i32, %c0_i32_0 : i32, i32
  }
  func.func @transform_14(%arg0: i32) -> (i32, i32) {
    %c0_i32 = arith.constant 0 : i32
    %c0_i32_0 = arith.constant 0 : i32
    %c0_i32_1 = arith.constant 0 : i32
    return %c0_i32, %c0_i32_0 : i32, i32
  }
  func.func @transform_15(%arg0: i32) -> (i32, i32) {
    %c0_i32 = arith.constant 0 : i32
    %c0_i32_0 = arith.constant 0 : i32
    %c0_i32_1 = arith.constant 0 : i32
    return %c0_i32, %c0_i32_0 : i32, i32
  }
  func.func @transform_16(%arg0: i32) -> (i32, i32) {
    %c0_i32 = arith.constant 0 : i32
    %c0_i32_0 = arith.constant 0 : i32
    %c0_i32_1 = arith.constant 0 : i32
    return %c0_i32, %c0_i32_0 : i32, i32
  }
  func.func @transform_17(%arg0: i32) -> (i32, i32) {
    %c0_i32 = arith.constant 0 : i32
    %c0_i32_0 = arith.constant 0 : i32
    return %arg0, %c0_i32 : i32, i32
  }
}

</mosaic_0001>

<llo_original>
// kernel: forward_pallas.1
$region0: #{forward_pallas.1}
  #allocation0 [shape = 'u32[]', space=smem, size = 0x4, offset = 0x4, fixed_abs, tag = 'smem constant byte address 0x4 - core index']
  #allocation1 [shape = 'u32[144,128]{1,0:T(1,128)}', space=vmem, size = 0x12000, scoped, tag = 'internal scratch']
  %s0 = inlined_call_operand.vmem [shape: bf16[8,1434], index: 0, kind: input, shape index: {}]
  %s1 = inlined_call_operand.vmem [shape: bf16[8,128], index: 1, kind: input, shape index: {}]
  %s2 = inlined_call_operand.vmem [shape: bf16[1434,400], index: 2, kind: input, shape index: {}]
  %s3 = inlined_call_operand.vmem [shape: f32[1,400], index: 3, kind: input, shape index: {}]
  %s4 = inlined_call_operand.vmem [shape: bf16[400,128], index: 4, kind: input, shape index: {}]
  %s5 = inlined_call_operand.vmem [shape: f32[1,128], index: 5, kind: input, shape index: {}]
  %s6 = inlined_call_operand.vmem [shape: bf16[128,128], index: 6, kind: input, shape index: {}]
  %s7 = inlined_call_operand.vmem [shape: f32[1,128], index: 7, kind: input, shape index: {}]
  %s8 = inlined_call_operand.vmem [shape: bf16[128,128], index: 8, kind: input, shape index: {}]
  %s9 = inlined_call_operand.vmem [shape: f32[1,128], index: 9, kind: input, shape index: {}]
  %s10 = inlined_call_operand.vmem [shape: bf16[128,128], index: 10, kind: input, shape index: {}]
  %s11 = inlined_call_operand.vmem [shape: f32[1,128], index: 11, kind: input, shape index: {}]
  %s12 = inlined_call_operand.vmem [shape: bf16[128,128], index: 12, kind: input, shape index: {}]
  %s13 = inlined_call_operand.vmem [shape: f32[1,128], index: 13, kind: input, shape index: {}]
  %s14 = inlined_call_operand.vmem [shape: bf16[128,8], index: 14, kind: input, shape index: {}]
  %s15 = inlined_call_operand.vmem [shape: bf16[128,8], index: 15, kind: input, shape index: {}]
  %s16 = inlined_call_operand.vmem [shape: f32[1,8], index: 16, kind: input, shape index: {}]
  %s17 = inlined_call_operand.vmem [shape: f32[8,8], index: 17, kind: output, shape index: {}]
  %s18 = sld [smem:[#allocation0]]
  $region78: #{forward_pallas.1} parent=0
    _
  %s20 = ssub.s32 1, %s18
  %s21 = scalar_select 0, %s20, %s18
  // Predicated region
  $region2: #{forward_pallas.1} parent=0 // pred_check
    _
  $region3: #{forward_pallas.1} parent=0 // pred_check_branch
    %23 = sbr.rel (0) target = $region5
  $region4: #{forward_pallas.1} parent=0 // pred_region
    _
  $region5: #{forward_pallas.1} parent=0 // pred_fallthru
    _
  // Predicated region
  $region6: #{forward_pallas.1} parent=0 // pred_check
    _
  $region7: #{forward_pallas.1} parent=0 // pred_check_branch
    %25 = sbr.rel (0) target = $region9
  $region8: #{forward_pallas.1} parent=0 // pred_region
    _
  $region9: #{forward_pallas.1} parent=0 // pred_fallthru
    _
  // Predicated region
  $region10: #{forward_pallas.1} parent=0 // pred_check
    _
  $region11: #{forward_pallas.1} parent=0 // pred_check_branch
    %27 = sbr.rel (0) target = $region13
  $region12: #{forward_pallas.1} parent=0 // pred_region
    _
  $region13: #{forward_pallas.1} parent=0 // pred_fallthru
    _
  // Predicated region
  $region14: #{forward_pallas.1} parent=0 // pred_check
    _
  $region15: #{forward_pallas.1} parent=0 // pred_check_branch
    %29 = sbr.rel (0) target = $region17
  $region16: #{forward_pallas.1} parent=0 // pred_region
    _
  $region17: #{forward_pallas.1} parent=0 // pred_fallthru
    _
  // Predicated region
  $region18: #{forward_pallas.1} parent=0 // pred_check
    _
  $region19: #{forward_pallas.1} parent=0 // pred_check_branch
    %31 = sbr.rel (0) target = $region21
  $region20: #{forward_pallas.1} parent=0 // pred_region
    _
  $region21: #{forward_pallas.1} parent=0 // pred_fallthru
    _
  // Predicated region
  $region22: #{forward_pallas.1} parent=0 // pred_check
    _
  $region23: #{forward_pallas.1} parent=0 // pred_check_branch
    %33 = sbr.rel (0) target = $region25
  $region24: #{forward_pallas.1} parent=0 // pred_region
    _
  $region25: #{forward_pallas.1} parent=0 // pred_fallthru
    _
  // Predicated region
  $region26: #{forward_pallas.1} parent=0 // pred_check
    _
  $region27: #{forward_pallas.1} parent=0 // pred_check_branch
    %35 = sbr.rel (0) target = $region29
  $region28: #{forward_pallas.1} parent=0 // pred_region
    _
  $region29: #{forward_pallas.1} parent=0 // pred_fallthru
    _
  // Predicated region
  $region30: #{forward_pallas.1} parent=0 // pred_check
    _
  $region31: #{forward_pallas.1} parent=0 // pred_check_branch
    %37 = sbr.rel (0) target = $region33
  $region32: #{forward_pallas.1} parent=0 // pred_region
    _
  $region33: #{forward_pallas.1} parent=0 // pred_fallthru
    _
  // Predicated region
  $region34: #{forward_pallas.1} parent=0 // pred_check
    _
  $region35: #{forward_pallas.1} parent=0 // pred_check_branch
    %39 = sbr.rel (0) target = $region37
  $region36: #{forward_pallas.1} parent=0 // pred_region
    _
  $region37: #{forward_pallas.1} parent=0 // pred_fallthru
    _
  // Predicated region
  $region38: #{forward_pallas.1} parent=0 // pred_check
    _
  $region39: #{forward_pallas.1} parent=0 // pred_check_branch
    %41 = sbr.rel (0) target = $region41
  $region40: #{forward_pallas.1} parent=0 // pred_region
    _
  $region41: #{forward_pallas.1} parent=0 // pred_fallthru
    _
  // Predicated region
  $region42: #{forward_pallas.1} parent=0 // pred_check
    _
  $region43: #{forward_pallas.1} parent=0 // pred_check_branch
    %43 = sbr.rel (0) target = $region45
  $region44: #{forward_pallas.1} parent=0 // pred_region
    _
  $region45: #{forward_pallas.1} parent=0 // pred_fallthru
    _
  // Predicated region
  $region46: #{forward_pallas.1} parent=0 // pred_check
    _
  $region47: #{forward_pallas.1} parent=0 // pred_check_branch
    %45 = sbr.rel (0) target = $region49
  $region48: #{forward_pallas.1} parent=0 // pred_region
    _
  $region49: #{forward_pallas.1} parent=0 // pred_fallthru
    _
  // Predicated region
  $region50: #{forward_pallas.1} parent=0 // pred_check
    _
  $region51: #{forward_pallas.1} parent=0 // pred_check_branch
    %47 = sbr.rel (0) target = $region53
  $region52: #{forward_pallas.1} parent=0 // pred_region
    _
  $region53: #{forward_pallas.1} parent=0 // pred_fallthru
    _
  // Predicated region
  $region54: #{forward_pallas.1} parent=0 // pred_check
    _
  $region55: #{forward_pallas.1} parent=0 // pred_check_branch
    %49 = sbr.rel (0) target = $region57
  $region56: #{forward_pallas.1} parent=0 // pred_region
    _
  $region57: #{forward_pallas.1} parent=0 // pred_fallthru
    _
  // Predicated region
  $region58: #{forward_pallas.1} parent=0 // pred_check
    _
  $region59: #{forward_pallas.1} parent=0 // pred_check_branch
    %51 = sbr.rel (0) target = $region61
  $region60: #{forward_pallas.1} parent=0 // pred_region
    _
  $region61: #{forward_pallas.1} parent=0 // pred_fallthru
    _
  // Predicated region
  $region62: #{forward_pallas.1} parent=0 // pred_check
    _
  $region63: #{forward_pallas.1} parent=0 // pred_check_branch
    %53 = sbr.rel (0) target = $region65
  $region64: #{forward_pallas.1} parent=0 // pred_region
    _
  $region65: #{forward_pallas.1} parent=0 // pred_fallthru
    _
  // Predicated region
  $region66: #{forward_pallas.1} parent=0 // pred_check
    _
  $region67: #{forward_pallas.1} parent=0 // pred_check_branch
    %55 = sbr.rel (0) target = $region69
  $region68: #{forward_pallas.1} parent=0 // pred_region
    _
  $region69: #{forward_pallas.1} parent=0 // pred_fallthru
    _
  %v57 = vld [vmem:[%s0] sm:$0xff]
  %v58 = vld [vmem:[%s0 + $0x8] sm:$0xff]
  %v59 = vld [vmem:[%s0 + $0x10] sm:$0xff]
  %v60 = vld [vmem:[%s0 + $0x18] sm:$0xff]
  %v61 = vld [vmem:[%s0 + $0x20] sm:$0xff]
  %v62 = vld [vmem:[%s0 + $0x28] sm:$0xff]
  %v63 = vld [vmem:[%s2] sm:$0xff]
  %v64 = vld [vmem:[%s2 + $0x8] sm:$0xff]
  %v65 = vld [vmem:[%s2 + $0x10] sm:$0xff]
  %v66 = vld [vmem:[%s2 + $0x18] sm:$0xff]
  %v67 = vld [vmem:[%s2 + $0x20] sm:$0xff]
  %v68 = vld [vmem:[%s2 + $0x28] sm:$0xff]
  %v69 = vld [vmem:[%s2 + $0x30] sm:$0xff]
  %v70 = vld [vmem:[%s2 + $0x38] sm:$0xff]
  %v71 = vld [vmem:[%s2 + $0x40] sm:$0xff]
  %v72 = vld [vmem:[%s2 + $0x48] sm:$0xff]
  %v73 = vld [vmem:[%s2 + $0x50] sm:$0xff]
  %v74 = vld [vmem:[%s2 + $0x58] sm:$0xff]
  %v75 = vld [vmem:[%s2 + $0x60] sm:$0xff]
  %v76 = vld [vmem:[%s2 + $0x68] sm:$0xff]
  %v77 = vld [vmem:[%s2 + $0x70] sm:$0xff]
  %v78 = vld [vmem:[%s2 + $0x78] sm:$0xff]
  %v79 = vld [vmem:[%s2 + $0x80] sm:$0xff]
  %v80 = vld [vmem:[%s2 + $0x88] sm:$0xff]
  %v81 = vld [vmem:[%s2 + $0x90] sm:$0xff]
  %v82 = vld [vmem:[%s2 + $0x98] sm:$0xff]
  %v83 = vld [vmem:[%s2 + $0xa0] sm:$0xff]
  %v84 = vld [vmem:[%s2 + $0xa8] sm:$0xff]
  %v85 = vld [vmem:[%s2 + $0xb0] sm:$0xff]
  %v86 = vld [vmem:[%s2 + $0xb8] sm:$0xff]
  %v87 = vld [vmem:[%s2 + $0xc0] sm:$0xff]
  %v88 = vld [vmem:[%s2 + $0xc8] sm:$0xff]
  %v89 = vld [vmem:[%s2 + $0xd0] sm:$0xff]
  %v90 = vld [vmem:[%s2 + $0xd8] sm:$0xff]
  %v91 = vld [vmem:[%s2 + $0xe0] sm:$0xff]
  %v92 = vld [vmem:[%s2 + $0xe8] sm:$0xff]
  %v93 = vld [vmem:[%s2 + $0xf0] sm:$0xff]
  %v94 = vld [vmem:[%s2 + $0xf8] sm:$0xff]
  %v95 = vld [vmem:[%s2 + $0x100] sm:$0xff]
  %v96 = vld [vmem:[%s2 + $0x108] sm:$0xff]
  %v97 = vld [vmem:[%s2 + $0x110] sm:$0xff]
  %v98 = vld [vmem:[%s2 + $0x118] sm:$0xff]
  %v99 = vld [vmem:[%s2 + $0x120] sm:$0xff]
  %v100 = vld [vmem:[%s2 + $0x128] sm:$0xff]
  %v101 = vld [vmem:[%s2 + $0x130] sm:$0xff]
  %v102 = vld [vmem:[%s2 + $0x138] sm:$0xff]
  %v103 = vld [vmem:[%s2 + $0x140] sm:$0xff]
  %v104 = vld [vmem:[%s2 + $0x148] sm:$0xff]
  %v105 = vld [vmem:[%s2 + $0x150] sm:$0xff]
  %v106 = vld [vmem:[%s2 + $0x158] sm:$0xff]
  %v107 = vld [vmem:[%s2 + $0x160] sm:$0xff]
  %v108 = vld [vmem:[%s2 + $0x168] sm:$0xff]
  %v109 = vld [vmem:[%s2 + $0x170] sm:$0xff]
  %v110 = vld [vmem:[%s2 + $0x178] sm:$0xff]
  %v111 = vld [vmem:[%s2 + $0x180] sm:$0xff]
  %v112 = vld [vmem:[%s2 + $0x188] sm:$0xff]
  %v113 = vld [vmem:[%s2 + $0x190] sm:$0xff]
  %v114 = vld [vmem:[%s2 + $0x198] sm:$0xff]
  %v115 = vld [vmem:[%s2 + $0x1a0] sm:$0xff]
  %v116 = vld [vmem:[%s2 + $0x1a8] sm:$0xff]
  %v117 = vld [vmem:[%s2 + $0x1b0] sm:$0xff]
  %v118 = vld [vmem:[%s2 + $0x1b8] sm:$0xff]
  %v119 = vld [vmem:[%s2 + $0x1c0] sm:$0xff]
  %v120 = vld [vmem:[%s2 + $0x1c8] sm:$0xff]
  %v121 = vld [vmem:[%s2 + $0x1d0] sm:$0xff]
  %v122 = vld [vmem:[%s2 + $0x1d8] sm:$0xff]
  %v123 = vld [vmem:[%s2 + $0x1e0] sm:$0xff]
  %v124 = vld [vmem:[%s2 + $0x1e8] sm:$0xff]
  %v125 = vld [vmem:[%s2 + $0x1f0] sm:$0xff]
  %v126 = vld [vmem:[%s2 + $0x1f8] sm:$0xff]
  %v127 = vld [vmem:[%s2 + $0x200] sm:$0xff]
  %v128 = vld [vmem:[%s2 + $0x208] sm:$0xff]
  %v129 = vld [vmem:[%s2 + $0x210] sm:$0xff]
  %v130 = vld [vmem:[%s2 + $0x218] sm:$0xff]
  %v131 = vld [vmem:[%s2 + $0x220] sm:$0xff]
  %v132 = vld [vmem:[%s2 + $0x228] sm:$0xff]
  %v133 = vld [vmem:[%s2 + $0x230] sm:$0xff]
  %v134 = vld [vmem:[%s2 + $0x238] sm:$0xff]
  %v135 = vld [vmem:[%s2 + $0x240] sm:$0xff]
  %v136 = vld [vmem:[%s2 + $0x248] sm:$0xff]
  %v137 = vld [vmem:[%s2 + $0x250] sm:$0xff]
  %v138 = vld [vmem:[%s2 + $0x258] sm:$0xff]
  %v139 = vld [vmem:[%s2 + $0x260] sm:$0xff]
  %v140 = vld [vmem:[%s2 + $0x268] sm:$0xff]
  %v141 = vld [vmem:[%s2 + $0x270] sm:$0xff]
  %v142 = vld [vmem:[%s2 + $0x278] sm:$0xff]
  %v143 = vld [vmem:[%s2 + $0x280] sm:$0xff]
  %v144 = vld [vmem:[%s2 + $0x288] sm:$0xff]
  %v145 = vld [vmem:[%s2 + $0x290] sm:$0xff]
  %v146 = vld [vmem:[%s2 + $0x298] sm:$0xff]
  %v147 = vld [vmem:[%s2 + $0x2a0] sm:$0xff]
  %v148 = vld [vmem:[%s2 + $0x2a8] sm:$0xff]
  %v149 = vld [vmem:[%s2 + $0x2b0] sm:$0xff]
  %v150 = vld [vmem:[%s2 + $0x2b8] sm:$0xff]
  %v151 = vld [vmem:[%s2 + $0x2c0] sm:$0xff]
  %v152 = vld [vmem:[%s2 + $0x2c8] sm:$0xff]
  %v153 = vld [vmem:[%s2 + $0x2d0] sm:$0xff]
  %v154 = vld [vmem:[%s2 + $0x2d8] sm:$0xff]
  %v155 = vld [vmem:[%s2 + $0x2e0] sm:$0xff]
  %v156 = vld [vmem:[%s2 + $0x2e8] sm:$0xff]
  %v157 = vld [vmem:[%s2 + $0x2f0] sm:$0xff]
  %v158 = vld [vmem:[%s2 + $0x2f8] sm:$0xff]
  %v159 = vld [vmem:[%s2 + $0x300] sm:$0xff]
  %v160 = vld [vmem:[%s2 + $0x308] sm:$0xff]
  %v161 = vld [vmem:[%s2 + $0x310] sm:$0xff]
  %v162 = vld [vmem:[%s2 + $0x318] sm:$0xff]
  %v163 = vld [vmem:[%s2 + $0x320] sm:$0xff]
  %v164 = vld [vmem:[%s2 + $0x328] sm:$0xff]
  %v165 = vld [vmem:[%s2 + $0x330] sm:$0xff]
  %v166 = vld [vmem:[%s2 + $0x338] sm:$0xff]
  %v167 = vld [vmem:[%s2 + $0x340] sm:$0xff]
  %v168 = vld [vmem:[%s2 + $0x348] sm:$0xff]
  %v169 = vld [vmem:[%s2 + $0x350] sm:$0xff]
  %v170 = vld [vmem:[%s2 + $0x358] sm:$0xff]
  %v171 = vld [vmem:[%s2 + $0x360] sm:$0xff]
  %v172 = vld [vmem:[%s2 + $0x368] sm:$0xff]
  %v173 = vld [vmem:[%s2 + $0x370] sm:$0xff]
  %v174 = vld [vmem:[%s2 + $0x378] sm:$0xff]
  %v175 = vld [vmem:[%s2 + $0x380] sm:$0xff]
  %v176 = vld [vmem:[%s2 + $0x388] sm:$0xff]
  %v177 = vld [vmem:[%s2 + $0x390] sm:$0xff]
  %v178 = vld [vmem:[%s2 + $0x398] sm:$0xff]
  %v179 = vld [vmem:[%s2 + $0x3a0] sm:$0xff]
  %v180 = vld [vmem:[%s2 + $0x3a8] sm:$0xff]
  %v181 = vld [vmem:[%s2 + $0x3b0] sm:$0xff]
  %v182 = vld [vmem:[%s2 + $0x3b8] sm:$0xff]
  %v183 = vld [vmem:[%s2 + $0x3c0] sm:$0xff]
  %v184 = vld [vmem:[%s2 + $0x3c8] sm:$0xff]
  %v185 = vld [vmem:[%s2 + $0x3d0] sm:$0xff]
  %v186 = vld [vmem:[%s2 + $0x3d8] sm:$0xff]
  %v187 = vld [vmem:[%s2 + $0x3e0] sm:$0xff]
  %v188 = vld [vmem:[%s2 + $0x3e8] sm:$0xff]
  %v189 = vld [vmem:[%s2 + $0x3f0] sm:$0xff]
  %v190 = vld [vmem:[%s2 + $0x3f8] sm:$0xff]
  %v191 = vld [vmem:[%s2 + $0x400] sm:$0xff]
  %v192 = vld [vmem:[%s2 + $0x408] sm:$0xff]
  %v193 = vld [vmem:[%s2 + $0x410] sm:$0xff]
  %v194 = vld [vmem:[%s2 + $0x418] sm:$0xff]
  %v195 = vld [vmem:[%s2 + $0x420] sm:$0xff]
  %v196 = vld [vmem:[%s2 + $0x428] sm:$0xff]
  %v197 = vld [vmem:[%s2 + $0x430] sm:$0xff]
  %v198 = vld [vmem:[%s2 + $0x438] sm:$0xff]
  %v199 = vld [vmem:[%s2 + $0x440] sm:$0xff]
  %v200 = vld [vmem:[%s2 + $0x448] sm:$0xff]
  %v201 = vld [vmem:[%s2 + $0x450] sm:$0xff]
  %v202 = vld [vmem:[%s2 + $0x458] sm:$0xff]
  %v203 = vld [vmem:[%s2 + $0x460] sm:$0xff]
  %v204 = vld [vmem:[%s2 + $0x468] sm:$0xff]
  %v205 = vld [vmem:[%s2 + $0x470] sm:$0xff]
  %v206 = vld [vmem:[%s2 + $0x478] sm:$0xff]
  %v207 = vld [vmem:[%s2 + $0x480] sm:$0xff]
  %v208 = vld [vmem:[%s2 + $0x488] sm:$0xff]
  %v209 = vld [vmem:[%s2 + $0x490] sm:$0xff]
  %v210 = vld [vmem:[%s2 + $0x498] sm:$0xff]
  %v211 = vld [vmem:[%s2 + $0x4a0] sm:$0xff]
  %v212 = vld [vmem:[%s2 + $0x4a8] sm:$0xff]
  %v213 = vld [vmem:[%s2 + $0x4b0] sm:$0xff]
  %v214 = vld [vmem:[%s2 + $0x4b8] sm:$0xff]
  %v215 = vld [vmem:[%s2 + $0x4c0] sm:$0xff]
  %v216 = vld [vmem:[%s2 + $0x4c8] sm:$0xff]
  %v217 = vld [vmem:[%s2 + $0x4d0] sm:$0xff]
  %v218 = vld [vmem:[%s2 + $0x4d8] sm:$0xff]
  %v219 = vld [vmem:[%s2 + $0x4e0] sm:$0xff]
  %v220 = vld [vmem:[%s2 + $0x4e8] sm:$0xff]
  %v221 = vld [vmem:[%s2 + $0x4f0] sm:$0xff]
  %v222 = vld [vmem:[%s2 + $0x4f8] sm:$0xff]
  %v223 = vld [vmem:[%s2 + $0x500] sm:$0xff]
  %v224 = vld [vmem:[%s2 + $0x508] sm:$0xff]
  %v225 = vld [vmem:[%s2 + $0x510] sm:$0xff]
  %v226 = vld [vmem:[%s2 + $0x518] sm:$0xff]
  %v227 = vld [vmem:[%s2 + $0x520] sm:$0xff]
  %v228 = vld [vmem:[%s2 + $0x528] sm:$0xff]
  %v229 = vld [vmem:[%s2 + $0x530] sm:$0xff]
  %v230 = vld [vmem:[%s2 + $0x538] sm:$0xff]
  %v231 = vld [vmem:[%s2 + $0x540] sm:$0xff]
  %v232 = vld [vmem:[%s2 + $0x548] sm:$0xff]
  %v233 = vld [vmem:[%s2 + $0x550] sm:$0xff]
  %v234 = vld [vmem:[%s2 + $0x558] sm:$0xff]
  %v235 = vld [vmem:[%s2 + $0x560] sm:$0xff]
  %v236 = vld [vmem:[%s2 + $0x568] sm:$0xff]
  %v237 = vld [vmem:[%s2 + $0x570] sm:$0xff]
  %v238 = vld [vmem:[%s2 + $0x578] sm:$0xff]
  %v239 = vld [vmem:[%s2 + $0x580] sm:$0xff]
  %v240 = vld [vmem:[%s2 + $0x588] sm:$0xff]
  %v241 = vld [vmem:[%s2 + $0x590] sm:$0xff]
  %v242 = vld [vmem:[%s2 + $0x598] sm:$0xff]
  %v243 = vld [vmem:[%s2 + $0x5a0] sm:$0xff]
  %v244 = vld [vmem:[%s2 + $0x5a8] sm:$0xff]
  %v245 = vld [vmem:[%s2 + $0x5b0] sm:$0xff]
  %v246 = vld [vmem:[%s2 + $0x5b8] sm:$0xff]
  %v247 = vld [vmem:[%s2 + $0x5c0] sm:$0xff]
  %v248 = vld [vmem:[%s2 + $0x5c8] sm:$0xff]
  %v249 = vld [vmem:[%s2 + $0x5d0] sm:$0xff]
  %v250 = vld [vmem:[%s2 + $0x5d8] sm:$0xff]
  %v251 = vld [vmem:[%s2 + $0x5e0] sm:$0xff]
  %v252 = vld [vmem:[%s2 + $0x5e8] sm:$0xff]
  %v253 = vld [vmem:[%s2 + $0x5f0] sm:$0xff]
  %v254 = vld [vmem:[%s2 + $0x5f8] sm:$0xff]
  %v255 = vld [vmem:[%s2 + $0x600] sm:$0xff]
  %v256 = vld [vmem:[%s2 + $0x608] sm:$0xff]
  %v257 = vld [vmem:[%s2 + $0x610] sm:$0xff]
  %v258 = vld [vmem:[%s2 + $0x618] sm:$0xff]
  %v259 = vld [vmem:[%s2 + $0x620] sm:$0xff]
  %v260 = vld [vmem:[%s2 + $0x628] sm:$0xff]
  %v261 = vld [vmem:[%s2 + $0x630] sm:$0xff]
  %v262 = vld [vmem:[%s2 + $0x638] sm:$0xff]
  %v263 = vld [vmem:[%s2 + $0x640] sm:$0xff]
  %v264 = vld [vmem:[%s2 + $0x648] sm:$0xff]
  %v265 = vld [vmem:[%s2 + $0x650] sm:$0xff]
  %v266 = vld [vmem:[%s2 + $0x658] sm:$0xff]
  %v267 = vld [vmem:[%s2 + $0x660] sm:$0xff]
  %v268 = vld [vmem:[%s2 + $0x668] sm:$0xff]
  %v269 = vld [vmem:[%s2 + $0x670] sm:$0xff]
  %v270 = vld [vmem:[%s2 + $0x678] sm:$0xff]
  %v271 = vld [vmem:[%s2 + $0x680] sm:$0xff]
  %v272 = vld [vmem:[%s2 + $0x688] sm:$0xff]
  %v273 = vld [vmem:[%s2 + $0x690] sm:$0xff]
  %v274 = vld [vmem:[%s2 + $0x698] sm:$0xff]
  %v275 = vld [vmem:[%s2 + $0x6a0] sm:$0xff]
  %v276 = vld [vmem:[%s2 + $0x6a8] sm:$0xff]
  %v277 = vld [vmem:[%s2 + $0x6b0] sm:$0xff]
  %v278 = vld [vmem:[%s2 + $0x6b8] sm:$0xff]
  %v279 = vld [vmem:[%s2 + $0x6c0] sm:$0xff]
  %v280 = vld [vmem:[%s2 + $0x6c8] sm:$0xff]
  %v281 = vld [vmem:[%s2 + $0x6d0] sm:$0xff]
  %v282 = vld [vmem:[%s2 + $0x6d8] sm:$0xff]
  %v283 = vld [vmem:[%s2 + $0x6e0] sm:$0xff]
  %v284 = vld [vmem:[%s2 + $0x6e8] sm:$0xff]
  %v285 = vld [vmem:[%s2 + $0x6f0] sm:$0xff]
  %v286 = vld [vmem:[%s2 + $0x6f8] sm:$0xff]
  %v287 = vld [vmem:[%s2 + $0x700] sm:$0xff]
  %v288 = vld [vmem:[%s2 + $0x708] sm:$0xff]
  %v289 = vld [vmem:[%s2 + $0x710] sm:$0xff]
  %v290 = vld [vmem:[%s2 + $0x718] sm:$0xff]
  %v291 = vld [vmem:[%s2 + $0x720] sm:$0xff]
  %v292 = vld [vmem:[%s2 + $0x728] sm:$0xff]
  %v293 = vld [vmem:[%s2 + $0x730] sm:$0xff]
  %v294 = vld [vmem:[%s2 + $0x738] sm:$0xff]
  %v295 = vld [vmem:[%s2 + $0x740] sm:$0xff]
  %v296 = vld [vmem:[%s2 + $0x748] sm:$0xff]
  %v297 = vld [vmem:[%s2 + $0x750] sm:$0xff]
  %v298 = vld [vmem:[%s2 + $0x758] sm:$0xff]
  %v299 = vld [vmem:[%s2 + $0x760] sm:$0xff]
  %v300 = vld [vmem:[%s2 + $0x768] sm:$0xff]
  %v301 = vld [vmem:[%s2 + $0x770] sm:$0xff]
  %v302 = vld [vmem:[%s2 + $0x778] sm:$0xff]
  %v303 = vld [vmem:[%s2 + $0x780] sm:$0xff]
  %v304 = vld [vmem:[%s2 + $0x788] sm:$0xff]
  %v305 = vld [vmem:[%s2 + $0x790] sm:$0xff]
  %v306 = vld [vmem:[%s2 + $0x798] sm:$0xff]
  %v307 = vld [vmem:[%s2 + $0x7a0] sm:$0xff]
  %v308 = vld [vmem:[%s2 + $0x7a8] sm:$0xff]
  %v309 = vld [vmem:[%s2 + $0x7b0] sm:$0xff]
  %v310 = vld [vmem:[%s2 + $0x7b8] sm:$0xff]
  %v311 = vld [vmem:[%s2 + $0x7c0] sm:$0xff]
  %v312 = vld [vmem:[%s2 + $0x7c8] sm:$0xff]
  %v313 = vld [vmem:[%s2 + $0x7d0] sm:$0xff]
  %v314 = vld [vmem:[%s2 + $0x7d8] sm:$0xff]
  %v315 = vld [vmem:[%s2 + $0x7e0] sm:$0xff]
  %v316 = vld [vmem:[%s2 + $0x7e8] sm:$0xff]
  %v317 = vld [vmem:[%s2 + $0x7f0] sm:$0xff]
  %v318 = vld [vmem:[%s2 + $0x7f8] sm:$0xff]
  %v319 = vld [vmem:[%s2 + $0x800] sm:$0xff]
  %v320 = vld [vmem:[%s2 + $0x808] sm:$0xff]
  %v321 = vld [vmem:[%s2 + $0x810] sm:$0xff]
  %v322 = vld [vmem:[%s2 + $0x818] sm:$0xff]
  %v323 = vld [vmem:[%s2 + $0x820] sm:$0xff]
  %v324 = vld [vmem:[%s2 + $0x828] sm:$0xff]
  %v325 = vld [vmem:[%s2 + $0x830] sm:$0xff]
  %v326 = vld [vmem:[%s2 + $0x838] sm:$0xff]
  %v327 = vld [vmem:[%s2 + $0x840] sm:$0xff]
  %v328 = vld [vmem:[%s2 + $0x848] sm:$0xff]
  %v329 = vld [vmem:[%s2 + $0x850] sm:$0xff]
  %v330 = vld [vmem:[%s2 + $0x858] sm:$0xff]
  %v331 = vld [vmem:[%s2 + $0x860] sm:$0xff]
  %v332 = vld [vmem:[%s2 + $0x868] sm:$0xff]
  %v333 = vld [vmem:[%s2 + $0x870] sm:$0xff]
  %v334 = vld [vmem:[%s2 + $0x878] sm:$0xff]
  %v335 = vld [vmem:[%s2 + $0x880] sm:$0xff]
  %v336 = vld [vmem:[%s2 + $0x888] sm:$0xff]
  %v337 = vld [vmem:[%s2 + $0x890] sm:$0xff]
  %v338 = vld [vmem:[%s2 + $0x898] sm:$0xff]
  %v339 = vld [vmem:[%s2 + $0x8a0] sm:$0xff]
  %v340 = vld [vmem:[%s2 + $0x8a8] sm:$0xff]
  %v341 = vld [vmem:[%s2 + $0x8b0] sm:$0xff]
  %v342 = vld [vmem:[%s2 + $0x8b8] sm:$0xff]
  %v343 = vld [vmem:[%s2 + $0x8c0] sm:$0xff]
  %v344 = vld [vmem:[%s2 + $0x8c8] sm:$0xff]
  %v345 = vld [vmem:[%s2 + $0x8d0] sm:$0xff]
  %v346 = vld [vmem:[%s2 + $0x8d8] sm:$0xff]
  %v347 = vld [vmem:[%s2 + $0x8e0] sm:$0xff]
  %v348 = vld [vmem:[%s2 + $0x8e8] sm:$0xff]
  %v349 = vld [vmem:[%s2 + $0x8f0] sm:$0xff]
  %v350 = vld [vmem:[%s2 + $0x8f8] sm:$0xff]
  %v351 = vld [vmem:[%s2 + $0x900] sm:$0xff]
  %v352 = vld [vmem:[%s2 + $0x908] sm:$0xff]
  %v353 = vld [vmem:[%s2 + $0x910] sm:$0xff]
  %v354 = vld [vmem:[%s2 + $0x918] sm:$0xff]
  %v355 = vld [vmem:[%s2 + $0x920] sm:$0xff]
  %v356 = vld [vmem:[%s2 + $0x928] sm:$0xff]
  %v357 = vld [vmem:[%s2 + $0x930] sm:$0xff]
  %v358 = vld [vmem:[%s2 + $0x938] sm:$0xff]
  %v359 = vld [vmem:[%s2 + $0x940] sm:$0xff]
  %v360 = vld [vmem:[%s2 + $0x948] sm:$0xff]
  %v361 = vld [vmem:[%s2 + $0x950] sm:$0xff]
  %v362 = vld [vmem:[%s2 + $0x958] sm:$0xff]
  %v363 = vld [vmem:[%s2 + $0x960] sm:$0xff]
  %v364 = vld [vmem:[%s2 + $0x968] sm:$0xff]
  %v365 = vld [vmem:[%s2 + $0x970] sm:$0xff]
  %v366 = vld [vmem:[%s2 + $0x978] sm:$0xff]
  %v367 = vld [vmem:[%s2 + $0x980] sm:$0xff]
  %v368 = vld [vmem:[%s2 + $0x988] sm:$0xff]
  %v369 = vld [vmem:[%s2 + $0x990] sm:$0xff]
  %v370 = vld [vmem:[%s2 + $0x998] sm:$0xff]
  %v371 = vld [vmem:[%s2 + $0x9a0] sm:$0xff]
  %v372 = vld [vmem:[%s2 + $0x9a8] sm:$0xff]
  %v373 = vld [vmem:[%s2 + $0x9b0] sm:$0xff]
  %v374 = vld [vmem:[%s2 + $0x9b8] sm:$0xff]
  %v375 = vld [vmem:[%s2 + $0x9c0] sm:$0xff]
  %v376 = vld [vmem:[%s2 + $0x9c8] sm:$0xff]
  %v377 = vld [vmem:[%s2 + $0x9d0] sm:$0xff]
  %v378 = vld [vmem:[%s2 + $0x9d8] sm:$0xff]
  %v379 = vld [vmem:[%s2 + $0x9e0] sm:$0xff]
  %v380 = vld [vmem:[%s2 + $0x9e8] sm:$0xff]
  %v381 = vld [vmem:[%s2 + $0x9f0] sm:$0xff]
  %v382 = vld [vmem:[%s2 + $0x9f8] sm:$0xff]
  %v383 = vld [vmem:[%s2 + $0xa00] sm:$0xff]
  %v384 = vld [vmem:[%s2 + $0xa08] sm:$0xff]
  %v385 = vld [vmem:[%s2 + $0xa10] sm:$0xff]
  %v386 = vld [vmem:[%s2 + $0xa18] sm:$0xff]
  %v387 = vld [vmem:[%s2 + $0xa20] sm:$0xff]
  %v388 = vld [vmem:[%s2 + $0xa28] sm:$0xff]
  %v389 = vld [vmem:[%s2 + $0xa30] sm:$0xff]
  %v390 = vld [vmem:[%s2 + $0xa38] sm:$0xff]
  %v391 = vld [vmem:[%s2 + $0xa40] sm:$0xff]
  %v392 = vld [vmem:[%s2 + $0xa48] sm:$0xff]
  %v393 = vld [vmem:[%s2 + $0xa50] sm:$0xff]
  %v394 = vld [vmem:[%s2 + $0xa58] sm:$0xff]
  %v395 = vld [vmem:[%s2 + $0xa60] sm:$0xff]
  %v396 = vld [vmem:[%s2 + $0xa68] sm:$0xff]
  %v397 = vld [vmem:[%s2 + $0xa70] sm:$0xff]
  %v398 = vld [vmem:[%s2 + $0xa78] sm:$0xff]
  %v399 = vld [vmem:[%s2 + $0xa80] sm:$0xff]
  %v400 = vld [vmem:[%s2 + $0xa88] sm:$0xff]
  %v401 = vld [vmem:[%s2 + $0xa90] sm:$0xff]
  %v402 = vld [vmem:[%s2 + $0xa98] sm:$0xff]
  %v403 = vld [vmem:[%s2 + $0xaa0] sm:$0xff]
  %v404 = vld [vmem:[%s2 + $0xaa8] sm:$0xff]
  %v405 = vld [vmem:[%s2 + $0xab0] sm:$0xff]
  %v406 = vld [vmem:[%s2 + $0xab8] sm:$0xff]
  %v407 = vld [vmem:[%s2 + $0xac0] sm:$0xff]
  %v408 = vld [vmem:[%s2 + $0xac8] sm:$0xff]
  %v409 = vld [vmem:[%s2 + $0xad0] sm:$0xff]
  %v410 = vld [vmem:[%s2 + $0xad8] sm:$0xff]
  %v411 = vld [vmem:[%s2 + $0xae0] sm:$0xff]
  %v412 = vld [vmem:[%s2 + $0xae8] sm:$0xff]
  %v413 = vld [vmem:[%s2 + $0xaf0] sm:$0xff]
  %v414 = vld [vmem:[%s2 + $0xaf8] sm:$0xff]
  %v415 = vld [vmem:[%s2 + $0xb00] sm:$0xff]
  %v416 = vld [vmem:[%s2 + $0xb08] sm:$0xff]
  %v417 = vld [vmem:[%s2 + $0xb10] sm:$0xff]
  %v418 = vld [vmem:[%s2 + $0xb18] sm:$0xff]
  %v419 = vld [vmem:[%s2 + $0xb20] sm:$0xff]
  %v420 = vld [vmem:[%s2 + $0xb28] sm:$0xff]
  %v421 = vld [vmem:[%s2 + $0xb30] sm:$0x11]
  %v422 = vld [vmem:[%s2 + $0xb38] sm:$0x11]
  %v423 = vld [vmem:[%s3] sm:$0xf]
  %v425 = vlaneseq
  %v426 = vshrl.u32 %v425, 7
  %v427 = vsub.s32 0, %v426
  %v428 = vrot.slane %v423, %v427
  %v429 = vlaneseq
  %v430 = vshrl.u32 %v429, 7
  %v431 = vsub.s32 1, %v430
  %v432 = vrot.slane %v423, %v431
  %v433 = vlaneseq
  %v434 = vshrl.u32 %v433, 7
  %v435 = vsub.s32 2, %v434
  %v436 = vrot.slane %v423, %v435
  %v437 = vlaneseq
  %v438 = vshrl.u32 %v437, 7
  %v439 = vsub.s32 3, %v438
  %v440 = vrot.slane %v423, %v439
  %v451 = vunpack.c.l.b16 %v57
  %v452 = vunpack.c.h.b16 %v57
  %v453 = vunpack.c.l.b16 %v58
  %v454 = vunpack.c.h.b16 %v58
  %v455 = vunpack.c.l.b16 %v59
  %v456 = vunpack.c.h.b16 %v59
  %v457 = vunpack.c.l.b16 %v60
  %v458 = vunpack.c.h.b16 %v60
  %v459 = vunpack.c.l.b16 %v61
  %v460 = vunpack.c.h.b16 %v61
  %v461 = vunpack.c.l.b16 %v62
  %v462 = vunpack.c.h.b16 %v62
  %v463 = vpack.c.b16 %v451, %v451
  %v464 = vpack.c.b16 %v452, %v452
  %v465 = vpack.c.b16 %v453, %v453
  %v466 = vpack.c.b16 %v454, %v454
  %v467 = vpack.c.b16 %v455, %v455
  %v468 = vpack.c.b16 %v456, %v456
  %v469 = vpack.c.b16 %v457, %v457
  %v470 = vpack.c.b16 %v458, %v458
  %v471 = vpack.c.b16 %v459, %v459
  %v472 = vpack.c.b16 %v460, %v460
  %v473 = vpack.c.b16 %v461, %v461
  %v474 = vpack.c.b16 %v462, %v462
  %v846 = vunpack.c.l.b16 %v63
  %v847 = vunpack.c.h.b16 %v63
  %v848 = vunpack.c.l.b16 %v64
  %v849 = vunpack.c.h.b16 %v64
  %v850 = vunpack.c.l.b16 %v65
  %v851 = vunpack.c.h.b16 %v65
  %v852 = vunpack.c.l.b16 %v66
  %v853 = vunpack.c.h.b16 %v66
  %v854 = vunpack.c.l.b16 %v67
  %v855 = vunpack.c.h.b16 %v67
  %v856 = vunpack.c.l.b16 %v68
  %v857 = vunpack.c.h.b16 %v68
  %v858 = vunpack.c.l.b16 %v69
  %v859 = vunpack.c.h.b16 %v69
  %v860 = vunpack.c.l.b16 %v70
  %v861 = vunpack.c.h.b16 %v70
  %v862 = vunpack.c.l.b16 %v71
  %v863 = vunpack.c.h.b16 %v71
  %v864 = vunpack.c.l.b16 %v72
  %v865 = vunpack.c.h.b16 %v72
  %v866 = vunpack.c.l.b16 %v73
  %v867 = vunpack.c.h.b16 %v73
  %v868 = vunpack.c.l.b16 %v74
  %v869 = vunpack.c.h.b16 %v74
  %v870 = vunpack.c.l.b16 %v75
  %v871 = vunpack.c.h.b16 %v75
  %v872 = vunpack.c.l.b16 %v76
  %v873 = vunpack.c.h.b16 %v76
  %v874 = vunpack.c.l.b16 %v77
  %v875 = vunpack.c.h.b16 %v77
  %v876 = vunpack.c.l.b16 %v78
  %v877 = vunpack.c.h.b16 %v78
  %v878 = vunpack.c.l.b16 %v79
  %v879 = vunpack.c.h.b16 %v79
  %v880 = vunpack.c.l.b16 %v80
  %v881 = vunpack.c.h.b16 %v80
  %v882 = vunpack.c.l.b16 %v81
  %v883 = vunpack.c.h.b16 %v81
  %v884 = vunpack.c.l.b16 %v82
  %v885 = vunpack.c.h.b16 %v82
  %v886 = vunpack.c.l.b16 %v83
  %v887 = vunpack.c.h.b16 %v83
  %v888 = vunpack.c.l.b16 %v84
  %v889 = vunpack.c.h.b16 %v84
  %v890 = vunpack.c.l.b16 %v85
  %v891 = vunpack.c.h.b16 %v85
  %v892 = vunpack.c.l.b16 %v86
  %v893 = vunpack.c.h.b16 %v86
  %v894 = vunpack.c.l.b16 %v87
  %v895 = vunpack.c.h.b16 %v87
  %v896 = vunpack.c.l.b16 %v88
  %v897 = vunpack.c.h.b16 %v88
  %v898 = vunpack.c.l.b16 %v89
  %v899 = vunpack.c.h.b16 %v89
  %v900 = vunpack.c.l.b16 %v90
  %v901 = vunpack.c.h.b16 %v90
  %v902 = vunpack.c.l.b16 %v91
  %v903 = vunpack.c.h.b16 %v91
  %v904 = vunpack.c.l.b16 %v92
  %v905 = vunpack.c.h.b16 %v92
  %v906 = vunpack.c.l.b16 %v93
  %v907 = vunpack.c.h.b16 %v93
  %v908 = vunpack.c.l.b16 %v94
  %v909 = vunpack.c.h.b16 %v94
  %v910 = vunpack.c.l.b16 %v95
  %v911 = vunpack.c.h.b16 %v95
  %v912 = vunpack.c.l.b16 %v96
  %v913 = vunpack.c.h.b16 %v96
  %v914 = vunpack.c.l.b16 %v97
  %v915 = vunpack.c.h.b16 %v97
  %v916 = vunpack.c.l.b16 %v98
  %v917 = vunpack.c.h.b16 %v98
  %v918 = vunpack.c.l.b16 %v99
  %v919 = vunpack.c.h.b16 %v99
  %v920 = vunpack.c.l.b16 %v100
  %v921 = vunpack.c.h.b16 %v100
  %v922 = vunpack.c.l.b16 %v101
  %v923 = vunpack.c.h.b16 %v101
  %v924 = vunpack.c.l.b16 %v102
  %v925 = vunpack.c.h.b16 %v102
  %v926 = vunpack.c.l.b16 %v103
  %v927 = vunpack.c.h.b16 %v103
  %v928 = vunpack.c.l.b16 %v104
  %v929 = vunpack.c.h.b16 %v104
  %v930 = vunpack.c.l.b16 %v105
  %v931 = vunpack.c.h.b16 %v105
  %v932 = vunpack.c.l.b16 %v106
  %v933 = vunpack.c.h.b16 %v106
  %v934 = vunpack.c.l.b16 %v107
  %v935 = vunpack.c.h.b16 %v107
  %v936 = vunpack.c.l.b16 %v108
  %v937 = vunpack.c.h.b16 %v108
  %v938 = vunpack.c.l.b16 %v109
  %v939 = vunpack.c.h.b16 %v109
  %v940 = vunpack.c.l.b16 %v110
  %v941 = vunpack.c.h.b16 %v110
  %v942 = vunpack.c.l.b16 %v111
  %v943 = vunpack.c.h.b16 %v111
  %v944 = vunpack.c.l.b16 %v112
  %v945 = vunpack.c.h.b16 %v112
  %v946 = vunpack.c.l.b16 %v113
  %v947 = vunpack.c.h.b16 %v113
  %v948 = vunpack.c.l.b16 %v114
  %v949 = vunpack.c.h.b16 %v114
  %v950 = vunpack.c.l.b16 %v115
  %v951 = vunpack.c.h.b16 %v115
  %v952 = vunpack.c.l.b16 %v116
  %v953 = vunpack.c.h.b16 %v116
  %v954 = vunpack.c.l.b16 %v117
  %v955 = vunpack.c.h.b16 %v117
  %v956 = vunpack.c.l.b16 %v118
  %v957 = vunpack.c.h.b16 %v118
  %v958 = vunpack.c.l.b16 %v119
  %v959 = vunpack.c.h.b16 %v119
  %v960 = vunpack.c.l.b16 %v120
  %v961 = vunpack.c.h.b16 %v120
  %v962 = vunpack.c.l.b16 %v121
  %v963 = vunpack.c.h.b16 %v121
  %v964 = vunpack.c.l.b16 %v122
  %v965 = vunpack.c.h.b16 %v122
  %v966 = vunpack.c.l.b16 %v123
  %v967 = vunpack.c.h.b16 %v123
  %v968 = vunpack.c.l.b16 %v124
  %v969 = vunpack.c.h.b16 %v124
  %v970 = vunpack.c.l.b16 %v125
  %v971 = vunpack.c.h.b16 %v125
  %v972 = vunpack.c.l.b16 %v126
  %v973 = vunpack.c.h.b16 %v126
  %v974 = vunpack.c.l.b16 %v127
  %v975 = vunpack.c.h.b16 %v127
  %v976 = vunpack.c.l.b16 %v128
  %v977 = vunpack.c.h.b16 %v128
  %v978 = vunpack.c.l.b16 %v129
  %v979 = vunpack.c.h.b16 %v129
  %v980 = vunpack.c.l.b16 %v130
  %v981 = vunpack.c.h.b16 %v130
  %v982 = vunpack.c.l.b16 %v131
  %v983 = vunpack.c.h.b16 %v131
  %v984 = vunpack.c.l.b16 %v132
  %v985 = vunpack.c.h.b16 %v132
  %v986 = vunpack.c.l.b16 %v133
  %v987 = vunpack.c.h.b16 %v133
  %v988 = vunpack.c.l.b16 %v134
  %v989 = vunpack.c.h.b16 %v134
  %v990 = vunpack.c.l.b16 %v135
  %v991 = vunpack.c.h.b16 %v135
  %v992 = vunpack.c.l.b16 %v136
  %v993 = vunpack.c.h.b16 %v136
  %v994 = vunpack.c.l.b16 %v137
  %v995 = vunpack.c.h.b16 %v137
  %v996 = vunpack.c.l.b16 %v138
  %v997 = vunpack.c.h.b16 %v138
  %v998 = vunpack.c.l.b16 %v139
  %v999 = vunpack.c.h.b16 %v139
  %v1000 = vunpack.c.l.b16 %v140
  %v1001 = vunpack.c.h.b16 %v140
  %v1002 = vunpack.c.l.b16 %v141
  %v1003 = vunpack.c.h.b16 %v141
  %v1004 = vunpack.c.l.b16 %v142
  %v1005 = vunpack.c.h.b16 %v142
  %v1006 = vunpack.c.l.b16 %v143
  %v1007 = vunpack.c.h.b16 %v143
  %v1008 = vunpack.c.l.b16 %v144
  %v1009 = vunpack.c.h.b16 %v144
  %v1010 = vunpack.c.l.b16 %v145
  %v1011 = vunpack.c.h.b16 %v145
  %v1012 = vunpack.c.l.b16 %v146
  %v1013 = vunpack.c.h.b16 %v146
  %v1014 = vunpack.c.l.b16 %v147
  %v1015 = vunpack.c.h.b16 %v147
  %v1016 = vunpack.c.l.b16 %v148
  %v1017 = vunpack.c.h.b16 %v148
  %v1018 = vunpack.c.l.b16 %v149
  %v1019 = vunpack.c.h.b16 %v149
  %v1020 = vunpack.c.l.b16 %v150
  %v1021 = vunpack.c.h.b16 %v150
  %v1022 = vunpack.c.l.b16 %v151
  %v1023 = vunpack.c.h.b16 %v151
  %v1024 = vunpack.c.l.b16 %v152
  %v1025 = vunpack.c.h.b16 %v152
  %v1026 = vunpack.c.l.b16 %v153
  %v1027 = vunpack.c.h.b16 %v153
  %v1028 = vunpack.c.l.b16 %v154
  %v1029 = vunpack.c.h.b16 %v154
  %v1030 = vunpack.c.l.b16 %v155
  %v1031 = vunpack.c.h.b16 %v155
  %v1032 = vunpack.c.l.b16 %v156
  %v1033 = vunpack.c.h.b16 %v156
  %v1034 = vunpack.c.l.b16 %v157
  %v1035 = vunpack.c.h.b16 %v157
  %v1036 = vunpack.c.l.b16 %v158
  %v1037 = vunpack.c.h.b16 %v158
  %v1038 = vunpack.c.l.b16 %v159
  %v1039 = vunpack.c.h.b16 %v159
  %v1040 = vunpack.c.l.b16 %v160
  %v1041 = vunpack.c.h.b16 %v160
  %v1042 = vunpack.c.l.b16 %v161
  %v1043 = vunpack.c.h.b16 %v161
  %v1044 = vunpack.c.l.b16 %v162
  %v1045 = vunpack.c.h.b16 %v162
  %v1046 = vunpack.c.l.b16 %v163
  %v1047 = vunpack.c.h.b16 %v163
  %v1048 = vunpack.c.l.b16 %v164
  %v1049 = vunpack.c.h.b16 %v164
  %v1050 = vunpack.c.l.b16 %v165
  %v1051 = vunpack.c.h.b16 %v165
  %v1052 = vunpack.c.l.b16 %v166
  %v1053 = vunpack.c.h.b16 %v166
  %v1054 = vunpack.c.l.b16 %v167
  %v1055 = vunpack.c.h.b16 %v167
  %v1056 = vunpack.c.l.b16 %v168
  %v1057 = vunpack.c.h.b16 %v168
  %v1058 = vunpack.c.l.b16 %v169
  %v1059 = vunpack.c.h.b16 %v169
  %v1060 = vunpack.c.l.b16 %v170
  %v1061 = vunpack.c.h.b16 %v170
  %v1062 = vunpack.c.l.b16 %v171
  %v1063 = vunpack.c.h.b16 %v171
  %v1064 = vunpack.c.l.b16 %v172
  %v1065 = vunpack.c.h.b16 %v172
  %v1066 = vunpack.c.l.b16 %v173
  %v1067 = vunpack.c.h.b16 %v173
  %v1068 = vunpack.c.l.b16 %v174
  %v1069 = vunpack.c.h.b16 %v174
  %v1070 = vunpack.c.l.b16 %v175
  %v1071 = vunpack.c.h.b16 %v175
  %v1072 = vunpack.c.l.b16 %v176
  %v1073 = vunpack.c.h.b16 %v176
  %v1074 = vunpack.c.l.b16 %v177
  %v1075 = vunpack.c.h.b16 %v177
  %v1076 = vunpack.c.l.b16 %v178
  %v1077 = vunpack.c.h.b16 %v178
  %v1078 = vunpack.c.l.b16 %v179
  %v1079 = vunpack.c.h.b16 %v179
  %v1080 = vunpack.c.l.b16 %v180
  %v1081 = vunpack.c.h.b16 %v180
  %v1082 = vunpack.c.l.b16 %v181
  %v1083 = vunpack.c.h.b16 %v181
  %v1084 = vunpack.c.l.b16 %v182
  %v1085 = vunpack.c.h.b16 %v182
  %v1086 = vunpack.c.l.b16 %v183
  %v1087 = vunpack.c.h.b16 %v183
  %v1088 = vunpack.c.l.b16 %v184
  %v1089 = vunpack.c.h.b16 %v184
  %v1090 = vunpack.c.l.b16 %v185
  %v1091 = vunpack.c.h.b16 %v185
  %v1092 = vunpack.c.l.b16 %v186
  %v1093 = vunpack.c.h.b16 %v186
  %v1094 = vunpack.c.l.b16 %v187
  %v1095 = vunpack.c.h.b16 %v187
  %v1096 = vunpack.c.l.b16 %v188
  %v1097 = vunpack.c.h.b16 %v188
  %v1098 = vunpack.c.l.b16 %v189
  %v1099 = vunpack.c.h.b16 %v189
  %v1100 = vunpack.c.l.b16 %v190
  %v1101 = vunpack.c.h.b16 %v190
  %v1102 = vunpack.c.l.b16 %v191
  %v1103 = vunpack.c.h.b16 %v191
  %v1104 = vunpack.c.l.b16 %v192
  %v1105 = vunpack.c.h.b16 %v192
  %v1106 = vunpack.c.l.b16 %v193
  %v1107 = vunpack.c.h.b16 %v193
  %v1108 = vunpack.c.l.b16 %v194
  %v1109 = vunpack.c.h.b16 %v194
  %v1110 = vunpack.c.l.b16 %v195
  %v1111 = vunpack.c.h.b16 %v195
  %v1112 = vunpack.c.l.b16 %v196
  %v1113 = vunpack.c.h.b16 %v196
  %v1114 = vunpack.c.l.b16 %v197
  %v1115 = vunpack.c.h.b16 %v197
  %v1116 = vunpack.c.l.b16 %v198
  %v1117 = vunpack.c.h.b16 %v198
  %v1118 = vunpack.c.l.b16 %v199
  %v1119 = vunpack.c.h.b16 %v199
  %v1120 = vunpack.c.l.b16 %v200
  %v1121 = vunpack.c.h.b16 %v200
  %v1122 = vunpack.c.l.b16 %v201
  %v1123 = vunpack.c.h.b16 %v201
  %v1124 = vunpack.c.l.b16 %v202
  %v1125 = vunpack.c.h.b16 %v202
  %v1126 = vunpack.c.l.b16 %v203
  %v1127 = vunpack.c.h.b16 %v203
  %v1128 = vunpack.c.l.b16 %v204
  %v1129 = vunpack.c.h.b16 %v204
  %v1130 = vunpack.c.l.b16 %v205
  %v1131 = vunpack.c.h.b16 %v205
  %v1132 = vunpack.c.l.b16 %v206
  %v1133 = vunpack.c.h.b16 %v206
  %v1134 = vunpack.c.l.b16 %v207
  %v1135 = vunpack.c.h.b16 %v207
  %v1136 = vunpack.c.l.b16 %v208
  %v1137 = vunpack.c.h.b16 %v208
  %v1138 = vunpack.c.l.b16 %v209
  %v1139 = vunpack.c.h.b16 %v209
  %v1140 = vunpack.c.l.b16 %v210
  %v1141 = vunpack.c.h.b16 %v210
  %v1142 = vunpack.c.l.b16 %v211
  %v1143 = vunpack.c.h.b16 %v211
  %v1144 = vunpack.c.l.b16 %v212
  %v1145 = vunpack.c.h.b16 %v212
  %v1146 = vunpack.c.l.b16 %v213
  %v1147 = vunpack.c.h.b16 %v213
  %v1148 = vunpack.c.l.b16 %v214
  %v1149 = vunpack.c.h.b16 %v214
  %v1150 = vunpack.c.l.b16 %v215
  %v1151 = vunpack.c.h.b16 %v215
  %v1152 = vunpack.c.l.b16 %v216
  %v1153 = vunpack.c.h.b16 %v216
  %v1154 = vunpack.c.l.b16 %v217
  %v1155 = vunpack.c.h.b16 %v217
  %v1156 = vunpack.c.l.b16 %v218
  %v1157 = vunpack.c.h.b16 %v218
  %v1158 = vunpack.c.l.b16 %v219
  %v1159 = vunpack.c.h.b16 %v219
  %v1160 = vunpack.c.l.b16 %v220
  %v1161 = vunpack.c.h.b16 %v220
  %v1162 = vunpack.c.l.b16 %v221
  %v1163 = vunpack.c.h.b16 %v221
  %v1164 = vunpack.c.l.b16 %v222
  %v1165 = vunpack.c.h.b16 %v222
  %v1166 = vunpack.c.l.b16 %v223
  %v1167 = vunpack.c.h.b16 %v223
  %v1168 = vunpack.c.l.b16 %v224
  %v1169 = vunpack.c.h.b16 %v224
  %v1170 = vunpack.c.l.b16 %v225
  %v1171 = vunpack.c.h.b16 %v225
  %v1172 = vunpack.c.l.b16 %v226
  %v1173 = vunpack.c.h.b16 %v226
  %v1174 = vunpack.c.l.b16 %v227
  %v1175 = vunpack.c.h.b16 %v227
  %v1176 = vunpack.c.l.b16 %v228
  %v1177 = vunpack.c.h.b16 %v228
  %v1178 = vunpack.c.l.b16 %v229
  %v1179 = vunpack.c.h.b16 %v229
  %v1180 = vunpack.c.l.b16 %v230
  %v1181 = vunpack.c.h.b16 %v230
  %v1182 = vunpack.c.l.b16 %v231
  %v1183 = vunpack.c.h.b16 %v231
  %v1184 = vunpack.c.l.b16 %v232
  %v1185 = vunpack.c.h.b16 %v232
  %v1186 = vunpack.c.l.b16 %v233
  %v1187 = vunpack.c.h.b16 %v233
  %v1188 = vunpack.c.l.b16 %v234
  %v1189 = vunpack.c.h.b16 %v234
  %v1190 = vunpack.c.l.b16 %v235
  %v1191 = vunpack.c.h.b16 %v235
  %v1192 = vunpack.c.l.b16 %v236
  %v1193 = vunpack.c.h.b16 %v236
  %v1194 = vunpack.c.l.b16 %v237
  %v1195 = vunpack.c.h.b16 %v237
  %v1196 = vunpack.c.l.b16 %v238
  %v1197 = vunpack.c.h.b16 %v238
  %v1198 = vunpack.c.l.b16 %v239
  %v1199 = vunpack.c.h.b16 %v239
  %v1200 = vunpack.c.l.b16 %v240
  %v1201 = vunpack.c.h.b16 %v240
  %v1202 = vunpack.c.l.b16 %v241
  %v1203 = vunpack.c.h.b16 %v241
  %v1204 = vunpack.c.l.b16 %v242
  %v1205 = vunpack.c.h.b16 %v242
  %v1206 = vunpack.c.l.b16 %v243
  %v1207 = vunpack.c.h.b16 %v243
  %v1208 = vunpack.c.l.b16 %v244
  %v1209 = vunpack.c.h.b16 %v244
  %v1210 = vunpack.c.l.b16 %v245
  %v1211 = vunpack.c.h.b16 %v245
  %v1212 = vunpack.c.l.b16 %v246
  %v1213 = vunpack.c.h.b16 %v246
  %v1214 = vunpack.c.l.b16 %v247
  %v1215 = vunpack.c.h.b16 %v247
  %v1216 = vunpack.c.l.b16 %v248
  %v1217 = vunpack.c.h.b16 %v248
  %v1218 = vunpack.c.l.b16 %v249
  %v1219 = vunpack.c.h.b16 %v249
  %v1220 = vunpack.c.l.b16 %v250
  %v1221 = vunpack.c.h.b16 %v250
  %v1222 = vunpack.c.l.b16 %v251
  %v1223 = vunpack.c.h.b16 %v251
  %v1224 = vunpack.c.l.b16 %v252
  %v1225 = vunpack.c.h.b16 %v252
  %v1226 = vunpack.c.l.b16 %v253
  %v1227 = vunpack.c.h.b16 %v253
  %v1228 = vunpack.c.l.b16 %v254
  %v1229 = vunpack.c.h.b16 %v254
  %v1230 = vunpack.c.l.b16 %v255
  %v1231 = vunpack.c.h.b16 %v255
  %v1232 = vunpack.c.l.b16 %v256
  %v1233 = vunpack.c.h.b16 %v256
  %v1234 = vunpack.c.l.b16 %v257
  %v1235 = vunpack.c.h.b16 %v257
  %v1236 = vunpack.c.l.b16 %v258
  %v1237 = vunpack.c.h.b16 %v258
  %v1238 = vunpack.c.l.b16 %v259
  %v1239 = vunpack.c.h.b16 %v259
  %v1240 = vunpack.c.l.b16 %v260
  %v1241 = vunpack.c.h.b16 %v260
  %v1242 = vunpack.c.l.b16 %v261
  %v1243 = vunpack.c.h.b16 %v261
  %v1244 = vunpack.c.l.b16 %v262
  %v1245 = vunpack.c.h.b16 %v262
  %v1246 = vunpack.c.l.b16 %v263
  %v1247 = vunpack.c.h.b16 %v263
  %v1248 = vunpack.c.l.b16 %v264
  %v1249 = vunpack.c.h.b16 %v264
  %v1250 = vunpack.c.l.b16 %v265
  %v1251 = vunpack.c.h.b16 %v265
  %v1252 = vunpack.c.l.b16 %v266
  %v1253 = vunpack.c.h.b16 %v266
  %v1254 = vunpack.c.l.b16 %v267
  %v1255 = vunpack.c.h.b16 %v267
  %v1256 = vunpack.c.l.b16 %v268
  %v1257 = vunpack.c.h.b16 %v268
  %v1258 = vunpack.c.l.b16 %v269
  %v1259 = vunpack.c.h.b16 %v269
  %v1260 = vunpack.c.l.b16 %v270
  %v1261 = vunpack.c.h.b16 %v270
  %v1262 = vunpack.c.l.b16 %v271
  %v1263 = vunpack.c.h.b16 %v271
  %v1264 = vunpack.c.l.b16 %v272
  %v1265 = vunpack.c.h.b16 %v272
  %v1266 = vunpack.c.l.b16 %v273
  %v1267 = vunpack.c.h.b16 %v273
  %v1268 = vunpack.c.l.b16 %v274
  %v1269 = vunpack.c.h.b16 %v274
  %v1270 = vunpack.c.l.b16 %v275
  %v1271 = vunpack.c.h.b16 %v275
  %v1272 = vunpack.c.l.b16 %v276
  %v1273 = vunpack.c.h.b16 %v276
  %v1274 = vunpack.c.l.b16 %v277
  %v1275 = vunpack.c.h.b16 %v277
  %v1276 = vunpack.c.l.b16 %v278
  %v1277 = vunpack.c.h.b16 %v278
  %v1278 = vunpack.c.l.b16 %v279
  %v1279 = vunpack.c.h.b16 %v279
  %v1280 = vunpack.c.l.b16 %v280
  %v1281 = vunpack.c.h.b16 %v280
  %v1282 = vunpack.c.l.b16 %v281
  %v1283 = vunpack.c.h.b16 %v281
  %v1284 = vunpack.c.l.b16 %v282
  %v1285 = vunpack.c.h.b16 %v282
  %v1286 = vunpack.c.l.b16 %v283
  %v1287 = vunpack.c.h.b16 %v283
  %v1288 = vunpack.c.l.b16 %v284
  %v1289 = vunpack.c.h.b16 %v284
  %v1290 = vunpack.c.l.b16 %v285
  %v1291 = vunpack.c.h.b16 %v285
  %v1292 = vunpack.c.l.b16 %v286
  %v1293 = vunpack.c.h.b16 %v286
  %v1294 = vunpack.c.l.b16 %v287
  %v1295 = vunpack.c.h.b16 %v287
  %v1296 = vunpack.c.l.b16 %v288
  %v1297 = vunpack.c.h.b16 %v288
  %v1298 = vunpack.c.l.b16 %v289
  %v1299 = vunpack.c.h.b16 %v289
  %v1300 = vunpack.c.l.b16 %v290
  %v1301 = vunpack.c.h.b16 %v290
  %v1302 = vunpack.c.l.b16 %v291
  %v1303 = vunpack.c.h.b16 %v291
  %v1304 = vunpack.c.l.b16 %v292
  %v1305 = vunpack.c.h.b16 %v292
  %v1306 = vunpack.c.l.b16 %v293
  %v1307 = vunpack.c.h.b16 %v293
  %v1308 = vunpack.c.l.b16 %v294
  %v1309 = vunpack.c.h.b16 %v294
  %v1310 = vunpack.c.l.b16 %v295
  %v1311 = vunpack.c.h.b16 %v295
  %v1312 = vunpack.c.l.b16 %v296
  %v1313 = vunpack.c.h.b16 %v296
  %v1314 = vunpack.c.l.b16 %v297
  %v1315 = vunpack.c.h.b16 %v297
  %v1316 = vunpack.c.l.b16 %v298
  %v1317 = vunpack.c.h.b16 %v298
  %v1318 = vunpack.c.l.b16 %v299
  %v1319 = vunpack.c.h.b16 %v299
  %v1320 = vunpack.c.l.b16 %v300
  %v1321 = vunpack.c.h.b16 %v300
  %v1322 = vunpack.c.l.b16 %v301
  %v1323 = vunpack.c.h.b16 %v301
  %v1324 = vunpack.c.l.b16 %v302
  %v1325 = vunpack.c.h.b16 %v302
  %v1326 = vunpack.c.l.b16 %v303
  %v1327 = vunpack.c.h.b16 %v303
  %v1328 = vunpack.c.l.b16 %v304
  %v1329 = vunpack.c.h.b16 %v304
  %v1330 = vunpack.c.l.b16 %v305
  %v1331 = vunpack.c.h.b16 %v305
  %v1332 = vunpack.c.l.b16 %v306
  %v1333 = vunpack.c.h.b16 %v306
  %v1334 = vunpack.c.l.b16 %v307
  %v1335 = vunpack.c.h.b16 %v307
  %v1336 = vunpack.c.l.b16 %v308
  %v1337 = vunpack.c.h.b16 %v308
  %v1338 = vunpack.c.l.b16 %v309
  %v1339 = vunpack.c.h.b16 %v309
  %v1340 = vunpack.c.l.b16 %v310
  %v1341 = vunpack.c.h.b16 %v310
  %v1342 = vunpack.c.l.b16 %v311
  %v1343 = vunpack.c.h.b16 %v311
  %v1344 = vunpack.c.l.b16 %v312
  %v1345 = vunpack.c.h.b16 %v312
  %v1346 = vunpack.c.l.b16 %v313
  %v1347 = vunpack.c.h.b16 %v313
  %v1348 = vunpack.c.l.b16 %v314
  %v1349 = vunpack.c.h.b16 %v314
  %v1350 = vunpack.c.l.b16 %v315
  %v1351 = vunpack.c.h.b16 %v315
  %v1352 = vunpack.c.l.b16 %v316
  %v1353 = vunpack.c.h.b16 %v316
  %v1354 = vunpack.c.l.b16 %v317
  %v1355 = vunpack.c.h.b16 %v317
  %v1356 = vunpack.c.l.b16 %v318
  %v1357 = vunpack.c.h.b16 %v318
  %v1358 = vunpack.c.l.b16 %v319
  %v1359 = vunpack.c.h.b16 %v319
  %v1360 = vunpack.c.l.b16 %v320
  %v1361 = vunpack.c.h.b16 %v320
  %v1362 = vunpack.c.l.b16 %v321
  %v1363 = vunpack.c.h.b16 %v321
  %v1364 = vunpack.c.l.b16 %v322
  %v1365 = vunpack.c.h.b16 %v322
  %v1366 = vunpack.c.l.b16 %v323
  %v1367 = vunpack.c.h.b16 %v323
  %v1368 = vunpack.c.l.b16 %v324
  %v1369 = vunpack.c.h.b16 %v324
  %v1370 = vunpack.c.l.b16 %v325
  %v1371 = vunpack.c.h.b16 %v325
  %v1372 = vunpack.c.l.b16 %v326
  %v1373 = vunpack.c.h.b16 %v326
  %v1374 = vunpack.c.l.b16 %v327
  %v1375 = vunpack.c.h.b16 %v327
  %v1376 = vunpack.c.l.b16 %v328
  %v1377 = vunpack.c.h.b16 %v328
  %v1378 = vunpack.c.l.b16 %v329
  %v1379 = vunpack.c.h.b16 %v329
  %v1380 = vunpack.c.l.b16 %v330
  %v1381 = vunpack.c.h.b16 %v330
  %v1382 = vunpack.c.l.b16 %v331
  %v1383 = vunpack.c.h.b16 %v331
  %v1384 = vunpack.c.l.b16 %v332
  %v1385 = vunpack.c.h.b16 %v332
  %v1386 = vunpack.c.l.b16 %v333
  %v1387 = vunpack.c.h.b16 %v333
  %v1388 = vunpack.c.l.b16 %v334
  %v1389 = vunpack.c.h.b16 %v334
  %v1390 = vunpack.c.l.b16 %v335
  %v1391 = vunpack.c.h.b16 %v335
  %v1392 = vunpack.c.l.b16 %v336
  %v1393 = vunpack.c.h.b16 %v336
  %v1394 = vunpack.c.l.b16 %v337
  %v1395 = vunpack.c.h.b16 %v337
  %v1396 = vunpack.c.l.b16 %v338
  %v1397 = vunpack.c.h.b16 %v338
  %v1398 = vunpack.c.l.b16 %v339
  %v1399 = vunpack.c.h.b16 %v339
  %v1400 = vunpack.c.l.b16 %v340
  %v1401 = vunpack.c.h.b16 %v340
  %v1402 = vunpack.c.l.b16 %v341
  %v1403 = vunpack.c.h.b16 %v341
  %v1404 = vunpack.c.l.b16 %v342
  %v1405 = vunpack.c.h.b16 %v342
  %v1406 = vunpack.c.l.b16 %v343
  %v1407 = vunpack.c.h.b16 %v343
  %v1408 = vunpack.c.l.b16 %v344
  %v1409 = vunpack.c.h.b16 %v344
  %v1410 = vunpack.c.l.b16 %v345
  %v1411 = vunpack.c.h.b16 %v345
  %v1412 = vunpack.c.l.b16 %v346
  %v1413 = vunpack.c.h.b16 %v346
  %v1414 = vunpack.c.l.b16 %v347
  %v1415 = vunpack.c.h.b16 %v347
  %v1416 = vunpack.c.l.b16 %v348
  %v1417 = vunpack.c.h.b16 %v348
  %v1418 = vunpack.c.l.b16 %v349
  %v1419 = vunpack.c.h.b16 %v349
  %v1420 = vunpack.c.l.b16 %v350
  %v1421 = vunpack.c.h.b16 %v350
  %v1422 = vunpack.c.l.b16 %v351
  %v1423 = vunpack.c.h.b16 %v351
  %v1424 = vunpack.c.l.b16 %v352
  %v1425 = vunpack.c.h.b16 %v352
  %v1426 = vunpack.c.l.b16 %v353
  %v1427 = vunpack.c.h.b16 %v353
  %v1428 = vunpack.c.l.b16 %v354
  %v1429 = vunpack.c.h.b16 %v354
  %v1430 = vunpack.c.l.b16 %v355
  %v1431 = vunpack.c.h.b16 %v355
  %v1432 = vunpack.c.l.b16 %v356
  %v1433 = vunpack.c.h.b16 %v356
  %v1434 = vunpack.c.l.b16 %v357
  %v1435 = vunpack.c.h.b16 %v357
  %v1436 = vunpack.c.l.b16 %v358
  %v1437 = vunpack.c.h.b16 %v358
  %v1438 = vunpack.c.l.b16 %v359
  %v1439 = vunpack.c.h.b16 %v359
  %v1440 = vunpack.c.l.b16 %v360
  %v1441 = vunpack.c.h.b16 %v360
  %v1442 = vunpack.c.l.b16 %v361
  %v1443 = vunpack.c.h.b16 %v361
  %v1444 = vunpack.c.l.b16 %v362
  %v1445 = vunpack.c.h.b16 %v362
  %v1446 = vunpack.c.l.b16 %v363
  %v1447 = vunpack.c.h.b16 %v363
  %v1448 = vunpack.c.l.b16 %v364
  %v1449 = vunpack.c.h.b16 %v364
  %v1450 = vunpack.c.l.b16 %v365
  %v1451 = vunpack.c.h.b16 %v365
  %v1452 = vunpack.c.l.b16 %v366
  %v1453 = vunpack.c.h.b16 %v366
  %v1454 = vunpack.c.l.b16 %v367
  %v1455 = vunpack.c.h.b16 %v367
  %v1456 = vunpack.c.l.b16 %v368
  %v1457 = vunpack.c.h.b16 %v368
  %v1458 = vunpack.c.l.b16 %v369
  %v1459 = vunpack.c.h.b16 %v369
  %v1460 = vunpack.c.l.b16 %v370
  %v1461 = vunpack.c.h.b16 %v370
  %v1462 = vunpack.c.l.b16 %v371
  %v1463 = vunpack.c.h.b16 %v371
  %v1464 = vunpack.c.l.b16 %v372
  %v1465 = vunpack.c.h.b16 %v372
  %v1466 = vunpack.c.l.b16 %v373
  %v1467 = vunpack.c.h.b16 %v373
  %v1468 = vunpack.c.l.b16 %v374
  %v1469 = vunpack.c.h.b16 %v374
  %v1470 = vunpack.c.l.b16 %v375
  %v1471 = vunpack.c.h.b16 %v375
  %v1472 = vunpack.c.l.b16 %v376
  %v1473 = vunpack.c.h.b16 %v376
  %v1474 = vunpack.c.l.b16 %v377
  %v1475 = vunpack.c.h.b16 %v377
  %v1476 = vunpack.c.l.b16 %v378
  %v1477 = vunpack.c.h.b16 %v378
  %v1478 = vunpack.c.l.b16 %v379
  %v1479 = vunpack.c.h.b16 %v379
  %v1480 = vunpack.c.l.b16 %v380
  %v1481 = vunpack.c.h.b16 %v380
  %v1482 = vunpack.c.l.b16 %v381
  %v1483 = vunpack.c.h.b16 %v381
  %v1484 = vunpack.c.l.b16 %v382
  %v1485 = vunpack.c.h.b16 %v382
  %v1486 = vunpack.c.l.b16 %v383
  %v1487 = vunpack.c.h.b16 %v383
  %v1488 = vunpack.c.l.b16 %v384
  %v1489 = vunpack.c.h.b16 %v384
  %v1490 = vunpack.c.l.b16 %v385
  %v1491 = vunpack.c.h.b16 %v385
  %v1492 = vunpack.c.l.b16 %v386
  %v1493 = vunpack.c.h.b16 %v386
  %v1494 = vunpack.c.l.b16 %v387
  %v1495 = vunpack.c.h.b16 %v387
  %v1496 = vunpack.c.l.b16 %v388
  %v1497 = vunpack.c.h.b16 %v388
  %v1498 = vunpack.c.l.b16 %v389
  %v1499 = vunpack.c.h.b16 %v389
  %v1500 = vunpack.c.l.b16 %v390
  %v1501 = vunpack.c.h.b16 %v390
  %v1502 = vunpack.c.l.b16 %v391
  %v1503 = vunpack.c.h.b16 %v391
  %v1504 = vunpack.c.l.b16 %v392
  %v1505 = vunpack.c.h.b16 %v392
  %v1506 = vunpack.c.l.b16 %v393
  %v1507 = vunpack.c.h.b16 %v393
  %v1508 = vunpack.c.l.b16 %v394
  %v1509 = vunpack.c.h.b16 %v394
  %v1510 = vunpack.c.l.b16 %v395
  %v1511 = vunpack.c.h.b16 %v395
  %v1512 = vunpack.c.l.b16 %v396
  %v1513 = vunpack.c.h.b16 %v396
  %v1514 = vunpack.c.l.b16 %v397
  %v1515 = vunpack.c.h.b16 %v397
  %v1516 = vunpack.c.l.b16 %v398
  %v1517 = vunpack.c.h.b16 %v398
  %v1518 = vunpack.c.l.b16 %v399
  %v1519 = vunpack.c.h.b16 %v399
  %v1520 = vunpack.c.l.b16 %v400
  %v1521 = vunpack.c.h.b16 %v400
  %v1522 = vunpack.c.l.b16 %v401
  %v1523 = vunpack.c.h.b16 %v401
  %v1524 = vunpack.c.l.b16 %v402
  %v1525 = vunpack.c.h.b16 %v402
  %v1526 = vunpack.c.l.b16 %v403
  %v1527 = vunpack.c.h.b16 %v403
  %v1528 = vunpack.c.l.b16 %v404
  %v1529 = vunpack.c.h.b16 %v404
  %v1530 = vunpack.c.l.b16 %v405
  %v1531 = vunpack.c.h.b16 %v405
  %v1532 = vunpack.c.l.b16 %v406
  %v1533 = vunpack.c.h.b16 %v406
  %v1534 = vunpack.c.l.b16 %v407
  %v1535 = vunpack.c.h.b16 %v407
  %v1536 = vunpack.c.l.b16 %v408
  %v1537 = vunpack.c.h.b16 %v408
  %v1538 = vunpack.c.l.b16 %v409
  %v1539 = vunpack.c.h.b16 %v409
  %v1540 = vunpack.c.l.b16 %v410
  %v1541 = vunpack.c.h.b16 %v410
  %v1542 = vunpack.c.l.b16 %v411
  %v1543 = vunpack.c.h.b16 %v411
  %v1544 = vunpack.c.l.b16 %v412
  %v1545 = vunpack.c.h.b16 %v412
  %v1546 = vunpack.c.l.b16 %v413
  %v1547 = vunpack.c.h.b16 %v413
  %v1548 = vunpack.c.l.b16 %v414
  %v1549 = vunpack.c.h.b16 %v414
  %v1550 = vunpack.c.l.b16 %v415
  %v1551 = vunpack.c.h.b16 %v415
  %v1552 = vunpack.c.l.b16 %v416
  %v1553 = vunpack.c.h.b16 %v416
  %v1554 = vunpack.c.l.b16 %v417
  %v1555 = vunpack.c.h.b16 %v417
  %v1556 = vunpack.c.l.b16 %v418
  %v1557 = vunpack.c.h.b16 %v418
  %v1558 = vunpack.c.l.b16 %v419
  %v1559 = vunpack.c.h.b16 %v419
  %v1560 = vunpack.c.l.b16 %v420
  %v1561 = vunpack.c.h.b16 %v420
  %v1562 = vunpack.c.l.b16 %v421
  %v1563 = vunpack.c.h.b16 %v421
  %v1564 = vunpack.c.l.b16 %v422
  %v1565 = vunpack.c.h.b16 %v422
  %v1566 = vpack.c.b16 %v850, %v846
  %v1567 = vpack.c.b16 %v851, %v847
  %v1568 = vpack.c.b16 %v852, %v848
  %v1569 = vpack.c.b16 %v853, %v849
  %v1570 = vpack.c.b16 %v858, %v854
  %v1571 = vpack.c.b16 %v859, %v855
  %v1572 = vpack.c.b16 %v860, %v856
  %v1573 = vpack.c.b16 %v861, %v857
  %v1574 = vpack.c.b16 %v866, %v862
  %v1575 = vpack.c.b16 %v867, %v863
  %v1576 = vpack.c.b16 %v868, %v864
  %v1577 = vpack.c.b16 %v869, %v865
  %v1578 = vpack.c.b16 %v874, %v870
  %v1579 = vpack.c.b16 %v875, %v871
  %v1580 = vpack.c.b16 %v876, %v872
  %v1581 = vpack.c.b16 %v877, %v873
  %v1582 = vpack.c.b16 %v882, %v878
  %v1583 = vpack.c.b16 %v883, %v879
  %v1584 = vpack.c.b16 %v884, %v880
  %v1585 = vpack.c.b16 %v885, %v881
  %v1586 = vpack.c.b16 %v890, %v886
  %v1587 = vpack.c.b16 %v891, %v887
  %v1588 = vpack.c.b16 %v892, %v888
  %v1589 = vpack.c.b16 %v893, %v889
  %v1590 = vpack.c.b16 %v898, %v894
  %v1591 = vpack.c.b16 %v899, %v895
  %v1592 = vpack.c.b16 %v900, %v896
  %v1593 = vpack.c.b16 %v901, %v897
  %v1594 = vpack.c.b16 %v906, %v902
  %v1595 = vpack.c.b16 %v907, %v903
  %v1596 = vpack.c.b16 %v908, %v904
  %v1597 = vpack.c.b16 %v909, %v905
  %v1598 = vpack.c.b16 %v914, %v910
  %v1599 = vpack.c.b16 %v915, %v911
  %v1600 = vpack.c.b16 %v916, %v912
  %v1601 = vpack.c.b16 %v917, %v913
  %v1602 = vpack.c.b16 %v922, %v918
  %v1603 = vpack.c.b16 %v923, %v919
  %v1604 = vpack.c.b16 %v924, %v920
  %v1605 = vpack.c.b16 %v925, %v921
  %v1606 = vpack.c.b16 %v930, %v926
  %v1607 = vpack.c.b16 %v931, %v927
  %v1608 = vpack.c.b16 %v932, %v928
  %v1609 = vpack.c.b16 %v933, %v929
  %v1610 = vpack.c.b16 %v938, %v934
  %v1611 = vpack.c.b16 %v939, %v935
  %v1612 = vpack.c.b16 %v940, %v936
  %v1613 = vpack.c.b16 %v941, %v937
  %v1614 = vpack.c.b16 %v946, %v942
  %v1615 = vpack.c.b16 %v947, %v943
  %v1616 = vpack.c.b16 %v948, %v944
  %v1617 = vpack.c.b16 %v949, %v945
  %v1618 = vpack.c.b16 %v954, %v950
  %v1619 = vpack.c.b16 %v955, %v951
  %v1620 = vpack.c.b16 %v956, %v952
  %v1621 = vpack.c.b16 %v957, %v953
  %v1622 = vpack.c.b16 %v962, %v958
  %v1623 = vpack.c.b16 %v963, %v959
  %v1624 = vpack.c.b16 %v964, %v960
  %v1625 = vpack.c.b16 %v965, %v961
  %v1626 = vpack.c.b16 %v970, %v966
  %v1627 = vpack.c.b16 %v971, %v967
  %v1628 = vpack.c.b16 %v972, %v968
  %v1629 = vpack.c.b16 %v973, %v969
  %v1630 = vpack.c.b16 %v978, %v974
  %v1631 = vpack.c.b16 %v979, %v975
  %v1632 = vpack.c.b16 %v980, %v976
  %v1633 = vpack.c.b16 %v981, %v977
  %v1634 = vpack.c.b16 %v986, %v982
  %v1635 = vpack.c.b16 %v987, %v983
  %v1636 = vpack.c.b16 %v988, %v984
  %v1637 = vpack.c.b16 %v989, %v985
  %v1638 = vpack.c.b16 %v994, %v990
  %v1639 = vpack.c.b16 %v995, %v991
  %v1640 = vpack.c.b16 %v996, %v992
  %v1641 = vpack.c.b16 %v997, %v993
  %v1642 = vpack.c.b16 %v1002, %v998
  %v1643 = vpack.c.b16 %v1003, %v999
  %v1644 = vpack.c.b16 %v1004, %v1000
  %v1645 = vpack.c.b16 %v1005, %v1001
  %v1646 = vpack.c.b16 %v1010, %v1006
  %v1647 = vpack.c.b16 %v1011, %v1007
  %v1648 = vpack.c.b16 %v1012, %v1008
  %v1649 = vpack.c.b16 %v1013, %v1009
  %v1650 = vpack.c.b16 %v1018, %v1014
  %v1651 = vpack.c.b16 %v1019, %v1015
  %v1652 = vpack.c.b16 %v1020, %v1016
  %v1653 = vpack.c.b16 %v1021, %v1017
  %v1654 = vpack.c.b16 %v1026, %v1022
  %v1655 = vpack.c.b16 %v1027, %v1023
  %v1656 = vpack.c.b16 %v1028, %v1024
  %v1657 = vpack.c.b16 %v1029, %v1025
  %v1658 = vpack.c.b16 %v1034, %v1030
  %v1659 = vpack.c.b16 %v1035, %v1031
  %v1660 = vpack.c.b16 %v1036, %v1032
  %v1661 = vpack.c.b16 %v1037, %v1033
  %v1662 = vpack.c.b16 %v1042, %v1038
  %v1663 = vpack.c.b16 %v1043, %v1039
  %v1664 = vpack.c.b16 %v1044, %v1040
  %v1665 = vpack.c.b16 %v1045, %v1041
  %v1666 = vpack.c.b16 %v1050, %v1046
  %v1667 = vpack.c.b16 %v1051, %v1047
  %v1668 = vpack.c.b16 %v1052, %v1048
  %v1669 = vpack.c.b16 %v1053, %v1049
  %v1670 = vpack.c.b16 %v1058, %v1054
  %v1671 = vpack.c.b16 %v1059, %v1055
  %v1672 = vpack.c.b16 %v1060, %v1056
  %v1673 = vpack.c.b16 %v1061, %v1057
  %v1674 = vpack.c.b16 %v1066, %v1062
  %v1675 = vpack.c.b16 %v1067, %v1063
  %v1676 = vpack.c.b16 %v1068, %v1064
  %v1677 = vpack.c.b16 %v1069, %v1065
  %v1678 = vpack.c.b16 %v1074, %v1070
  %v1679 = vpack.c.b16 %v1075, %v1071
  %v1680 = vpack.c.b16 %v1076, %v1072
  %v1681 = vpack.c.b16 %v1077, %v1073
  %v1682 = vpack.c.b16 %v1082, %v1078
  %v1683 = vpack.c.b16 %v1083, %v1079
  %v1684 = vpack.c.b16 %v1084, %v1080
  %v1685 = vpack.c.b16 %v1085, %v1081
  %v1686 = vpack.c.b16 %v1090, %v1086
  %v1687 = vpack.c.b16 %v1091, %v1087
  %v1688 = vpack.c.b16 %v1092, %v1088
  %v1689 = vpack.c.b16 %v1093, %v1089
  %v1690 = vpack.c.b16 %v1098, %v1094
  %v1691 = vpack.c.b16 %v1099, %v1095
  %v1692 = vpack.c.b16 %v1100, %v1096
  %v1693 = vpack.c.b16 %v1101, %v1097
  %v1694 = vpack.c.b16 %v1106, %v1102
  %v1695 = vpack.c.b16 %v1107, %v1103
  %v1696 = vpack.c.b16 %v1108, %v1104
  %v1697 = vpack.c.b16 %v1109, %v1105
  %v1698 = vpack.c.b16 %v1114, %v1110
  %v1699 = vpack.c.b16 %v1115, %v1111
  %v1700 = vpack.c.b16 %v1116, %v1112
  %v1701 = vpack.c.b16 %v1117, %v1113
  %v1702 = vpack.c.b16 %v1122, %v1118
  %v1703 = vpack.c.b16 %v1123, %v1119
  %v1704 = vpack.c.b16 %v1124, %v1120
  %v1705 = vpack.c.b16 %v1125, %v1121
  %v1706 = vpack.c.b16 %v1130, %v1126
  %v1707 = vpack.c.b16 %v1131, %v1127
  %v1708 = vpack.c.b16 %v1132, %v1128
  %v1709 = vpack.c.b16 %v1133, %v1129
  %v1710 = vpack.c.b16 %v1138, %v1134
  %v1711 = vpack.c.b16 %v1139, %v1135
  %v1712 = vpack.c.b16 %v1140, %v1136
  %v1713 = vpack.c.b16 %v1141, %v1137
  %v1714 = vpack.c.b16 %v1146, %v1142
  %v1715 = vpack.c.b16 %v1147, %v1143
  %v1716 = vpack.c.b16 %v1148, %v1144
  %v1717 = vpack.c.b16 %v1149, %v1145
  %v1718 = vpack.c.b16 %v1154, %v1150
  %v1719 = vpack.c.b16 %v1155, %v1151
  %v1720 = vpack.c.b16 %v1156, %v1152
  %v1721 = vpack.c.b16 %v1157, %v1153
  %v1722 = vpack.c.b16 %v1162, %v1158
  %v1723 = vpack.c.b16 %v1163, %v1159
  %v1724 = vpack.c.b16 %v1164, %v1160
  %v1725 = vpack.c.b16 %v1165, %v1161
  %v1726 = vpack.c.b16 %v1170, %v1166
  %v1727 = vpack.c.b16 %v1171, %v1167
  %v1728 = vpack.c.b16 %v1172, %v1168
  %v1729 = vpack.c.b16 %v1173, %v1169
  %v1730 = vpack.c.b16 %v1178, %v1174
  %v1731 = vpack.c.b16 %v1179, %v1175
  %v1732 = vpack.c.b16 %v1180, %v1176
  %v1733 = vpack.c.b16 %v1181, %v1177
  %v1734 = vpack.c.b16 %v1186, %v1182
  %v1735 = vpack.c.b16 %v1187, %v1183
  %v1736 = vpack.c.b16 %v1188, %v1184
  %v1737 = vpack.c.b16 %v1189, %v1185
  %v1738 = vpack.c.b16 %v1194, %v1190
  %v1739 = vpack.c.b16 %v1195, %v1191
  %v1740 = vpack.c.b16 %v1196, %v1192
  %v1741 = vpack.c.b16 %v1197, %v1193
  %v1742 = vpack.c.b16 %v1202, %v1198
  %v1743 = vpack.c.b16 %v1203, %v1199
  %v1744 = vpack.c.b16 %v1204, %v1200
  %v1745 = vpack.c.b16 %v1205, %v1201
  %v1746 = vpack.c.b16 %v1210, %v1206
  %v1747 = vpack.c.b16 %v1211, %v1207
  %v1748 = vpack.c.b16 %v1212, %v1208
  %v1749 = vpack.c.b16 %v1213, %v1209
  %v1750 = vpack.c.b16 %v1218, %v1214
  %v1751 = vpack.c.b16 %v1219, %v1215
  %v1752 = vpack.c.b16 %v1220, %v1216
  %v1753 = vpack.c.b16 %v1221, %v1217
  %v1754 = vpack.c.b16 %v1226, %v1222
  %v1755 = vpack.c.b16 %v1227, %v1223
  %v1756 = vpack.c.b16 %v1228, %v1224
  %v1757 = vpack.c.b16 %v1229, %v1225
  %v1758 = vpack.c.b16 %v1234, %v1230
  %v1759 = vpack.c.b16 %v1235, %v1231
  %v1760 = vpack.c.b16 %v1236, %v1232
  %v1761 = vpack.c.b16 %v1237, %v1233
  %v1762 = vpack.c.b16 %v1242, %v1238
  %v1763 = vpack.c.b16 %v1243, %v1239
  %v1764 = vpack.c.b16 %v1244, %v1240
  %v1765 = vpack.c.b16 %v1245, %v1241
  %v1766 = vpack.c.b16 %v1250, %v1246
  %v1767 = vpack.c.b16 %v1251, %v1247
  %v1768 = vpack.c.b16 %v1252, %v1248
  %v1769 = vpack.c.b16 %v1253, %v1249
  %v1770 = vpack.c.b16 %v1258, %v1254
  %v1771 = vpack.c.b16 %v1259, %v1255
  %v1772 = vpack.c.b16 %v1260, %v1256
  %v1773 = vpack.c.b16 %v1261, %v1257
  %v1774 = vpack.c.b16 %v1266, %v1262
  %v1775 = vpack.c.b16 %v1267, %v1263
  %v1776 = vpack.c.b16 %v1268, %v1264
  %v1777 = vpack.c.b16 %v1269, %v1265
  %v1778 = vpack.c.b16 %v1274, %v1270
  %v1779 = vpack.c.b16 %v1275, %v1271
  %v1780 = vpack.c.b16 %v1276, %v1272
  %v1781 = vpack.c.b16 %v1277, %v1273
  %v1782 = vpack.c.b16 %v1282, %v1278
  %v1783 = vpack.c.b16 %v1283, %v1279
  %v1784 = vpack.c.b16 %v1284, %v1280
  %v1785 = vpack.c.b16 %v1285, %v1281
  %v1786 = vpack.c.b16 %v1290, %v1286
  %v1787 = vpack.c.b16 %v1291, %v1287
  %v1788 = vpack.c.b16 %v1292, %v1288
  %v1789 = vpack.c.b16 %v1293, %v1289
  %v1790 = vpack.c.b16 %v1298, %v1294
  %v1791 = vpack.c.b16 %v1299, %v1295
  %v1792 = vpack.c.b16 %v1300, %v1296
  %v1793 = vpack.c.b16 %v1301, %v1297
  %v1794 = vpack.c.b16 %v1306, %v1302
  %v1795 = vpack.c.b16 %v1307, %v1303
  %v1796 = vpack.c.b16 %v1308, %v1304
  %v1797 = vpack.c.b16 %v1309, %v1305
  %v1798 = vpack.c.b16 %v1314, %v1310
  %v1799 = vpack.c.b16 %v1315, %v1311
  %v1800 = vpack.c.b16 %v1316, %v1312
  %v1801 = vpack.c.b16 %v1317, %v1313
  %v1802 = vpack.c.b16 %v1322, %v1318
  %v1803 = vpack.c.b16 %v1323, %v1319
  %v1804 = vpack.c.b16 %v1324, %v1320
  %v1805 = vpack.c.b16 %v1325, %v1321
  %v1806 = vpack.c.b16 %v1330, %v1326
  %v1807 = vpack.c.b16 %v1331, %v1327
  %v1808 = vpack.c.b16 %v1332, %v1328
  %v1809 = vpack.c.b16 %v1333, %v1329
  %v1810 = vpack.c.b16 %v1338, %v1334
  %v1811 = vpack.c.b16 %v1339, %v1335
  %v1812 = vpack.c.b16 %v1340, %v1336
  %v1813 = vpack.c.b16 %v1341, %v1337
  %v1814 = vpack.c.b16 %v1346, %v1342
  %v1815 = vpack.c.b16 %v1347, %v1343
  %v1816 = vpack.c.b16 %v1348, %v1344
  %v1817 = vpack.c.b16 %v1349, %v1345
  %v1818 = vpack.c.b16 %v1354, %v1350
  %v1819 = vpack.c.b16 %v1355, %v1351
  %v1820 = vpack.c.b16 %v1356, %v1352
  %v1821 = vpack.c.b16 %v1357, %v1353
  %v1822 = vpack.c.b16 %v1362, %v1358
  %v1823 = vpack.c.b16 %v1363, %v1359
  %v1824 = vpack.c.b16 %v1364, %v1360
  %v1825 = vpack.c.b16 %v1365, %v1361
  %v1826 = vpack.c.b16 %v1370, %v1366
  %v1827 = vpack.c.b16 %v1371, %v1367
  %v1828 = vpack.c.b16 %v1372, %v1368
  %v1829 = vpack.c.b16 %v1373, %v1369
  %v1830 = vpack.c.b16 %v1378, %v1374
  %v1831 = vpack.c.b16 %v1379, %v1375
  %v1832 = vpack.c.b16 %v1380, %v1376
  %v1833 = vpack.c.b16 %v1381, %v1377
  %v1834 = vpack.c.b16 %v1386, %v1382
  %v1835 = vpack.c.b16 %v1387, %v1383
  %v1836 = vpack.c.b16 %v1388, %v1384
  %v1837 = vpack.c.b16 %v1389, %v1385
  %v1838 = vpack.c.b16 %v1394, %v1390
  %v1839 = vpack.c.b16 %v1395, %v1391
  %v1840 = vpack.c.b16 %v1396, %v1392
  %v1841 = vpack.c.b16 %v1397, %v1393
  %v1842 = vpack.c.b16 %v1402, %v1398
  %v1843 = vpack.c.b16 %v1403, %v1399
  %v1844 = vpack.c.b16 %v1404, %v1400
  %v1845 = vpack.c.b16 %v1405, %v1401
  %v1846 = vpack.c.b16 %v1410, %v1406
  %v1847 = vpack.c.b16 %v1411, %v1407
  %v1848 = vpack.c.b16 %v1412, %v1408
  %v1849 = vpack.c.b16 %v1413, %v1409
  %v1850 = vpack.c.b16 %v1418, %v1414
  %v1851 = vpack.c.b16 %v1419, %v1415
  %v1852 = vpack.c.b16 %v1420, %v1416
  %v1853 = vpack.c.b16 %v1421, %v1417
  %v1854 = vpack.c.b16 %v1426, %v1422
  %v1855 = vpack.c.b16 %v1427, %v1423
  %v1856 = vpack.c.b16 %v1428, %v1424
  %v1857 = vpack.c.b16 %v1429, %v1425
  %v1858 = vpack.c.b16 %v1434, %v1430
  %v1859 = vpack.c.b16 %v1435, %v1431
  %v1860 = vpack.c.b16 %v1436, %v1432
  %v1861 = vpack.c.b16 %v1437, %v1433
  %v1862 = vpack.c.b16 %v1442, %v1438
  %v1863 = vpack.c.b16 %v1443, %v1439
  %v1864 = vpack.c.b16 %v1444, %v1440
  %v1865 = vpack.c.b16 %v1445, %v1441
  %v1866 = vpack.c.b16 %v1450, %v1446
  %v1867 = vpack.c.b16 %v1451, %v1447
  %v1868 = vpack.c.b16 %v1452, %v1448
  %v1869 = vpack.c.b16 %v1453, %v1449
  %v1870 = vpack.c.b16 %v1458, %v1454
  %v1871 = vpack.c.b16 %v1459, %v1455
  %v1872 = vpack.c.b16 %v1460, %v1456
  %v1873 = vpack.c.b16 %v1461, %v1457
  %v1874 = vpack.c.b16 %v1466, %v1462
  %v1875 = vpack.c.b16 %v1467, %v1463
  %v1876 = vpack.c.b16 %v1468, %v1464
  %v1877 = vpack.c.b16 %v1469, %v1465
  %v1878 = vpack.c.b16 %v1474, %v1470
  %v1879 = vpack.c.b16 %v1475, %v1471
  %v1880 = vpack.c.b16 %v1476, %v1472
  %v1881 = vpack.c.b16 %v1477, %v1473
  %v1882 = vpack.c.b16 %v1482, %v1478
  %v1883 = vpack.c.b16 %v1483, %v1479
  %v1884 = vpack.c.b16 %v1484, %v1480
  %v1885 = vpack.c.b16 %v1485, %v1481
  %v1886 = vpack.c.b16 %v1490, %v1486
  %v1887 = vpack.c.b16 %v1491, %v1487
  %v1888 = vpack.c.b16 %v1492, %v1488
  %v1889 = vpack.c.b16 %v1493, %v1489
  %v1890 = vpack.c.b16 %v1498, %v1494
  %v1891 = vpack.c.b16 %v1499, %v1495
  %v1892 = vpack.c.b16 %v1500, %v1496
  %v1893 = vpack.c.b16 %v1501, %v1497
  %v1894 = vpack.c.b16 %v1506, %v1502
  %v1895 = vpack.c.b16 %v1507, %v1503
  %v1896 = vpack.c.b16 %v1508, %v1504
  %v1897 = vpack.c.b16 %v1509, %v1505
  %v1898 = vpack.c.b16 %v1514, %v1510
  %v1899 = vpack.c.b16 %v1515, %v1511
  %v1900 = vpack.c.b16 %v1516, %v1512
  %v1901 = vpack.c.b16 %v1517, %v1513
  %v1902 = vpack.c.b16 %v1522, %v1518
  %v1903 = vpack.c.b16 %v1523, %v1519
  %v1904 = vpack.c.b16 %v1524, %v1520
  %v1905 = vpack.c.b16 %v1525, %v1521
  %v1906 = vpack.c.b16 %v1530, %v1526
  %v1907 = vpack.c.b16 %v1531, %v1527
  %v1908 = vpack.c.b16 %v1532, %v1528
  %v1909 = vpack.c.b16 %v1533, %v1529
  %v1910 = vpack.c.b16 %v1538, %v1534
  %v1911 = vpack.c.b16 %v1539, %v1535
  %v1912 = vpack.c.b16 %v1540, %v1536
  %v1913 = vpack.c.b16 %v1541, %v1537
  %v1914 = vpack.c.b16 %v1546, %v1542
  %v1915 = vpack.c.b16 %v1547, %v1543
  %v1916 = vpack.c.b16 %v1548, %v1544
  %v1917 = vpack.c.b16 %v1549, %v1545
  %v1918 = vpack.c.b16 %v1554, %v1550
  %v1919 = vpack.c.b16 %v1555, %v1551
  %v1920 = vpack.c.b16 %v1556, %v1552
  %v1921 = vpack.c.b16 %v1557, %v1553
  %v1922 = vpack.c.b16 %v1562, %v1558
  %v1923 = vpack.c.b16 %v1563, %v1559
  %v1924 = vpack.c.b16 %v1564, %v1560
  %v1925 = vpack.c.b16 %v1565, %v1561
  %vm2282 = vcmask 211968
  %v2284 = vsel %vm2282, %v474, 0
  %vm2286 = vcmask 1044480
  %v2288 = vsel %vm2286, %v1922, 0
  %v2291 = vsel %vm2286, %v1923, 0
  %v2294 = vsel %vm2286, %v1924, 0
  %v2297 = vsel %vm2286, %v1925, 0
  %2299 = vmatprep.subr.bf16.mxu0 %v1595
  %2300 = vmatpush1.bf16.msra.mxu0 %v1594
  %2301 = vmatprep.subr.bf16.mxu0 %v1591
  %2302 = vmatpush1.bf16.msra.mxu0 %v1590
  %2303 = vmatprep.subr.bf16.mxu0 %v1587
  %2304 = vmatpush1.bf16.msra.mxu0 %v1586
  %2305 = vmatprep.subr.bf16.mxu0 %v1583
  %2306 = vmatpush1.bf16.msra.mxu0 %v1582
  %2307 = vmatprep.subr.bf16.mxu0 %v1579
  %2308 = vmatpush1.bf16.msra.mxu0 %v1578
  %2309 = vmatprep.subr.bf16.mxu0 %v1575
  %2310 = vmatpush1.bf16.msra.mxu0 %v1574
  %2311 = vmatprep.subr.bf16.mxu0 %v1571
  %2312 = vmatpush1.bf16.msra.mxu0 %v1570
  %2313 = vmatprep.subr.bf16.mxu0 %v1567
  %2314 = vmatpush1.bf16.msra.mxu0 %v1566
  %2315 = vmatprep.subr.bf16.mxu0 %v1627
  %2316 = vmatpush2.bf16.msra.mxu0 %v1626
  %2317 = vmatprep.subr.bf16.mxu0 %v1623
  %2318 = vmatpush2.bf16.msra.mxu0 %v1622
  %2319 = vmatprep.subr.bf16.mxu0 %v1619
  %2320 = vmatpush2.bf16.msra.mxu0 %v1618
  %2321 = vmatprep.subr.bf16.mxu0 %v1615
  %2322 = vmatpush2.bf16.msra.mxu0 %v1614
  %2323 = vmatprep.subr.bf16.mxu0 %v1611
  %2324 = vmatpush2.bf16.msra.mxu0 %v1610
  %2325 = vmatprep.subr.bf16.mxu0 %v1607
  %2326 = vmatpush2.bf16.msra.mxu0 %v1606
  %2327 = vmatprep.subr.bf16.mxu0 %v1603
  %2328 = vmatpush2.bf16.msra.mxu0 %v1602
  %2329 = vmatprep.subr.bf16.mxu0 %v1599
  %2330 = vmatpush2.bf16.msra.mxu0 %v1598
  %2331 = vmatprep.mubr.bf16.mxu0 %v464
  %2332 = vmatmul.mubr.bf16.gmra.mxu0 %v463
  %v2333 = vpop.f32.mrf.mxu0
  %v2334 = vadd.f32 %v428, %v2333
  %v2335 = vpop.f32.mrf.mxu0
  %v2336 = vadd.f32 %v432, %v2335
  %v2337 = vpop.f32.mrf.mxu0
  %v2338 = vpop.f32.mrf.mxu0
  %2339 = vdwg.mxu0
  %2340 = vmatprep.subr.bf16.mxu0 %v1659
  %2341 = vmatpush1.bf16.msra.mxu0 %v1658
  %2342 = vmatprep.subr.bf16.mxu0 %v1655
  %2343 = vmatpush1.bf16.msra.mxu0 %v1654
  %2344 = vmatprep.subr.bf16.mxu0 %v1651
  %2345 = vmatpush1.bf16.msra.mxu0 %v1650
  %2346 = vmatprep.subr.bf16.mxu0 %v1647
  %2347 = vmatpush1.bf16.msra.mxu0 %v1646
  %2348 = vmatprep.subr.bf16.mxu0 %v1643
  %2349 = vmatpush1.bf16.msra.mxu0 %v1642
  %2350 = vmatprep.subr.bf16.mxu0 %v1639
  %2351 = vmatpush1.bf16.msra.mxu0 %v1638
  %2352 = vmatprep.subr.bf16.mxu0 %v1635
  %2353 = vmatpush1.bf16.msra.mxu0 %v1634
  %2354 = vmatprep.subr.bf16.mxu0 %v1631
  %2355 = vmatpush1.bf16.msra.mxu0 %v1630
  %2356 = vmatprep.subr.bf16.mxu0 %v1691
  %2357 = vmatpush2.bf16.msra.mxu0 %v1690
  %2358 = vmatprep.subr.bf16.mxu0 %v1687
  %2359 = vmatpush2.bf16.msra.mxu0 %v1686
  %2360 = vmatprep.subr.bf16.mxu0 %v1683
  %2361 = vmatpush2.bf16.msra.mxu0 %v1682
  %2362 = vmatprep.subr.bf16.mxu0 %v1679
  %2363 = vmatpush2.bf16.msra.mxu0 %v1678
  %2364 = vmatprep.subr.bf16.mxu0 %v1675
  %2365 = vmatpush2.bf16.msra.mxu0 %v1674
  %2366 = vmatprep.subr.bf16.mxu0 %v1671
  %2367 = vmatpush2.bf16.msra.mxu0 %v1670
  %2368 = vmatprep.subr.bf16.mxu0 %v1667
  %2369 = vmatpush2.bf16.msra.mxu0 %v1666
  %2370 = vmatprep.subr.bf16.mxu0 %v1663
  %2371 = vmatpush2.bf16.msra.mxu0 %v1662
  %2372 = vmatprep.mubr.bf16.mxu0 %v466
  %2373 = vmatmul.mubr.bf16.gmra.mxu0 %v465
  %v2374 = vpop.f32.mrf.mxu0
  %v2375 = vadd.f32 %v2334, %v2374
  %v2376 = vpop.f32.mrf.mxu0
  %v2377 = vadd.f32 %v2336, %v2376
  %v2378 = vpop.f32.mrf.mxu0
  %v2379 = vpop.f32.mrf.mxu0
  %2380 = vdwg.mxu0
  %2381 = vmatprep.subr.bf16.mxu0 %v1723
  %2382 = vmatpush1.bf16.msra.mxu0 %v1722
  %2383 = vmatprep.subr.bf16.mxu0 %v1719
  %2384 = vmatpush1.bf16.msra.mxu0 %v1718
  %2385 = vmatprep.subr.bf16.mxu0 %v1715
  %2386 = vmatpush1.bf16.msra.mxu0 %v1714
  %2387 = vmatprep.subr.bf16.mxu0 %v1711
  %2388 = vmatpush1.bf16.msra.mxu0 %v1710
  %2389 = vmatprep.subr.bf16.mxu0 %v1707
  %2390 = vmatpush1.bf16.msra.mxu0 %v1706
  %2391 = vmatprep.subr.bf16.mxu0 %v1703
  %2392 = vmatpush1.bf16.msra.mxu0 %v1702
  %2393 = vmatprep.subr.bf16.mxu0 %v1699
  %2394 = vmatpush1.bf16.msra.mxu0 %v1698
  %2395 = vmatprep.subr.bf16.mxu0 %v1695
  %2396 = vmatpush1.bf16.msra.mxu0 %v1694
  %2397 = vmatprep.subr.bf16.mxu0 %v1755
  %2398 = vmatpush2.bf16.msra.mxu0 %v1754
  %2399 = vmatprep.subr.bf16.mxu0 %v1751
  %2400 = vmatpush2.bf16.msra.mxu0 %v1750
  %2401 = vmatprep.subr.bf16.mxu0 %v1747
  %2402 = vmatpush2.bf16.msra.mxu0 %v1746
  %2403 = vmatprep.subr.bf16.mxu0 %v1743
  %2404 = vmatpush2.bf16.msra.mxu0 %v1742
  %2405 = vmatprep.subr.bf16.mxu0 %v1739
  %2406 = vmatpush2.bf16.msra.mxu0 %v1738
  %2407 = vmatprep.subr.bf16.mxu0 %v1735
  %2408 = vmatpush2.bf16.msra.mxu0 %v1734
  %2409 = vmatprep.subr.bf16.mxu0 %v1731
  %2410 = vmatpush2.bf16.msra.mxu0 %v1730
  %2411 = vmatprep.subr.bf16.mxu0 %v1727
  %2412 = vmatpush2.bf16.msra.mxu0 %v1726
  %2413 = vmatprep.mubr.bf16.mxu0 %v468
  %2414 = vmatmul.mubr.bf16.gmra.mxu0 %v467
  %v2415 = vpop.f32.mrf.mxu0
  %v2416 = vadd.f32 %v2375, %v2415
  %v2417 = vpop.f32.mrf.mxu0
  %v2418 = vadd.f32 %v2377, %v2417
  %v2419 = vpop.f32.mrf.mxu0
  %v2420 = vpop.f32.mrf.mxu0
  %2421 = vdwg.mxu0
  %2422 = vmatprep.subr.bf16.mxu0 %v1787
  %2423 = vmatpush1.bf16.msra.mxu0 %v1786
  %2424 = vmatprep.subr.bf16.mxu0 %v1783
  %2425 = vmatpush1.bf16.msra.mxu0 %v1782
  %2426 = vmatprep.subr.bf16.mxu0 %v1779
  %2427 = vmatpush1.bf16.msra.mxu0 %v1778
  %2428 = vmatprep.subr.bf16.mxu0 %v1775
  %2429 = vmatpush1.bf16.msra.mxu0 %v1774
  %2430 = vmatprep.subr.bf16.mxu0 %v1771
  %2431 = vmatpush1.bf16.msra.mxu0 %v1770
  %2432 = vmatprep.subr.bf16.mxu0 %v1767
  %2433 = vmatpush1.bf16.msra.mxu0 %v1766
  %2434 = vmatprep.subr.bf16.mxu0 %v1763
  %2435 = vmatpush1.bf16.msra.mxu0 %v1762
  %2436 = vmatprep.subr.bf16.mxu0 %v1759
  %2437 = vmatpush1.bf16.msra.mxu0 %v1758
  %2438 = vmatprep.subr.bf16.mxu0 %v1819
  %2439 = vmatpush2.bf16.msra.mxu0 %v1818
  %2440 = vmatprep.subr.bf16.mxu0 %v1815
  %2441 = vmatpush2.bf16.msra.mxu0 %v1814
  %2442 = vmatprep.subr.bf16.mxu0 %v1811
  %2443 = vmatpush2.bf16.msra.mxu0 %v1810
  %2444 = vmatprep.subr.bf16.mxu0 %v1807
  %2445 = vmatpush2.bf16.msra.mxu0 %v1806
  %2446 = vmatprep.subr.bf16.mxu0 %v1803
  %2447 = vmatpush2.bf16.msra.mxu0 %v1802
  %2448 = vmatprep.subr.bf16.mxu0 %v1799
  %2449 = vmatpush2.bf16.msra.mxu0 %v1798
  %2450 = vmatprep.subr.bf16.mxu0 %v1795
  %2451 = vmatpush2.bf16.msra.mxu0 %v1794
  %2452 = vmatprep.subr.bf16.mxu0 %v1791
  %2453 = vmatpush2.bf16.msra.mxu0 %v1790
  %2454 = vmatprep.mubr.bf16.mxu0 %v470
  %2455 = vmatmul.mubr.bf16.gmra.mxu0 %v469
  %v2456 = vpop.f32.mrf.mxu0
  %v2457 = vadd.f32 %v2416, %v2456
  %v2458 = vpop.f32.mrf.mxu0
  %v2459 = vadd.f32 %v2418, %v2458
  %v2460 = vpop.f32.mrf.mxu0
  %v2461 = vpop.f32.mrf.mxu0
  %2462 = vdwg.mxu0
  %2463 = vmatprep.subr.bf16.mxu0 %v1851
  %2464 = vmatpush1.bf16.msra.mxu0 %v1850
  %2465 = vmatprep.subr.bf16.mxu0 %v1847
  %2466 = vmatpush1.bf16.msra.mxu0 %v1846
  %2467 = vmatprep.subr.bf16.mxu0 %v1843
  %2468 = vmatpush1.bf16.msra.mxu0 %v1842
  %2469 = vmatprep.subr.bf16.mxu0 %v1839
  %2470 = vmatpush1.bf16.msra.mxu0 %v1838
  %2471 = vmatprep.subr.bf16.mxu0 %v1835
  %2472 = vmatpush1.bf16.msra.mxu0 %v1834
  %2473 = vmatprep.subr.bf16.mxu0 %v1831
  %2474 = vmatpush1.bf16.msra.mxu0 %v1830
  %2475 = vmatprep.subr.bf16.mxu0 %v1827
  %2476 = vmatpush1.bf16.msra.mxu0 %v1826
  %2477 = vmatprep.subr.bf16.mxu0 %v1823
  %2478 = vmatpush1.bf16.msra.mxu0 %v1822
  %2479 = vmatprep.subr.bf16.mxu0 %v1883
  %2480 = vmatpush2.bf16.msra.mxu0 %v1882
  %2481 = vmatprep.subr.bf16.mxu0 %v1879
  %2482 = vmatpush2.bf16.msra.mxu0 %v1878
  %2483 = vmatprep.subr.bf16.mxu0 %v1875
  %2484 = vmatpush2.bf16.msra.mxu0 %v1874
  %2485 = vmatprep.subr.bf16.mxu0 %v1871
  %2486 = vmatpush2.bf16.msra.mxu0 %v1870
  %2487 = vmatprep.subr.bf16.mxu0 %v1867
  %2488 = vmatpush2.bf16.msra.mxu0 %v1866
  %2489 = vmatprep.subr.bf16.mxu0 %v1863
  %2490 = vmatpush2.bf16.msra.mxu0 %v1862
  %2491 = vmatprep.subr.bf16.mxu0 %v1859
  %2492 = vmatpush2.bf16.msra.mxu0 %v1858
  %2493 = vmatprep.subr.bf16.mxu0 %v1855
  %2494 = vmatpush2.bf16.msra.mxu0 %v1854
  %2495 = vmatprep.mubr.bf16.mxu0 %v472
  %2496 = vmatmul.mubr.bf16.gmra.mxu0 %v471
  %v2497 = vpop.f32.mrf.mxu0
  %v2498 = vadd.f32 %v2457, %v2497
  %v2499 = vpop.f32.mrf.mxu0
  %v2500 = vadd.f32 %v2459, %v2499
  %v2501 = vpop.f32.mrf.mxu0
  %v2502 = vpop.f32.mrf.mxu0
  %2503 = vdwg.mxu0
  %2504 = vmatprep.subr.bf16.mxu0 %v1915
  %2505 = vmatpush1.bf16.msra.mxu0 %v1914
  %2506 = vmatprep.subr.bf16.mxu0 %v1911
  %2507 = vmatpush1.bf16.msra.mxu0 %v1910
  %2508 = vmatprep.subr.bf16.mxu0 %v1907
  %2509 = vmatpush1.bf16.msra.mxu0 %v1906
  %2510 = vmatprep.subr.bf16.mxu0 %v1903
  %2511 = vmatpush1.bf16.msra.mxu0 %v1902
  %2512 = vmatprep.subr.bf16.mxu0 %v1899
  %2513 = vmatpush1.bf16.msra.mxu0 %v1898
  %2514 = vmatprep.subr.bf16.mxu0 %v1895
  %2515 = vmatpush1.bf16.msra.mxu0 %v1894
  %2516 = vmatprep.subr.bf16.mxu0 %v1891
  %2517 = vmatpush1.bf16.msra.mxu0 %v1890
  %2518 = vmatprep.subr.bf16.mxu0 %v1887
  %2519 = vmatpush1.bf16.msra.mxu0 %v1886
  %2520 = vmatprep.subr.bf16.mxu0 0
  %2521 = vmatpush2.bf16.msra.mxu0 0
  %2522 = vmatprep.subr.bf16.mxu0 0
  %2523 = vmatpush2.bf16.msra.mxu0 0
  %2524 = vmatprep.subr.bf16.mxu0 0
  %2525 = vmatpush2.bf16.msra.mxu0 0
  %2526 = vmatprep.subr.bf16.mxu0 0
  %2527 = vmatpush2.bf16.msra.mxu0 0
  %2528 = vmatprep.subr.bf16.mxu0 0
  %2529 = vmatpush2.bf16.msra.mxu0 0
  %2530 = vmatprep.subr.bf16.mxu0 0
  %2531 = vmatpush2.bf16.msra.mxu0 0
  %2532 = vmatprep.subr.bf16.mxu0 %v2291
  %2533 = vmatpush2.bf16.msra.mxu0 %v2288
  %2534 = vmatprep.subr.bf16.mxu0 %v1919
  %2535 = vmatpush2.bf16.msra.mxu0 %v1918
  %2536 = vmatprep.mubr.bf16.mxu0 %v2284
  %2537 = vmatmul.mubr.bf16.gmra.mxu0 %v473
  %v2538 = vpop.f32.mrf.mxu0
  %v2539 = vadd.f32 %v2498, %v2538
  %v2540 = vpop.f32.mrf.mxu0
  %v2541 = vadd.f32 %v2500, %v2540
  %v2542 = vpop.f32.mrf.mxu0
  %v2543 = vpop.f32.mrf.mxu0
  %2544 = vdwg.mxu0
  %2545 = vmatprep.subr.bf16.mxu0 %v1597
  %2546 = vmatpush1.bf16.msra.mxu0 %v1596
  %2547 = vmatprep.subr.bf16.mxu0 %v1593
  %2548 = vmatpush1.bf16.msra.mxu0 %v1592
  %2549 = vmatprep.subr.bf16.mxu0 %v1589
  %2550 = vmatpush1.bf16.msra.mxu0 %v1588
  %2551 = vmatprep.subr.bf16.mxu0 %v1585
  %2552 = vmatpush1.bf16.msra.mxu0 %v1584
  %2553 = vmatprep.subr.bf16.mxu0 %v1581
  %2554 = vmatpush1.bf16.msra.mxu0 %v1580
  %2555 = vmatprep.subr.bf16.mxu0 %v1577
  %2556 = vmatpush1.bf16.msra.mxu0 %v1576
  %2557 = vmatprep.subr.bf16.mxu0 %v1573
  %2558 = vmatpush1.bf16.msra.mxu0 %v1572
  %2559 = vmatprep.subr.bf16.mxu0 %v1569
  %2560 = vmatpush1.bf16.msra.mxu0 %v1568
  %2561 = vmatprep.subr.bf16.mxu0 %v1629
  %2562 = vmatpush2.bf16.msra.mxu0 %v1628
  %2563 = vmatprep.subr.bf16.mxu0 %v1625
  %2564 = vmatpush2.bf16.msra.mxu0 %v1624
  %2565 = vmatprep.subr.bf16.mxu0 %v1621
  %2566 = vmatpush2.bf16.msra.mxu0 %v1620
  %2567 = vmatprep.subr.bf16.mxu0 %v1617
  %2568 = vmatpush2.bf16.msra.mxu0 %v1616
  %2569 = vmatprep.subr.bf16.mxu0 %v1613
  %2570 = vmatpush2.bf16.msra.mxu0 %v1612
  %2571 = vmatprep.subr.bf16.mxu0 %v1609
  %2572 = vmatpush2.bf16.msra.mxu0 %v1608
  %2573 = vmatprep.subr.bf16.mxu0 %v1605
  %2574 = vmatpush2.bf16.msra.mxu0 %v1604
  %2575 = vmatprep.subr.bf16.mxu0 %v1601
  %2576 = vmatpush2.bf16.msra.mxu0 %v1600
  %2577 = vmatprep.mubr.bf16.mxu0 %v464
  %2578 = vmatmul.mubr.bf16.gmra.mxu0 %v463
  %v2579 = vpop.f32.mrf.mxu0
  %v2580 = vadd.f32 %v436, %v2579
  %v2581 = vpop.f32.mrf.mxu0
  %v2582 = vadd.f32 %v440, %v2581
  %v2583 = vpop.f32.mrf.mxu0
  %v2584 = vpop.f32.mrf.mxu0
  %2585 = vdwg.mxu0
  %2586 = vmatprep.subr.bf16.mxu0 %v1661
  %2587 = vmatpush1.bf16.msra.mxu0 %v1660
  %2588 = vmatprep.subr.bf16.mxu0 %v1657
  %2589 = vmatpush1.bf16.msra.mxu0 %v1656
  %2590 = vmatprep.subr.bf16.mxu0 %v1653
  %2591 = vmatpush1.bf16.msra.mxu0 %v1652
  %2592 = vmatprep.subr.bf16.mxu0 %v1649
  %2593 = vmatpush1.bf16.msra.mxu0 %v1648
  %2594 = vmatprep.subr.bf16.mxu0 %v1645
  %2595 = vmatpush1.bf16.msra.mxu0 %v1644
  %2596 = vmatprep.subr.bf16.mxu0 %v1641
  %2597 = vmatpush1.bf16.msra.mxu0 %v1640
  %2598 = vmatprep.subr.bf16.mxu0 %v1637
  %2599 = vmatpush1.bf16.msra.mxu0 %v1636
  %2600 = vmatprep.subr.bf16.mxu0 %v1633
  %2601 = vmatpush1.bf16.msra.mxu0 %v1632
  %2602 = vmatprep.subr.bf16.mxu0 %v1693
  %2603 = vmatpush2.bf16.msra.mxu0 %v1692
  %2604 = vmatprep.subr.bf16.mxu0 %v1689
  %2605 = vmatpush2.bf16.msra.mxu0 %v1688
  %2606 = vmatprep.subr.bf16.mxu0 %v1685
  %2607 = vmatpush2.bf16.msra.mxu0 %v1684
  %2608 = vmatprep.subr.bf16.mxu0 %v1681
  %2609 = vmatpush2.bf16.msra.mxu0 %v1680
  %2610 = vmatprep.subr.bf16.mxu0 %v1677
  %2611 = vmatpush2.bf16.msra.mxu0 %v1676
  %2612 = vmatprep.subr.bf16.mxu0 %v1673
  %2613 = vmatpush2.bf16.msra.mxu0 %v1672
  %2614 = vmatprep.subr.bf16.mxu0 %v1669
  %2615 = vmatpush2.bf16.msra.mxu0 %v1668
  %2616 = vmatprep.subr.bf16.mxu0 %v1665
  %2617 = vmatpush2.bf16.msra.mxu0 %v1664
  %2618 = vmatprep.mubr.bf16.mxu0 %v466
  %2619 = vmatmul.mubr.bf16.gmra.mxu0 %v465
  %v2620 = vpop.f32.mrf.mxu0
  %v2621 = vadd.f32 %v2580, %v2620
  %v2622 = vpop.f32.mrf.mxu0
  %v2623 = vadd.f32 %v2582, %v2622
  %v2624 = vpop.f32.mrf.mxu0
  %v2625 = vpop.f32.mrf.mxu0
  %2626 = vdwg.mxu0
  %2627 = vmatprep.subr.bf16.mxu0 %v1725
  %2628 = vmatpush1.bf16.msra.mxu0 %v1724
  %2629 = vmatprep.subr.bf16.mxu0 %v1721
  %2630 = vmatpush1.bf16.msra.mxu0 %v1720
  %2631 = vmatprep.subr.bf16.mxu0 %v1717
  %2632 = vmatpush1.bf16.msra.mxu0 %v1716
  %2633 = vmatprep.subr.bf16.mxu0 %v1713
  %2634 = vmatpush1.bf16.msra.mxu0 %v1712
  %2635 = vmatprep.subr.bf16.mxu0 %v1709
  %2636 = vmatpush1.bf16.msra.mxu0 %v1708
  %2637 = vmatprep.subr.bf16.mxu0 %v1705
  %2638 = vmatpush1.bf16.msra.mxu0 %v1704
  %2639 = vmatprep.subr.bf16.mxu0 %v1701
  %2640 = vmatpush1.bf16.msra.mxu0 %v1700
  %2641 = vmatprep.subr.bf16.mxu0 %v1697
  %2642 = vmatpush1.bf16.msra.mxu0 %v1696
  %2643 = vmatprep.subr.bf16.mxu0 %v1757
  %2644 = vmatpush2.bf16.msra.mxu0 %v1756
  %2645 = vmatprep.subr.bf16.mxu0 %v1753
  %2646 = vmatpush2.bf16.msra.mxu0 %v1752
  %2647 = vmatprep.subr.bf16.mxu0 %v1749
  %2648 = vmatpush2.bf16.msra.mxu0 %v1748
  %2649 = vmatprep.subr.bf16.mxu0 %v1745
  %2650 = vmatpush2.bf16.msra.mxu0 %v1744
  %2651 = vmatprep.subr.bf16.mxu0 %v1741
  %2652 = vmatpush2.bf16.msra.mxu0 %v1740
  %2653 = vmatprep.subr.bf16.mxu0 %v1737
  %2654 = vmatpush2.bf16.msra.mxu0 %v1736
  %2655 = vmatprep.subr.bf16.mxu0 %v1733
  %2656 = vmatpush2.bf16.msra.mxu0 %v1732
  %2657 = vmatprep.subr.bf16.mxu0 %v1729
  %2658 = vmatpush2.bf16.msra.mxu0 %v1728
  %2659 = vmatprep.mubr.bf16.mxu0 %v468
  %2660 = vmatmul.mubr.bf16.gmra.mxu0 %v467
  %v2661 = vpop.f32.mrf.mxu0
  %v2662 = vadd.f32 %v2621, %v2661
  %v2663 = vpop.f32.mrf.mxu0
  %v2664 = vadd.f32 %v2623, %v2663
  %v2665 = vpop.f32.mrf.mxu0
  %v2666 = vpop.f32.mrf.mxu0
  %2667 = vdwg.mxu0
  %2668 = vmatprep.subr.bf16.mxu0 %v1789
  %2669 = vmatpush1.bf16.msra.mxu0 %v1788
  %2670 = vmatprep.subr.bf16.mxu0 %v1785
  %2671 = vmatpush1.bf16.msra.mxu0 %v1784
  %2672 = vmatprep.subr.bf16.mxu0 %v1781
  %2673 = vmatpush1.bf16.msra.mxu0 %v1780
  %2674 = vmatprep.subr.bf16.mxu0 %v1777
  %2675 = vmatpush1.bf16.msra.mxu0 %v1776
  %2676 = vmatprep.subr.bf16.mxu0 %v1773
  %2677 = vmatpush1.bf16.msra.mxu0 %v1772
  %2678 = vmatprep.subr.bf16.mxu0 %v1769
  %2679 = vmatpush1.bf16.msra.mxu0 %v1768
  %2680 = vmatprep.subr.bf16.mxu0 %v1765
  %2681 = vmatpush1.bf16.msra.mxu0 %v1764
  %2682 = vmatprep.subr.bf16.mxu0 %v1761
  %2683 = vmatpush1.bf16.msra.mxu0 %v1760
  %2684 = vmatprep.subr.bf16.mxu0 %v1821
  %2685 = vmatpush2.bf16.msra.mxu0 %v1820
  %2686 = vmatprep.subr.bf16.mxu0 %v1817
  %2687 = vmatpush2.bf16.msra.mxu0 %v1816
  %2688 = vmatprep.subr.bf16.mxu0 %v1813
  %2689 = vmatpush2.bf16.msra.mxu0 %v1812
  %2690 = vmatprep.subr.bf16.mxu0 %v1809
  %2691 = vmatpush2.bf16.msra.mxu0 %v1808
  %2692 = vmatprep.subr.bf16.mxu0 %v1805
  %2693 = vmatpush2.bf16.msra.mxu0 %v1804
  %2694 = vmatprep.subr.bf16.mxu0 %v1801
  %2695 = vmatpush2.bf16.msra.mxu0 %v1800
  %2696 = vmatprep.subr.bf16.mxu0 %v1797
  %2697 = vmatpush2.bf16.msra.mxu0 %v1796
  %2698 = vmatprep.subr.bf16.mxu0 %v1793
  %2699 = vmatpush2.bf16.msra.mxu0 %v1792
  %2700 = vmatprep.mubr.bf16.mxu0 %v470
  %2701 = vmatmul.mubr.bf16.gmra.mxu0 %v469
  %v2702 = vpop.f32.mrf.mxu0
  %v2703 = vadd.f32 %v2662, %v2702
  %v2704 = vpop.f32.mrf.mxu0
  %v2705 = vadd.f32 %v2664, %v2704
  %v2706 = vpop.f32.mrf.mxu0
  %v2707 = vpop.f32.mrf.mxu0
  %2708 = vdwg.mxu0
  %2709 = vmatprep.subr.bf16.mxu0 %v1853
  %2710 = vmatpush1.bf16.msra.mxu0 %v1852
  %2711 = vmatprep.subr.bf16.mxu0 %v1849
  %2712 = vmatpush1.bf16.msra.mxu0 %v1848
  %2713 = vmatprep.subr.bf16.mxu0 %v1845
  %2714 = vmatpush1.bf16.msra.mxu0 %v1844
  %2715 = vmatprep.subr.bf16.mxu0 %v1841
  %2716 = vmatpush1.bf16.msra.mxu0 %v1840
  %2717 = vmatprep.subr.bf16.mxu0 %v1837
  %2718 = vmatpush1.bf16.msra.mxu0 %v1836
  %2719 = vmatprep.subr.bf16.mxu0 %v1833
  %2720 = vmatpush1.bf16.msra.mxu0 %v1832
  %2721 = vmatprep.subr.bf16.mxu0 %v1829
  %2722 = vmatpush1.bf16.msra.mxu0 %v1828
  %2723 = vmatprep.subr.bf16.mxu0 %v1825
  %2724 = vmatpush1.bf16.msra.mxu0 %v1824
  %2725 = vmatprep.subr.bf16.mxu0 %v1885
  %2726 = vmatpush2.bf16.msra.mxu0 %v1884
  %2727 = vmatprep.subr.bf16.mxu0 %v1881
  %2728 = vmatpush2.bf16.msra.mxu0 %v1880
  %2729 = vmatprep.subr.bf16.mxu0 %v1877
  %2730 = vmatpush2.bf16.msra.mxu0 %v1876
  %2731 = vmatprep.subr.bf16.mxu0 %v1873
  %2732 = vmatpush2.bf16.msra.mxu0 %v1872
  %2733 = vmatprep.subr.bf16.mxu0 %v1869
  %2734 = vmatpush2.bf16.msra.mxu0 %v1868
  %2735 = vmatprep.subr.bf16.mxu0 %v1865
  %2736 = vmatpush2.bf16.msra.mxu0 %v1864
  %2737 = vmatprep.subr.bf16.mxu0 %v1861
  %2738 = vmatpush2.bf16.msra.mxu0 %v1860
  %2739 = vmatprep.subr.bf16.mxu0 %v1857
  %2740 = vmatpush2.bf16.msra.mxu0 %v1856
  %2741 = vmatprep.mubr.bf16.mxu0 %v472
  %2742 = vmatmul.mubr.bf16.gmra.mxu0 %v471
  %v2743 = vpop.f32.mrf.mxu0
  %v2744 = vadd.f32 %v2703, %v2743
  %v2745 = vpop.f32.mrf.mxu0
  %v2746 = vadd.f32 %v2705, %v2745
  %v2747 = vpop.f32.mrf.mxu0
  %v2748 = vpop.f32.mrf.mxu0
  %2749 = vdwg.mxu0
  %2750 = vmatprep.subr.bf16.mxu0 %v1917
  %2751 = vmatpush1.bf16.msra.mxu0 %v1916
  %2752 = vmatprep.subr.bf16.mxu0 %v1913
  %2753 = vmatpush1.bf16.msra.mxu0 %v1912
  %2754 = vmatprep.subr.bf16.mxu0 %v1909
  %2755 = vmatpush1.bf16.msra.mxu0 %v1908
  %2756 = vmatprep.subr.bf16.mxu0 %v1905
  %2757 = vmatpush1.bf16.msra.mxu0 %v1904
  %2758 = vmatprep.subr.bf16.mxu0 %v1901
  %2759 = vmatpush1.bf16.msra.mxu0 %v1900
  %2760 = vmatprep.subr.bf16.mxu0 %v1897
  %2761 = vmatpush1.bf16.msra.mxu0 %v1896
  %2762 = vmatprep.subr.bf16.mxu0 %v1893
  %2763 = vmatpush1.bf16.msra.mxu0 %v1892
  %2764 = vmatprep.subr.bf16.mxu0 %v1889
  %2765 = vmatpush1.bf16.msra.mxu0 %v1888
  %2766 = vmatprep.subr.bf16.mxu0 0
  %2767 = vmatpush2.bf16.msra.mxu0 0
  %2768 = vmatprep.subr.bf16.mxu0 0
  %2769 = vmatpush2.bf16.msra.mxu0 0
  %2770 = vmatprep.subr.bf16.mxu0 0
  %2771 = vmatpush2.bf16.msra.mxu0 0
  %2772 = vmatprep.subr.bf16.mxu0 0
  %2773 = vmatpush2.bf16.msra.mxu0 0
  %2774 = vmatprep.subr.bf16.mxu0 0
  %2775 = vmatpush2.bf16.msra.mxu0 0
  %2776 = vmatprep.subr.bf16.mxu0 0
  %2777 = vmatpush2.bf16.msra.mxu0 0
  %2778 = vmatprep.subr.bf16.mxu0 %v2297
  %2779 = vmatpush2.bf16.msra.mxu0 %v2294
  %2780 = vmatprep.subr.bf16.mxu0 %v1921
  %2781 = vmatpush2.bf16.msra.mxu0 %v1920
  %2782 = vmatprep.mubr.bf16.mxu0 %v2284
  %2783 = vmatmul.mubr.bf16.gmra.mxu0 %v473
  %v2784 = vpop.f32.mrf.mxu0
  %v2785 = vadd.f32 %v2744, %v2784
  %v2786 = vpop.f32.mrf.mxu0
  %v2787 = vadd.f32 %v2746, %v2786
  %v2788 = vpop.f32.mrf.mxu0
  %v2789 = vpop.f32.mrf.mxu0
  %2790 = vdwg.mxu0
  %v2791 = vmax.f32 %v2539, 0.0
  %v2792 = vmax.f32 %v2541, 0.0
  %v2793 = vmax.f32 %v2785, 0.0
  %v2794 = vmax.f32 %v2787, 0.0
  %v2795 = vpack.c.bf16 %v2791, %v2791
  %v2796 = vpack.c.bf16 %v2792, %v2792
  %v2797 = vpack.c.bf16 %v2793, %v2793
  %v2798 = vpack.c.bf16 %v2794, %v2794
  %v2799 = vld [vmem:[%s4] sm:$0xf]
  %v2800 = vld [vmem:[%s4 + $0x4] sm:$0xf]
  %v2801 = vld [vmem:[%s4 + $0x8] sm:$0xf]
  %v2802 = vld [vmem:[%s4 + $0xc] sm:$0xf]
  %v2803 = vld [vmem:[%s4 + $0x10] sm:$0xf]
  %v2804 = vld [vmem:[%s4 + $0x14] sm:$0xf]
  %v2805 = vld [vmem:[%s4 + $0x18] sm:$0xf]
  %v2806 = vld [vmem:[%s4 + $0x1c] sm:$0xf]
  %v2807 = vld [vmem:[%s4 + $0x20] sm:$0xf]
  %v2808 = vld [vmem:[%s4 + $0x24] sm:$0xf]
  %v2809 = vld [vmem:[%s4 + $0x28] sm:$0xf]
  %v2810 = vld [vmem:[%s4 + $0x2c] sm:$0xf]
  %v2811 = vld [vmem:[%s4 + $0x30] sm:$0xf]
  %v2812 = vld [vmem:[%s4 + $0x34] sm:$0xf]
  %v2813 = vld [vmem:[%s4 + $0x38] sm:$0xf]
  %v2814 = vld [vmem:[%s4 + $0x3c] sm:$0xf]
  %v2815 = vld [vmem:[%s4 + $0x40] sm:$0xf]
  %v2816 = vld [vmem:[%s4 + $0x44] sm:$0xf]
  %v2817 = vld [vmem:[%s4 + $0x48] sm:$0xf]
  %v2818 = vld [vmem:[%s4 + $0x4c] sm:$0xf]
  %v2819 = vld [vmem:[%s4 + $0x50] sm:$0xf]
  %v2820 = vld [vmem:[%s4 + $0x54] sm:$0xf]
  %v2821 = vld [vmem:[%s4 + $0x58] sm:$0xf]
  %v2822 = vld [vmem:[%s4 + $0x5c] sm:$0xf]
  %v2823 = vld [vmem:[%s4 + $0x60] sm:$0xf]
  %v2824 = vld [vmem:[%s4 + $0x64] sm:$0xf]
  %v2825 = vld [vmem:[%s4 + $0x68] sm:$0xf]
  %v2826 = vld [vmem:[%s4 + $0x6c] sm:$0xf]
  %v2827 = vld [vmem:[%s4 + $0x70] sm:$0xf]
  %v2828 = vld [vmem:[%s4 + $0x74] sm:$0xf]
  %v2829 = vld [vmem:[%s4 + $0x78] sm:$0xf]
  %v2830 = vld [vmem:[%s4 + $0x7c] sm:$0xf]
  %v2831 = vld [vmem:[%s4 + $0x80] sm:$0xf]
  %v2832 = vld [vmem:[%s4 + $0x84] sm:$0xf]
  %v2833 = vld [vmem:[%s4 + $0x88] sm:$0xf]
  %v2834 = vld [vmem:[%s4 + $0x8c] sm:$0xf]
  %v2835 = vld [vmem:[%s4 + $0x90] sm:$0xf]
  %v2836 = vld [vmem:[%s4 + $0x94] sm:$0xf]
  %v2837 = vld [vmem:[%s4 + $0x98] sm:$0xf]
  %v2838 = vld [vmem:[%s4 + $0x9c] sm:$0xf]
  %v2839 = vld [vmem:[%s4 + $0xa0] sm:$0xf]
  %v2840 = vld [vmem:[%s4 + $0xa4] sm:$0xf]
  %v2841 = vld [vmem:[%s4 + $0xa8] sm:$0xf]
  %v2842 = vld [vmem:[%s4 + $0xac] sm:$0xf]
  %v2843 = vld [vmem:[%s4 + $0xb0] sm:$0xf]
  %v2844 = vld [vmem:[%s4 + $0xb4] sm:$0xf]
  %v2845 = vld [vmem:[%s4 + $0xb8] sm:$0xf]
  %v2846 = vld [vmem:[%s4 + $0xbc] sm:$0xf]
  %v2847 = vld [vmem:[%s4 + $0xc0] sm:$0xf]
  %v2848 = vld [vmem:[%s4 + $0xc4] sm:$0xf]
  %v2849 = vld [vmem:[%s5] sm:$0x1]
  %v2851 = vlaneseq
  %v2852 = vshrl.u32 %v2851, 7
  %v2853 = vsub.s32 0, %v2852
  %v2854 = vrot.slane %v2849, %v2853
  %v2906 = vunpack.c.l.b16 %v2799
  %v2907 = vunpack.c.l.b16 %v2800
  %v2908 = vunpack.c.l.b16 %v2801
  %v2909 = vunpack.c.l.b16 %v2802
  %v2910 = vunpack.c.l.b16 %v2803
  %v2911 = vunpack.c.l.b16 %v2804
  %v2912 = vunpack.c.l.b16 %v2805
  %v2913 = vunpack.c.l.b16 %v2806
  %v2914 = vunpack.c.l.b16 %v2807
  %v2915 = vunpack.c.l.b16 %v2808
  %v2916 = vunpack.c.l.b16 %v2809
  %v2917 = vunpack.c.l.b16 %v2810
  %v2918 = vunpack.c.l.b16 %v2811
  %v2919 = vunpack.c.l.b16 %v2812
  %v2920 = vunpack.c.l.b16 %v2813
  %v2921 = vunpack.c.l.b16 %v2814
  %v2922 = vunpack.c.l.b16 %v2815
  %v2923 = vunpack.c.l.b16 %v2816
  %v2924 = vunpack.c.l.b16 %v2817
  %v2925 = vunpack.c.l.b16 %v2818
  %v2926 = vunpack.c.l.b16 %v2819
  %v2927 = vunpack.c.l.b16 %v2820
  %v2928 = vunpack.c.l.b16 %v2821
  %v2929 = vunpack.c.l.b16 %v2822
  %v2930 = vunpack.c.l.b16 %v2823
  %v2931 = vunpack.c.l.b16 %v2824
  %v2932 = vunpack.c.l.b16 %v2825
  %v2933 = vunpack.c.l.b16 %v2826
  %v2934 = vunpack.c.l.b16 %v2827
  %v2935 = vunpack.c.l.b16 %v2828
  %v2936 = vunpack.c.l.b16 %v2829
  %v2937 = vunpack.c.l.b16 %v2830
  %v2938 = vunpack.c.l.b16 %v2831
  %v2939 = vunpack.c.l.b16 %v2832
  %v2940 = vunpack.c.l.b16 %v2833
  %v2941 = vunpack.c.l.b16 %v2834
  %v2942 = vunpack.c.l.b16 %v2835
  %v2943 = vunpack.c.l.b16 %v2836
  %v2944 = vunpack.c.l.b16 %v2837
  %v2945 = vunpack.c.l.b16 %v2838
  %v2946 = vunpack.c.l.b16 %v2839
  %v2947 = vunpack.c.l.b16 %v2840
  %v2948 = vunpack.c.l.b16 %v2841
  %v2949 = vunpack.c.l.b16 %v2842
  %v2950 = vunpack.c.l.b16 %v2843
  %v2951 = vunpack.c.l.b16 %v2844
  %v2952 = vunpack.c.l.b16 %v2845
  %v2953 = vunpack.c.l.b16 %v2846
  %v2954 = vunpack.c.l.b16 %v2847
  %v2955 = vunpack.c.l.b16 %v2848
  %v2956 = vpack.c.b16 %v2907, %v2906
  %v2957 = vpack.c.b16 %v2909, %v2908
  %v2958 = vpack.c.b16 %v2911, %v2910
  %v2959 = vpack.c.b16 %v2913, %v2912
  %v2960 = vpack.c.b16 %v2915, %v2914
  %v2961 = vpack.c.b16 %v2917, %v2916
  %v2962 = vpack.c.b16 %v2919, %v2918
  %v2963 = vpack.c.b16 %v2921, %v2920
  %v2964 = vpack.c.b16 %v2923, %v2922
  %v2965 = vpack.c.b16 %v2925, %v2924
  %v2966 = vpack.c.b16 %v2927, %v2926
  %v2967 = vpack.c.b16 %v2929, %v2928
  %v2968 = vpack.c.b16 %v2931, %v2930
  %v2969 = vpack.c.b16 %v2933, %v2932
  %v2970 = vpack.c.b16 %v2935, %v2934
  %v2971 = vpack.c.b16 %v2937, %v2936
  %v2972 = vpack.c.b16 %v2939, %v2938
  %v2973 = vpack.c.b16 %v2941, %v2940
  %v2974 = vpack.c.b16 %v2943, %v2942
  %v2975 = vpack.c.b16 %v2945, %v2944
  %v2976 = vpack.c.b16 %v2947, %v2946
  %v2977 = vpack.c.b16 %v2949, %v2948
  %v2978 = vpack.c.b16 %v2951, %v2950
  %v2979 = vpack.c.b16 %v2953, %v2952
  %v2980 = vpack.c.b16 %v2955, %v2954
  %vm3006 = vcmask 130048
  %v3008 = vsel %vm3006, %v2798, 0
  %3010 = vmatprep.subr.bf16.mxu0 0
  %3011 = vmatpush1.bf16.msra.mxu0 %v2963
  %3012 = vmatprep.subr.bf16.mxu0 0
  %3013 = vmatpush1.bf16.msra.mxu0 %v2962
  %3014 = vmatprep.subr.bf16.mxu0 0
  %3015 = vmatpush1.bf16.msra.mxu0 %v2961
  %3016 = vmatprep.subr.bf16.mxu0 0
  %3017 = vmatpush1.bf16.msra.mxu0 %v2960
  %3018 = vmatprep.subr.bf16.mxu0 0
  %3019 = vmatpush1.bf16.msra.mxu0 %v2959
  %3020 = vmatprep.subr.bf16.mxu0 0
  %3021 = vmatpush1.bf16.msra.mxu0 %v2958
  %3022 = vmatprep.subr.bf16.mxu0 0
  %3023 = vmatpush1.bf16.msra.mxu0 %v2957
  %3024 = vmatprep.subr.bf16.mxu0 0
  %3025 = vmatpush1.bf16.msra.mxu0 %v2956
  %3026 = vmatprep.subr.bf16.mxu0 0
  %3027 = vmatpush2.bf16.msra.mxu0 %v2971
  %3028 = vmatprep.subr.bf16.mxu0 0
  %3029 = vmatpush2.bf16.msra.mxu0 %v2970
  %3030 = vmatprep.subr.bf16.mxu0 0
  %3031 = vmatpush2.bf16.msra.mxu0 %v2969
  %3032 = vmatprep.subr.bf16.mxu0 0
  %3033 = vmatpush2.bf16.msra.mxu0 %v2968
  %3034 = vmatprep.subr.bf16.mxu0 0
  %3035 = vmatpush2.bf16.msra.mxu0 %v2967
  %3036 = vmatprep.subr.bf16.mxu0 0
  %3037 = vmatpush2.bf16.msra.mxu0 %v2966
  %3038 = vmatprep.subr.bf16.mxu0 0
  %3039 = vmatpush2.bf16.msra.mxu0 %v2965
  %3040 = vmatprep.subr.bf16.mxu0 0
  %3041 = vmatpush2.bf16.msra.mxu0 %v2964
  %3042 = vmatprep.mubr.bf16.mxu0 %v2796
  %3043 = vmatmul.mubr.bf16.gmra.mxu0 %v2795
  %v3044 = vpop.f32.mrf.mxu0
  %v3045 = vadd.f32 %v2854, %v3044
  %v3046 = vpop.f32.mrf.mxu0
  %v3047 = vpop.f32.mrf.mxu0
  %v3048 = vpop.f32.mrf.mxu0
  %3049 = vdwg.mxu0
  %3050 = vmatprep.subr.bf16.mxu0 0
  %3051 = vmatpush1.bf16.msra.mxu0 %v2979
  %3052 = vmatprep.subr.bf16.mxu0 0
  %3053 = vmatpush1.bf16.msra.mxu0 %v2978
  %3054 = vmatprep.subr.bf16.mxu0 0
  %3055 = vmatpush1.bf16.msra.mxu0 %v2977
  %3056 = vmatprep.subr.bf16.mxu0 0
  %3057 = vmatpush1.bf16.msra.mxu0 %v2976
  %3058 = vmatprep.subr.bf16.mxu0 0
  %3059 = vmatpush1.bf16.msra.mxu0 %v2975
  %3060 = vmatprep.subr.bf16.mxu0 0
  %3061 = vmatpush1.bf16.msra.mxu0 %v2974
  %3062 = vmatprep.subr.bf16.mxu0 0
  %3063 = vmatpush1.bf16.msra.mxu0 %v2973
  %3064 = vmatprep.subr.bf16.mxu0 0
  %3065 = vmatpush1.bf16.msra.mxu0 %v2972
  %3066 = vmatprep.subr.bf16.mxu0 0
  %3067 = vmatpush2.bf16.msra.mxu0 0
  %3068 = vmatprep.subr.bf16.mxu0 0
  %3069 = vmatpush2.bf16.msra.mxu0 0
  %3070 = vmatprep.subr.bf16.mxu0 0
  %3071 = vmatpush2.bf16.msra.mxu0 0
  %3072 = vmatprep.subr.bf16.mxu0 0
  %3073 = vmatpush2.bf16.msra.mxu0 0
  %3074 = vmatprep.subr.bf16.mxu0 0
  %3075 = vmatpush2.bf16.msra.mxu0 0
  %3076 = vmatprep.subr.bf16.mxu0 0
  %3077 = vmatpush2.bf16.msra.mxu0 0
  %3078 = vmatprep.subr.bf16.mxu0 0
  %3079 = vmatpush2.bf16.msra.mxu0 0
  %3080 = vmatprep.subr.bf16.mxu0 0
  %3081 = vmatpush2.bf16.msra.mxu0 %v2980
  %3082 = vmatprep.mubr.bf16.mxu0 %v3008
  %3083 = vmatmul.mubr.bf16.gmra.mxu0 %v2797
  %v3084 = vpop.f32.mrf.mxu0
  %v3085 = vadd.f32 %v3045, %v3084
  %v3086 = vpop.f32.mrf.mxu0
  %v3087 = vpop.f32.mrf.mxu0
  %v3088 = vpop.f32.mrf.mxu0
  %3089 = vdwg.mxu0
  %v3090 = vmax.f32 %v3085, 0.0
  %v3091 = vpack.c.bf16 %v3090, %v3090
  %v3092 = vld [vmem:[%s6] sm:$0xf]
  %v3093 = vld [vmem:[%s6 + $0x4] sm:$0xf]
  %v3094 = vld [vmem:[%s6 + $0x8] sm:$0xf]
  %v3095 = vld [vmem:[%s6 + $0xc] sm:$0xf]
  %v3096 = vld [vmem:[%s6 + $0x10] sm:$0xf]
  %v3097 = vld [vmem:[%s6 + $0x14] sm:$0xf]
  %v3098 = vld [vmem:[%s6 + $0x18] sm:$0xf]
  %v3099 = vld [vmem:[%s6 + $0x1c] sm:$0xf]
  %v3100 = vld [vmem:[%s6 + $0x20] sm:$0xf]
  %v3101 = vld [vmem:[%s6 + $0x24] sm:$0xf]
  %v3102 = vld [vmem:[%s6 + $0x28] sm:$0xf]
  %v3103 = vld [vmem:[%s6 + $0x2c] sm:$0xf]
  %v3104 = vld [vmem:[%s6 + $0x30] sm:$0xf]
  %v3105 = vld [vmem:[%s6 + $0x34] sm:$0xf]
  %v3106 = vld [vmem:[%s6 + $0x38] sm:$0xf]
  %v3107 = vld [vmem:[%s6 + $0x3c] sm:$0xf]
  %v3108 = vld [vmem:[%s7] sm:$0x1]
  %v3110 = vlaneseq
  %v3111 = vshrl.u32 %v3110, 7
  %v3112 = vsub.s32 0, %v3111
  %v3113 = vrot.slane %v3108, %v3112
  %v3131 = vunpack.c.l.b16 %v3092
  %v3132 = vunpack.c.l.b16 %v3093
  %v3133 = vunpack.c.l.b16 %v3094
  %v3134 = vunpack.c.l.b16 %v3095
  %v3135 = vunpack.c.l.b16 %v3096
  %v3136 = vunpack.c.l.b16 %v3097
  %v3137 = vunpack.c.l.b16 %v3098
  %v3138 = vunpack.c.l.b16 %v3099
  %v3139 = vunpack.c.l.b16 %v3100
  %v3140 = vunpack.c.l.b16 %v3101
  %v3141 = vunpack.c.l.b16 %v3102
  %v3142 = vunpack.c.l.b16 %v3103
  %v3143 = vunpack.c.l.b16 %v3104
  %v3144 = vunpack.c.l.b16 %v3105
  %v3145 = vunpack.c.l.b16 %v3106
  %v3146 = vunpack.c.l.b16 %v3107
  %v3147 = vpack.c.b16 %v3132, %v3131
  %v3148 = vpack.c.b16 %v3134, %v3133
  %v3149 = vpack.c.b16 %v3136, %v3135
  %v3150 = vpack.c.b16 %v3138, %v3137
  %v3151 = vpack.c.b16 %v3140, %v3139
  %v3152 = vpack.c.b16 %v3142, %v3141
  %v3153 = vpack.c.b16 %v3144, %v3143
  %v3154 = vpack.c.b16 %v3146, %v3145
  %3163 = vmatprep.subr.bf16.mxu0 0
  %3164 = vmatpush1.bf16.msra.mxu0 %v3154
  %3165 = vmatprep.subr.bf16.mxu0 0
  %3166 = vmatpush1.bf16.msra.mxu0 %v3153
  %3167 = vmatprep.subr.bf16.mxu0 0
  %3168 = vmatpush1.bf16.msra.mxu0 %v3152
  %3169 = vmatprep.subr.bf16.mxu0 0
  %3170 = vmatpush1.bf16.msra.mxu0 %v3151
  %3171 = vmatprep.subr.bf16.mxu0 0
  %3172 = vmatpush1.bf16.msra.mxu0 %v3150
  %3173 = vmatprep.subr.bf16.mxu0 0
  %3174 = vmatpush1.bf16.msra.mxu0 %v3149
  %3175 = vmatprep.subr.bf16.mxu0 0
  %3176 = vmatpush1.bf16.msra.mxu0 %v3148
  %3177 = vmatprep.subr.bf16.mxu0 0
  %3178 = vmatpush1.bf16.msra.mxu0 %v3147
  %3179 = vmatprep.subr.bf16.mxu0 0
  %3180 = vmatpush2.bf16.msra.mxu0 0
  %3181 = vmatprep.subr.bf16.mxu0 0
  %3182 = vmatpush2.bf16.msra.mxu0 0
  %3183 = vmatprep.subr.bf16.mxu0 0
  %3184 = vmatpush2.bf16.msra.mxu0 0
  %3185 = vmatprep.subr.bf16.mxu0 0
  %3186 = vmatpush2.bf16.msra.mxu0 0
  %3187 = vmatprep.subr.bf16.mxu0 0
  %3188 = vmatpush2.bf16.msra.mxu0 0
  %3189 = vmatprep.subr.bf16.mxu0 0
  %3190 = vmatpush2.bf16.msra.mxu0 0
  %3191 = vmatprep.subr.bf16.mxu0 0
  %3192 = vmatpush2.bf16.msra.mxu0 0
  %3193 = vmatprep.subr.bf16.mxu0 0
  %3194 = vmatpush2.bf16.msra.mxu0 0
  %3195 = vmatprep.mubr.bf16.mxu0 0
  %3196 = vmatmul.mubr.bf16.gmra.mxu0 %v3091
  %v3197 = vpop.f32.mrf.mxu0
  %v3198 = vadd.f32 %v3113, %v3197
  %v3199 = vpop.f32.mrf.mxu0
  %v3200 = vpop.f32.mrf.mxu0
  %v3201 = vpop.f32.mrf.mxu0
  %3202 = vdwg.mxu0
  %v3203 = vmax.f32 %v3198, 0.0
  %v3204 = vpack.c.bf16 %v3203, %v3203
  %v3205 = vld [vmem:[%s8] sm:$0xf]
  %v3206 = vld [vmem:[%s8 + $0x4] sm:$0xf]
  %v3207 = vld [vmem:[%s8 + $0x8] sm:$0xf]
  %v3208 = vld [vmem:[%s8 + $0xc] sm:$0xf]
  %v3209 = vld [vmem:[%s8 + $0x10] sm:$0xf]
  %v3210 = vld [vmem:[%s8 + $0x14] sm:$0xf]
  %v3211 = vld [vmem:[%s8 + $0x18] sm:$0xf]
  %v3212 = vld [vmem:[%s8 + $0x1c] sm:$0xf]
  %v3213 = vld [vmem:[%s8 + $0x20] sm:$0xf]
  %v3214 = vld [vmem:[%s8 + $0x24] sm:$0xf]
  %v3215 = vld [vmem:[%s8 + $0x28] sm:$0xf]
  %v3216 = vld [vmem:[%s8 + $0x2c] sm:$0xf]
  %v3217 = vld [vmem:[%s8 + $0x30] sm:$0xf]
  %v3218 = vld [vmem:[%s8 + $0x34] sm:$0xf]
  %v3219 = vld [vmem:[%s8 + $0x38] sm:$0xf]
  %v3220 = vld [vmem:[%s8 + $0x3c] sm:$0xf]
  %v3221 = vld [vmem:[%s9] sm:$0x1]
  %v3223 = vlaneseq
  %v3224 = vshrl.u32 %v3223, 7
  %v3225 = vsub.s32 0, %v3224
  %v3226 = vrot.slane %v3221, %v3225
  %v3244 = vunpack.c.l.b16 %v3205
  %v3245 = vunpack.c.l.b16 %v3206
  %v3246 = vunpack.c.l.b16 %v3207
  %v3247 = vunpack.c.l.b16 %v3208
  %v3248 = vunpack.c.l.b16 %v3209
  %v3249 = vunpack.c.l.b16 %v3210
  %v3250 = vunpack.c.l.b16 %v3211
  %v3251 = vunpack.c.l.b16 %v3212
  %v3252 = vunpack.c.l.b16 %v3213
  %v3253 = vunpack.c.l.b16 %v3214
  %v3254 = vunpack.c.l.b16 %v3215
  %v3255 = vunpack.c.l.b16 %v3216
  %v3256 = vunpack.c.l.b16 %v3217
  %v3257 = vunpack.c.l.b16 %v3218
  %v3258 = vunpack.c.l.b16 %v3219
  %v3259 = vunpack.c.l.b16 %v3220
  %v3260 = vpack.c.b16 %v3245, %v3244
  %v3261 = vpack.c.b16 %v3247, %v3246
  %v3262 = vpack.c.b16 %v3249, %v3248
  %v3263 = vpack.c.b16 %v3251, %v3250
  %v3264 = vpack.c.b16 %v3253, %v3252
  %v3265 = vpack.c.b16 %v3255, %v3254
  %v3266 = vpack.c.b16 %v3257, %v3256
  %v3267 = vpack.c.b16 %v3259, %v3258
  %3276 = vmatprep.subr.bf16.mxu0 0
  %3277 = vmatpush1.bf16.msra.mxu0 %v3267
  %3278 = vmatprep.subr.bf16.mxu0 0
  %3279 = vmatpush1.bf16.msra.mxu0 %v3266
  %3280 = vmatprep.subr.bf16.mxu0 0
  %3281 = vmatpush1.bf16.msra.mxu0 %v3265
  %3282 = vmatprep.subr.bf16.mxu0 0
  %3283 = vmatpush1.bf16.msra.mxu0 %v3264
  %3284 = vmatprep.subr.bf16.mxu0 0
  %3285 = vmatpush1.bf16.msra.mxu0 %v3263
  %3286 = vmatprep.subr.bf16.mxu0 0
  %3287 = vmatpush1.bf16.msra.mxu0 %v3262
  %3288 = vmatprep.subr.bf16.mxu0 0
  %3289 = vmatpush1.bf16.msra.mxu0 %v3261
  %3290 = vmatprep.subr.bf16.mxu0 0
  %3291 = vmatpush1.bf16.msra.mxu0 %v3260
  %3292 = vmatprep.subr.bf16.mxu0 0
  %3293 = vmatpush2.bf16.msra.mxu0 0
  %3294 = vmatprep.subr.bf16.mxu0 0
  %3295 = vmatpush2.bf16.msra.mxu0 0
  %3296 = vmatprep.subr.bf16.mxu0 0
  %3297 = vmatpush2.bf16.msra.mxu0 0
  %3298 = vmatprep.subr.bf16.mxu0 0
  %3299 = vmatpush2.bf16.msra.mxu0 0
  %3300 = vmatprep.subr.bf16.mxu0 0
  %3301 = vmatpush2.bf16.msra.mxu0 0
  %3302 = vmatprep.subr.bf16.mxu0 0
  %3303 = vmatpush2.bf16.msra.mxu0 0
  %3304 = vmatprep.subr.bf16.mxu0 0
  %3305 = vmatpush2.bf16.msra.mxu0 0
  %3306 = vmatprep.subr.bf16.mxu0 0
  %3307 = vmatpush2.bf16.msra.mxu0 0
  %3308 = vmatprep.mubr.bf16.mxu0 0
  %3309 = vmatmul.mubr.bf16.gmra.mxu0 %v3204
  %v3310 = vpop.f32.mrf.mxu0
  %v3311 = vadd.f32 %v3226, %v3310
  %v3312 = vpop.f32.mrf.mxu0
  %v3313 = vpop.f32.mrf.mxu0
  %v3314 = vpop.f32.mrf.mxu0
  %3315 = vdwg.mxu0
  %v3316 = vld [vmem:[%s1] sm:$0xf]
  %v3317 = vld [vmem:[%s10] sm:$0xf]
  %v3318 = vld [vmem:[%s10 + $0x4] sm:$0xf]
  %v3319 = vld [vmem:[%s10 + $0x8] sm:$0xf]
  %v3320 = vld [vmem:[%s10 + $0xc] sm:$0xf]
  %v3321 = vld [vmem:[%s10 + $0x10] sm:$0xf]
  %v3322 = vld [vmem:[%s10 + $0x14] sm:$0xf]
  %v3323 = vld [vmem:[%s10 + $0x18] sm:$0xf]
  %v3324 = vld [vmem:[%s10 + $0x1c] sm:$0xf]
  %v3325 = vld [vmem:[%s10 + $0x20] sm:$0xf]
  %v3326 = vld [vmem:[%s10 + $0x24] sm:$0xf]
  %v3327 = vld [vmem:[%s10 + $0x28] sm:$0xf]
  %v3328 = vld [vmem:[%s10 + $0x2c] sm:$0xf]
  %v3329 = vld [vmem:[%s10 + $0x30] sm:$0xf]
  %v3330 = vld [vmem:[%s10 + $0x34] sm:$0xf]
  %v3331 = vld [vmem:[%s10 + $0x38] sm:$0xf]
  %v3332 = vld [vmem:[%s10 + $0x3c] sm:$0xf]
  %v3333 = vld [vmem:[%s11] sm:$0x1]
  %v3335 = vlaneseq
  %v3336 = vshrl.u32 %v3335, 7
  %v3337 = vsub.s32 0, %v3336
  %v3338 = vrot.slane %v3333, %v3337
  %v3356 = vunpack.c.l.b16 %v3317
  %v3357 = vunpack.c.l.b16 %v3318
  %v3358 = vunpack.c.l.b16 %v3319
  %v3359 = vunpack.c.l.b16 %v3320
  %v3360 = vunpack.c.l.b16 %v3321
  %v3361 = vunpack.c.l.b16 %v3322
  %v3362 = vunpack.c.l.b16 %v3323
  %v3363 = vunpack.c.l.b16 %v3324
  %v3364 = vunpack.c.l.b16 %v3325
  %v3365 = vunpack.c.l.b16 %v3326
  %v3366 = vunpack.c.l.b16 %v3327
  %v3367 = vunpack.c.l.b16 %v3328
  %v3368 = vunpack.c.l.b16 %v3329
  %v3369 = vunpack.c.l.b16 %v3330
  %v3370 = vunpack.c.l.b16 %v3331
  %v3371 = vunpack.c.l.b16 %v3332
  %v3372 = vpack.c.b16 %v3357, %v3356
  %v3373 = vpack.c.b16 %v3359, %v3358
  %v3374 = vpack.c.b16 %v3361, %v3360
  %v3375 = vpack.c.b16 %v3363, %v3362
  %v3376 = vpack.c.b16 %v3365, %v3364
  %v3377 = vpack.c.b16 %v3367, %v3366
  %v3378 = vpack.c.b16 %v3369, %v3368
  %v3379 = vpack.c.b16 %v3371, %v3370
  %3388 = vmatprep.subr.bf16.mxu0 0
  %3389 = vmatpush1.bf16.msra.mxu0 %v3379
  %3390 = vmatprep.subr.bf16.mxu0 0
  %3391 = vmatpush1.bf16.msra.mxu0 %v3378
  %3392 = vmatprep.subr.bf16.mxu0 0
  %3393 = vmatpush1.bf16.msra.mxu0 %v3377
  %3394 = vmatprep.subr.bf16.mxu0 0
  %3395 = vmatpush1.bf16.msra.mxu0 %v3376
  %3396 = vmatprep.subr.bf16.mxu0 0
  %3397 = vmatpush1.bf16.msra.mxu0 %v3375
  %3398 = vmatprep.subr.bf16.mxu0 0
  %3399 = vmatpush1.bf16.msra.mxu0 %v3374
  %3400 = vmatprep.subr.bf16.mxu0 0
  %3401 = vmatpush1.bf16.msra.mxu0 %v3373
  %3402 = vmatprep.subr.bf16.mxu0 0
  %3403 = vmatpush1.bf16.msra.mxu0 %v3372
  %3404 = vmatprep.subr.bf16.mxu0 0
  %3405 = vmatpush2.bf16.msra.mxu0 0
  %3406 = vmatprep.subr.bf16.mxu0 0
  %3407 = vmatpush2.bf16.msra.mxu0 0
  %3408 = vmatprep.subr.bf16.mxu0 0
  %3409 = vmatpush2.bf16.msra.mxu0 0
  %3410 = vmatprep.subr.bf16.mxu0 0
  %3411 = vmatpush2.bf16.msra.mxu0 0
  %3412 = vmatprep.subr.bf16.mxu0 0
  %3413 = vmatpush2.bf16.msra.mxu0 0
  %3414 = vmatprep.subr.bf16.mxu0 0
  %3415 = vmatpush2.bf16.msra.mxu0 0
  %3416 = vmatprep.subr.bf16.mxu0 0
  %3417 = vmatpush2.bf16.msra.mxu0 0
  %3418 = vmatprep.subr.bf16.mxu0 0
  %3419 = vmatpush2.bf16.msra.mxu0 0
  %3420 = vmatprep.mubr.bf16.mxu0 0
  %3421 = vmatmul.mubr.bf16.gmra.mxu0 %v3316
  %v3422 = vpop.f32.mrf.mxu0
  %v3423 = vadd.f32 %v3338, %v3422
  %v3424 = vpop.f32.mrf.mxu0
  %v3425 = vpop.f32.mrf.mxu0
  %v3426 = vpop.f32.mrf.mxu0
  %3427 = vdwg.mxu0
  %v3428 = vmax.f32 %v3423, 0.0
  %v3429 = vpack.c.bf16 %v3428, %v3428
  %v3430 = vld [vmem:[%s12] sm:$0xf]
  %v3431 = vld [vmem:[%s12 + $0x4] sm:$0xf]
  %v3432 = vld [vmem:[%s12 + $0x8] sm:$0xf]
  %v3433 = vld [vmem:[%s12 + $0xc] sm:$0xf]
  %v3434 = vld [vmem:[%s12 + $0x10] sm:$0xf]
  %v3435 = vld [vmem:[%s12 + $0x14] sm:$0xf]
  %v3436 = vld [vmem:[%s12 + $0x18] sm:$0xf]
  %v3437 = vld [vmem:[%s12 + $0x1c] sm:$0xf]
  %v3438 = vld [vmem:[%s12 + $0x20] sm:$0xf]
  %v3439 = vld [vmem:[%s12 + $0x24] sm:$0xf]
  %v3440 = vld [vmem:[%s12 + $0x28] sm:$0xf]
  %v3441 = vld [vmem:[%s12 + $0x2c] sm:$0xf]
  %v3442 = vld [vmem:[%s12 + $0x30] sm:$0xf]
  %v3443 = vld [vmem:[%s12 + $0x34] sm:$0xf]
  %v3444 = vld [vmem:[%s12 + $0x38] sm:$0xf]
  %v3445 = vld [vmem:[%s12 + $0x3c] sm:$0xf]
  %v3446 = vld [vmem:[%s13] sm:$0x1]
  %v3448 = vlaneseq
  %v3449 = vshrl.u32 %v3448, 7
  %v3450 = vsub.s32 0, %v3449
  %v3451 = vrot.slane %v3446, %v3450
  %v3469 = vunpack.c.l.b16 %v3430
  %v3470 = vunpack.c.l.b16 %v3431
  %v3471 = vunpack.c.l.b16 %v3432
  %v3472 = vunpack.c.l.b16 %v3433
  %v3473 = vunpack.c.l.b16 %v3434
  %v3474 = vunpack.c.l.b16 %v3435
  %v3475 = vunpack.c.l.b16 %v3436
  %v3476 = vunpack.c.l.b16 %v3437
  %v3477 = vunpack.c.l.b16 %v3438
  %v3478 = vunpack.c.l.b16 %v3439
  %v3479 = vunpack.c.l.b16 %v3440
  %v3480 = vunpack.c.l.b16 %v3441
  %v3481 = vunpack.c.l.b16 %v3442
  %v3482 = vunpack.c.l.b16 %v3443
  %v3483 = vunpack.c.l.b16 %v3444
  %v3484 = vunpack.c.l.b16 %v3445
  %v3485 = vpack.c.b16 %v3470, %v3469
  %v3486 = vpack.c.b16 %v3472, %v3471
  %v3487 = vpack.c.b16 %v3474, %v3473
  %v3488 = vpack.c.b16 %v3476, %v3475
  %v3489 = vpack.c.b16 %v3478, %v3477
  %v3490 = vpack.c.b16 %v3480, %v3479
  %v3491 = vpack.c.b16 %v3482, %v3481
  %v3492 = vpack.c.b16 %v3484, %v3483
  %3501 = vmatprep.subr.bf16.mxu0 0
  %3502 = vmatpush1.bf16.msra.mxu0 %v3492
  %3503 = vmatprep.subr.bf16.mxu0 0
  %3504 = vmatpush1.bf16.msra.mxu0 %v3491
  %3505 = vmatprep.subr.bf16.mxu0 0
  %3506 = vmatpush1.bf16.msra.mxu0 %v3490
  %3507 = vmatprep.subr.bf16.mxu0 0
  %3508 = vmatpush1.bf16.msra.mxu0 %v3489
  %3509 = vmatprep.subr.bf16.mxu0 0
  %3510 = vmatpush1.bf16.msra.mxu0 %v3488
  %3511 = vmatprep.subr.bf16.mxu0 0
  %3512 = vmatpush1.bf16.msra.mxu0 %v3487
  %3513 = vmatprep.subr.bf16.mxu0 0
  %3514 = vmatpush1.bf16.msra.mxu0 %v3486
  %3515 = vmatprep.subr.bf16.mxu0 0
  %3516 = vmatpush1.bf16.msra.mxu0 %v3485
  %3517 = vmatprep.subr.bf16.mxu0 0
  %3518 = vmatpush2.bf16.msra.mxu0 0
  %3519 = vmatprep.subr.bf16.mxu0 0
  %3520 = vmatpush2.bf16.msra.mxu0 0
  %3521 = vmatprep.subr.bf16.mxu0 0
  %3522 = vmatpush2.bf16.msra.mxu0 0
  %3523 = vmatprep.subr.bf16.mxu0 0
  %3524 = vmatpush2.bf16.msra.mxu0 0
  %3525 = vmatprep.subr.bf16.mxu0 0
  %3526 = vmatpush2.bf16.msra.mxu0 0
  %3527 = vmatprep.subr.bf16.mxu0 0
  %3528 = vmatpush2.bf16.msra.mxu0 0
  %3529 = vmatprep.subr.bf16.mxu0 0
  %3530 = vmatpush2.bf16.msra.mxu0 0
  %3531 = vmatprep.subr.bf16.mxu0 0
  %3532 = vmatpush2.bf16.msra.mxu0 0
  %3533 = vmatprep.mubr.bf16.mxu0 0
  %3534 = vmatmul.mubr.bf16.gmra.mxu0 %v3429
  %v3535 = vpop.f32.mrf.mxu0
  %v3536 = vadd.f32 %v3451, %v3535
  %v3537 = vpop.f32.mrf.mxu0
  %v3538 = vpop.f32.mrf.mxu0
  %v3539 = vpop.f32.mrf.mxu0
  %3540 = vdwg.mxu0
  %v3541 = vpack.c.bf16 %v3311, %v3311
  %v3542 = vld [vmem:[%s14] sm:$0xf]
  %v3543 = vld [vmem:[%s14 + $0x4] sm:$0xf]
  %v3544 = vld [vmem:[%s14 + $0x8] sm:$0xf]
  %v3545 = vld [vmem:[%s14 + $0xc] sm:$0xf]
  %v3546 = vld [vmem:[%s14 + $0x10] sm:$0xf]
  %v3547 = vld [vmem:[%s14 + $0x14] sm:$0xf]
  %v3548 = vld [vmem:[%s14 + $0x18] sm:$0xf]
  %v3549 = vld [vmem:[%s14 + $0x1c] sm:$0xf]
  %v3550 = vld [vmem:[%s14 + $0x20] sm:$0xf]
  %v3551 = vld [vmem:[%s14 + $0x24] sm:$0xf]
  %v3552 = vld [vmem:[%s14 + $0x28] sm:$0xf]
  %v3553 = vld [vmem:[%s14 + $0x2c] sm:$0xf]
  %v3554 = vld [vmem:[%s14 + $0x30] sm:$0xf]
  %v3555 = vld [vmem:[%s14 + $0x34] sm:$0xf]
  %v3556 = vld [vmem:[%s14 + $0x38] sm:$0xf]
  %v3557 = vld [vmem:[%s14 + $0x3c] sm:$0xf]
  %v3558 = vpack.c.bf16 %v3536, %v3536
  %v3559 = vld [vmem:[%s15] sm:$0xf]
  %v3560 = vld [vmem:[%s15 + $0x4] sm:$0xf]
  %v3561 = vld [vmem:[%s15 + $0x8] sm:$0xf]
  %v3562 = vld [vmem:[%s15 + $0xc] sm:$0xf]
  %v3563 = vld [vmem:[%s15 + $0x10] sm:$0xf]
  %v3564 = vld [vmem:[%s15 + $0x14] sm:$0xf]
  %v3565 = vld [vmem:[%s15 + $0x18] sm:$0xf]
  %v3566 = vld [vmem:[%s15 + $0x1c] sm:$0xf]
  %v3567 = vld [vmem:[%s15 + $0x20] sm:$0xf]
  %v3568 = vld [vmem:[%s15 + $0x24] sm:$0xf]
  %v3569 = vld [vmem:[%s15 + $0x28] sm:$0xf]
  %v3570 = vld [vmem:[%s15 + $0x2c] sm:$0xf]
  %v3571 = vld [vmem:[%s15 + $0x30] sm:$0xf]
  %v3572 = vld [vmem:[%s15 + $0x34] sm:$0xf]
  %v3573 = vld [vmem:[%s15 + $0x38] sm:$0xf]
  %v3574 = vld [vmem:[%s15 + $0x3c] sm:$0xf]
  %v3591 = vunpack.c.l.b16 %v3559
  %v3592 = vunpack.c.l.b16 %v3560
  %v3593 = vunpack.c.l.b16 %v3561
  %v3594 = vunpack.c.l.b16 %v3562
  %v3595 = vunpack.c.l.b16 %v3563
  %v3596 = vunpack.c.l.b16 %v3564
  %v3597 = vunpack.c.l.b16 %v3565
  %v3598 = vunpack.c.l.b16 %v3566
  %v3599 = vunpack.c.l.b16 %v3567
  %v3600 = vunpack.c.l.b16 %v3568
  %v3601 = vunpack.c.l.b16 %v3569
  %v3602 = vunpack.c.l.b16 %v3570
  %v3603 = vunpack.c.l.b16 %v3571
  %v3604 = vunpack.c.l.b16 %v3572
  %v3605 = vunpack.c.l.b16 %v3573
  %v3606 = vunpack.c.l.b16 %v3574
  %v3607 = vpack.c.b16 %v3592, %v3591
  %v3608 = vpack.c.b16 %v3594, %v3593
  %v3609 = vpack.c.b16 %v3596, %v3595
  %v3610 = vpack.c.b16 %v3598, %v3597
  %v3611 = vpack.c.b16 %v3600, %v3599
  %v3612 = vpack.c.b16 %v3602, %v3601
  %v3613 = vpack.c.b16 %v3604, %v3603
  %v3614 = vpack.c.b16 %v3606, %v3605
  %3623 = vmatprep.subr.bf16.mxu0 0
  %3624 = vmatpush1.bf16.msra.mxu0 %v3614
  %3625 = vmatprep.subr.bf16.mxu0 0
  %3626 = vmatpush1.bf16.msra.mxu0 %v3613
  %3627 = vmatprep.subr.bf16.mxu0 0
  %3628 = vmatpush1.bf16.msra.mxu0 %v3612
  %3629 = vmatprep.subr.bf16.mxu0 0
  %3630 = vmatpush1.bf16.msra.mxu0 %v3611
  %3631 = vmatprep.subr.bf16.mxu0 0
  %3632 = vmatpush1.bf16.msra.mxu0 %v3610
  %3633 = vmatprep.subr.bf16.mxu0 0
  %3634 = vmatpush1.bf16.msra.mxu0 %v3609
  %3635 = vmatprep.subr.bf16.mxu0 0
  %3636 = vmatpush1.bf16.msra.mxu0 %v3608
  %3637 = vmatprep.subr.bf16.mxu0 0
  %3638 = vmatpush1.bf16.msra.mxu0 %v3607
  %3639 = vmatprep.subr.bf16.mxu0 0
  %3640 = vmatpush2.bf16.msra.mxu0 0
  %3641 = vmatprep.subr.bf16.mxu0 0
  %3642 = vmatpush2.bf16.msra.mxu0 0
  %3643 = vmatprep.subr.bf16.mxu0 0
  %3644 = vmatpush2.bf16.msra.mxu0 0
  %3645 = vmatprep.subr.bf16.mxu0 0
  %3646 = vmatpush2.bf16.msra.mxu0 0
  %3647 = vmatprep.subr.bf16.mxu0 0
  %3648 = vmatpush2.bf16.msra.mxu0 0
  %3649 = vmatprep.subr.bf16.mxu0 0
  %3650 = vmatpush2.bf16.msra.mxu0 0
  %3651 = vmatprep.subr.bf16.mxu0 0
  %3652 = vmatpush2.bf16.msra.mxu0 0
  %3653 = vmatprep.subr.bf16.mxu0 0
  %3654 = vmatpush2.bf16.msra.mxu0 0
  %3655 = vmatprep.mubr.bf16.mxu0 0
  %3656 = vmatmul.mubr.bf16.gmra.mxu0 %v3558
  %v3657 = vpop.f32.mrf.mxu0
  %v3658 = vadd.f32 0.0, %v3657
  %v3659 = vpop.f32.mrf.mxu0
  %v3660 = vpop.f32.mrf.mxu0
  %v3661 = vpop.f32.mrf.mxu0
  %3662 = vdwg.mxu0
  %v3679 = vunpack.c.l.b16 %v3542
  %v3680 = vunpack.c.l.b16 %v3543
  %v3681 = vunpack.c.l.b16 %v3544
  %v3682 = vunpack.c.l.b16 %v3545
  %v3683 = vunpack.c.l.b16 %v3546
  %v3684 = vunpack.c.l.b16 %v3547
  %v3685 = vunpack.c.l.b16 %v3548
  %v3686 = vunpack.c.l.b16 %v3549
  %v3687 = vunpack.c.l.b16 %v3550
  %v3688 = vunpack.c.l.b16 %v3551
  %v3689 = vunpack.c.l.b16 %v3552
  %v3690 = vunpack.c.l.b16 %v3553
  %v3691 = vunpack.c.l.b16 %v3554
  %v3692 = vunpack.c.l.b16 %v3555
  %v3693 = vunpack.c.l.b16 %v3556
  %v3694 = vunpack.c.l.b16 %v3557
  %v3695 = vpack.c.b16 %v3680, %v3679
  %v3696 = vpack.c.b16 %v3682, %v3681
  %v3697 = vpack.c.b16 %v3684, %v3683
  %v3698 = vpack.c.b16 %v3686, %v3685
  %v3699 = vpack.c.b16 %v3688, %v3687
  %v3700 = vpack.c.b16 %v3690, %v3689
  %v3701 = vpack.c.b16 %v3692, %v3691
  %v3702 = vpack.c.b16 %v3694, %v3693
  %3711 = vmatprep.subr.bf16.mxu0 0
  %3712 = vmatpush1.bf16.msra.mxu0 %v3702
  %3713 = vmatprep.subr.bf16.mxu0 0
  %3714 = vmatpush1.bf16.msra.mxu0 %v3701
  %3715 = vmatprep.subr.bf16.mxu0 0
  %3716 = vmatpush1.bf16.msra.mxu0 %v3700
  %3717 = vmatprep.subr.bf16.mxu0 0
  %3718 = vmatpush1.bf16.msra.mxu0 %v3699
  %3719 = vmatprep.subr.bf16.mxu0 0
  %3720 = vmatpush1.bf16.msra.mxu0 %v3698
  %3721 = vmatprep.subr.bf16.mxu0 0
  %3722 = vmatpush1.bf16.msra.mxu0 %v3697
  %3723 = vmatprep.subr.bf16.mxu0 0
  %3724 = vmatpush1.bf16.msra.mxu0 %v3696
  %3725 = vmatprep.subr.bf16.mxu0 0
  %3726 = vmatpush1.bf16.msra.mxu0 %v3695
  %3727 = vmatprep.subr.bf16.mxu0 0
  %3728 = vmatpush2.bf16.msra.mxu0 0
  %3729 = vmatprep.subr.bf16.mxu0 0
  %3730 = vmatpush2.bf16.msra.mxu0 0
  %3731 = vmatprep.subr.bf16.mxu0 0
  %3732 = vmatpush2.bf16.msra.mxu0 0
  %3733 = vmatprep.subr.bf16.mxu0 0
  %3734 = vmatpush2.bf16.msra.mxu0 0
  %3735 = vmatprep.subr.bf16.mxu0 0
  %3736 = vmatpush2.bf16.msra.mxu0 0
  %3737 = vmatprep.subr.bf16.mxu0 0
  %3738 = vmatpush2.bf16.msra.mxu0 0
  %3739 = vmatprep.subr.bf16.mxu0 0
  %3740 = vmatpush2.bf16.msra.mxu0 0
  %3741 = vmatprep.subr.bf16.mxu0 0
  %3742 = vmatpush2.bf16.msra.mxu0 0
  %3743 = vmatprep.mubr.bf16.mxu0 0
  %3744 = vmatmul.mubr.bf16.gmra.mxu0 %v3541
  %v3745 = vpop.f32.mrf.mxu0
  %v3746 = vadd.f32 %v3658, %v3745
  %v3747 = vpop.f32.mrf.mxu0
  %v3748 = vpop.f32.mrf.mxu0
  %v3749 = vpop.f32.mrf.mxu0
  %3750 = vdwg.mxu0
  %v3751 = vld [vmem:[%s16] sm:$0x1]
  %v3753 = vlaneseq
  %v3754 = vshrl.u32 %v3753, 7
  %v3755 = vsub.s32 0, %v3754
  %v3756 = vrot.slane %v3751, %v3755
  %v3758 = vadd.f32 %v3746, %v3756
  %v3759 = vxor.u32 %v3758, 2147483648
  %v3760 = vmul.f32 %v3759, 1.442695
  %v3761 = vpow.pop %v3760
  %v3762 = vadd.f32 %v3761, 1.0
  %v3763 = vrcp.pop %v3762
  %v3764 = vmul.f32 1.0, %v3763
  %vm3765 = vcmask 64512
  %3766 = vst.msk [vmem:[%s17] sm:$0xff] %vm3765, %v3764
  // Predicated region
  $region70: #{forward_pallas.1} parent=0 // pred_check
    _
  $region71: #{forward_pallas.1} parent=0 // pred_check_branch
    %3768 = sbr.rel (0) target = $region73
  $region72: #{forward_pallas.1} parent=0 // pred_region
    _
  $region73: #{forward_pallas.1} parent=0 // pred_fallthru
    _
  // Predicated region
  $region74: #{forward_pallas.1} parent=0 // pred_check
    _
  $region75: #{forward_pallas.1} parent=0 // pred_check_branch
    %3770 = sbr.rel (0) target = $region77
  $region76: #{forward_pallas.1} parent=0 // pred_region
    _
  $region77: #{forward_pallas.1} parent=0 // pred_fallthru
    _

</llo_original>
